<compile_context>
chip_gen: v7x
topology: tpu7x:2x2x1
jax: 0.10.0
libtpu: 0.0.40
codegen_flags: <defaults>
</compile_context>

<pallas_src>
import math
from functools import partial

import jax
import jax.numpy as jnp
from jax.experimental import pallas as pl
from jax.experimental.pallas import tpu as pltpu


DEPTH = 3
RATE = [0.8, 0.8, 0.8]
SHAPE = [64, 48, 32]
FEAT = 5      # `out` in the PyTorch module
KPROP = 3     # `size` in the PyTorch module (SGConv K)


# ----------------------------------------------------------------------------
# Single fused Pallas kernel: the whole forward pass for one graph
# ----------------------------------------------------------------------------
def _net_forward_kernel(*refs, ks):
    (adj_ref, x_ref,
     wd0, bd0, wd1, bd1, wd2, bd2,
     p0, p1, p2,
     wu0, bu0, wu1, bu1, wu2, bu2,
     z_ref, lat_x_ref, lat_adj_ref) = refs
    f32 = jnp.float32

    def normalize(a):
        # S = D^-1/2 A D^-1/2.  Row and column degrees come from two XLU reduces
        # (a is symmetric); the MXU carries the critical chain so keep it free.
        # `a` always carries self-loops here, so deg >= 1; max() is a safety guard.
        d_col = jax.lax.rsqrt(jnp.maximum(jnp.sum(a, axis=1, keepdims=True), 1.0))  # (n,1)
        d_row = jax.lax.rsqrt(jnp.maximum(jnp.sum(a, axis=0, keepdims=True), 1.0))  # (1,n)
        return d_col * a * d_row

    def linear(h, w_ref, b_ref):
        return jnp.dot(h, w_ref[...], preferred_element_type=f32) + b_ref[...]

    def topk_select(score, k):
        """One-hot selection matrices for the k highest scores (descending order,
        ties -> lowest node index), via a pairwise-rank matrix.  P: (k,n); Q = P^T."""
        n = score.shape[0]
        row_i = jax.lax.broadcasted_iota(jnp.int32, (n, n), 0)
        col_j = jax.lax.broadcasted_iota(jnp.int32, (n, n), 1)
        # Row-orientation copy of `score` without a transpose/reshape:
        # eye*score puts score_j on the diagonal, one sublane reduce reads it out.
        eye = (row_i == col_j).astype(f32)
        score_row = jnp.sum(eye * score, axis=0, keepdims=True)              # (1, n)
        # cmp[i, j] = 1  <=>  node j strictly precedes node i in the ordering.
        prec = (score_row > score) | ((score_row == score) & (col_j < row_i))
        cmp = prec.astype(f32)                                               # (n, n)
        rank_col = jnp.sum(cmp, axis=1, keepdims=True)                       # (n, 1)
        rank_row = (n - 1.0) - jnp.sum(cmp, axis=0, keepdims=True)           # (1, n)
        k_col = jax.lax.broadcasted_iota(jnp.int32, (k, 1), 0).astype(f32)
        k_row = jax.lax.broadcasted_iota(jnp.int32, (1, k), 1).astype(f32)
        p_sel = (rank_row == k_col).astype(f32)                              # (k, n)
        q_sel = (rank_col == k_row).astype(f32)                              # (n, k)
        return p_sel, q_sel

    down = ((wd0, bd0), (wd1, bd1), (wd2, bd2))
    pools = (p0, p1, p2)
    up = ((wu0, bu0), (wu1, bu1), (wu2, bu2))

    f = x_ref[...].astype(f32)
    a = adj_ref[...].astype(f32)

    s_list = []      # normalized adjacency per encoder level (decoder K=1 conv reuses S0)
    s3_list = []     # cached S^3 per level (encoder SGConv + decoder K=3 convs)
    q_list = []      # scatter matrices for the decoder (up[perm] = z)

    # ------------------------------- encoder --------------------------------
    for i in range(DEPTH):
        s = normalize(a)
        # S^3 formed off the activation critical path; SGConv K=3 becomes S3 @ f.
        s3 = jnp.dot(jnp.dot(s, s, preferred_element_type=f32), s,
                     preferred_element_type=f32)
        s_list.append(s)
        s3_list.append(s3)

        w_ref, b_ref = down[i]
        f = jnp.maximum(
            linear(jnp.dot(s3, f, preferred_element_type=f32), w_ref, b_ref),
            0.0)                                                  # SGConv + relu

        # TopKPooling scores: tanh(X p / ||p||)   (f32: v5e has no bf16 EUP)
        p = pools[i][...].astype(f32)                             # (c, 1)
        inv_norm = jax.lax.rsqrt(jnp.sum(p * p))
        score = jnp.tanh(jnp.dot(f, p, preferred_element_type=f32) * inv_norm)  # (n, 1)

        p_sel, q_sel = topk_select(score, ks[i])
        q_list.append(q_sel)

        # f[perm] * score[perm]: scale BEFORE selecting -> one matmul.
        f = jnp.dot(p_sel, f * score, preferred_element_type=f32)

        # augment_adj (spspmm(A,A) edge pattern) + pooling, fused:
        #   ((P @ A) @ (A @ Q)) > 0  ==  (A @ A > 0)[perm][:, perm]   (exact).
        pa = jnp.dot(p_sel, a, preferred_element_type=f32)        # (k, n)
        aq = jnp.dot(a, q_sel, preferred_element_type=f32)        # (n, k)
        a = (jnp.dot(pa, aq, preferred_element_type=f32) > 0.5).astype(f32)

    lat_x_ref[...] = f.astype(lat_x_ref.dtype)
    lat_adj_ref[...] = a.astype(lat_adj_ref.dtype)

    # ------------------------------- decoder --------------------------------
    z = f
    for i in range(DEPTH):
        index = DEPTH - i - 1
        z = jnp.dot(q_list[index], z, preferred_element_type=f32)    # up[perm] = z
        w_ref, b_ref = up[i]
        prop = s3_list[index] if i < DEPTH - 1 else s_list[index]    # last up-conv K=1
        z = linear(jnp.dot(prop, z, preferred_element_type=f32), w_ref, b_ref)
        if i < DEPTH - 1:
            z = jnp.maximum(z, 0.0)

    z_ref[...] = z.astype(z_ref.dtype)


# ----------------------------------------------------------------------------
# Wrapper
# ----------------------------------------------------------------------------
def _pooled_sizes(n0):
    ns = [n0]
    for r in RATE:
        ns.append(int(math.ceil(r * ns[-1])))
    return ns


def _cost_estimate(ns, batch, n_in_bytes, n_out_bytes):
    cin_list = [FEAT] + SHAPE[:-1]
    flops = 0
    for i in range(DEPTH):
        n, k, cin, cout = ns[i], ns[i + 1], cin_list[i], SHAPE[i]
        flops += 4 * n * n * n                                   # S^3
        flops += 2 * n * n * cin + 2 * n * cin * cout            # SGConv
        flops += 2 * n * cout                                    # scores
        flops += 2 * k * n * cout                                # P @ (f*score)
        flops += 2 * (k * n * n + n * n * k + k * n * k)         # pooled adjacency
    dec = ((SHAPE[2], SHAPE[1]), (SHAPE[1], SHAPE[0]), (SHAPE[0], FEAT))
    for i, (cin, cout) in enumerate(dec):
        idx = DEPTH - 1 - i
        n, k = ns[idx], ns[idx + 1]
        flops += 2 * n * k * cin + 2 * n * n * cin + 2 * n * cin * cout
    return pl.CostEstimate(flops=int(batch * flops),
                           transcendentals=int(batch * 4 * sum(ns)),
                           bytes_accessed=int(n_in_bytes + n_out_bytes))


@jax.jit
def net_forward(x, adj, params):
    """Dense, graph-batched analogue of Net.forward.

    x: (B, N, FEAT), adj: (B, N, N).  Returns (z, latent_x, latent_adj, batch_vec),
    each with a leading per-graph axis; the grid iterates graphs ("parallel")."""
    bsz, n0, _ = adj.shape
    ns = _pooled_sizes(n0)
    ks = tuple(ns[1:])

    param_arrays = []
    for w, b in params["down"]:
        param_arrays += [w, b.reshape(1, -1)]
    for p in params["pool"]:
        param_arrays.append(p.reshape(-1, 1))
    for w, b in params["up"]:
        param_arrays += [w, b.reshape(1, -1)]
    inputs = [adj, x] + param_arrays

    in_specs = (
        [pl.BlockSpec((None, n0, n0), lambda b: (b, 0, 0)),
         pl.BlockSpec((None, n0, FEAT), lambda b: (b, 0, 0))]
        # Params: constant block index -> fetched once, resident in VMEM across grid.
        + [pl.BlockSpec(arr.shape, lambda b: (0, 0)) for arr in param_arrays]
    )

    out_shape = (
        jax.ShapeDtypeStruct((bsz, n0, FEAT), jnp.float32),            # z
        jax.ShapeDtypeStruct((bsz, ns[-1], SHAPE[-1]), jnp.float32),   # latent_x
        jax.ShapeDtypeStruct((bsz, ns[-1], ns[-1]), jnp.float32),      # latent_adj
    )
    out_specs = (
        pl.BlockSpec((None, n0, FEAT), lambda b: (b, 0, 0)),
        pl.BlockSpec((None, ns[-1], SHAPE[-1]), lambda b: (b, 0, 0)),
        pl.BlockSpec((None, ns[-1], ns[-1]), lambda b: (b, 0, 0)),
    )

    in_bytes = sum(int(v.size) * 4 for v in inputs)
    out_bytes = sum(int(math.prod(s.shape)) * 4 for s in out_shape)

    z, latent_x, latent_adj = pl.pallas_call(
        partial(_net_forward_kernel, ks=ks),
        grid=(bsz,),
        out_shape=out_shape,
        in_specs=in_specs,
        out_specs=out_specs,
        compiler_params=pltpu.CompilerParams(dimension_semantics=("parallel",)),
        cost_estimate=_cost_estimate(ns, bsz, in_bytes, out_bytes),
    )(*inputs)

    # Each graph in the batch is its own single graph -> batch vector of zeros.
    batch_vec = jnp.zeros((bsz, ns[-1]), jnp.int32)
    return z, latent_x, latent_adj, batch_vec


# ----------------------------------------------------------------------------
# Parameters (depth=3 encoder/decoder, channels 5 -> 64 -> 48 -> 32 -> ... -> 5)
# ----------------------------------------------------------------------------
def init_params(key):
    def linear(key, c_in, c_out):
        kw, kb = jax.random.split(key)
        scale = 1.0 / math.sqrt(c_in)
        w = jax.random.uniform(kw, (c_in, c_out), jnp.float32, -scale, scale)
        b = jax.random.uniform(kb, (c_out,), jnp.float32, -scale, scale)
        return w, b

    keys = jax.random.split(key, 9)
    down = [linear(keys[0], FEAT, SHAPE[0]),
            linear(keys[1], SHAPE[0], SHAPE[1]),
            linear(keys[2], SHAPE[1], SHAPE[2])]
    pool = [jax.random.normal(keys[3], (SHAPE[0],), jnp.float32),
            jax.random.normal(keys[4], (SHAPE[1],), jnp.float32),
            jax.random.normal(keys[5], (SHAPE[2],), jnp.float32)]
    up = [linear(keys[6], SHAPE[2], SHAPE[1]),
          linear(keys[7], SHAPE[1], SHAPE[0]),
          linear(keys[8], SHAPE[0], FEAT)]
    return {"down": down, "pool": pool, "up": up}


# ----------------------------------------------------------------------------
# main
# ----------------------------------------------------------------------------
if __name__ == "__main__":
    key = jax.random.PRNGKey(0)
    k_x, k_adj, k_params = jax.random.split(key, 3)

    B, N = 4, 16                                              # graphs, nodes per graph
    x = jax.random.normal(k_x, (B, N, FEAT), jnp.float32)

    # random symmetric adjacency: remove_self_loops then add_self_loops
    u = jax.random.uniform(k_adj, (B, N, N), jnp.float32)
    sym = ((u + jnp.swapaxes(u, 1, 2)) * 0.5) > 0.6
    eye = jnp.eye(N, dtype=jnp.float32)
    adj = sym.astype(jnp.float32) * (1.0 - eye) + eye

    params = init_params(k_params)

    z, latent_x, latent_adj, batch = net_forward(x, adj, params)
    jax.block_until_ready((z, latent_x, latent_adj, batch))

    ns = _pooled_sizes(N)
    assert z.shape == (B, N, FEAT)
    assert latent_x.shape == (B, ns[-1], SHAPE[-1])
    assert latent_adj.shape == (B, ns[-1], ns[-1])
    assert batch.shape == (B, ns[-1])
    assert bool(jnp.all(jnp.isfinite(z)))
    assert bool(jnp.all(jnp.isfinite(latent_x)))
    print("KERNEL_OK")
</pallas_src>

<mosaic_0001>
module attributes {stable_mosaic.version = 11 : i64} {
  func.func @_net_forward_kernel(%arg0: i32, %arg1: memref<1x16x16xf32, #tpu.memory_space<vmem>>, %arg2: memref<1x16x5xf32, #tpu.memory_space<vmem>>, %arg3: memref<5x64xf32, #tpu.memory_space<vmem>>, %arg4: memref<1x64xf32, #tpu.memory_space<vmem>>, %arg5: memref<64x48xf32, #tpu.memory_space<vmem>>, %arg6: memref<1x48xf32, #tpu.memory_space<vmem>>, %arg7: memref<48x32xf32, #tpu.memory_space<vmem>>, %arg8: memref<1x32xf32, #tpu.memory_space<vmem>>, %arg9: memref<64x1xf32, #tpu.memory_space<vmem>>, %arg10: memref<48x1xf32, #tpu.memory_space<vmem>>, %arg11: memref<32x1xf32, #tpu.memory_space<vmem>>, %arg12: memref<32x48xf32, #tpu.memory_space<vmem>>, %arg13: memref<1x48xf32, #tpu.memory_space<vmem>>, %arg14: memref<48x64xf32, #tpu.memory_space<vmem>>, %arg15: memref<1x64xf32, #tpu.memory_space<vmem>>, %arg16: memref<64x5xf32, #tpu.memory_space<vmem>>, %arg17: memref<1x5xf32, #tpu.memory_space<vmem>>, %arg18: memref<1x16x5xf32, #tpu.memory_space<vmem>>, %arg19: memref<1x9x32xf32, #tpu.memory_space<vmem>>, %arg20: memref<1x9x9xf32, #tpu.memory_space<vmem>>) attributes {dimension_semantics = [#tpu.dimension_semantics<parallel>], iteration_bounds = array<i64: 4>, scalar_prefetch = 0 : i64, scratch_operands = 0 : i64, tpu.core_type = #tpu.core_type<tc>, window_params = [{transform_indices = @transform_0, window_bounds = array<i64: 1, 16, 16>}, {transform_indices = @transform_1, window_bounds = array<i64: 1, 16, 5>}, {pipeline_mode = #tpu.pipeline_mode<synchronous>, transform_indices = @transform_2, window_bounds = array<i64: 5, 64>}, {pipeline_mode = #tpu.pipeline_mode<synchronous>, transform_indices = @transform_3, window_bounds = array<i64: 1, 64>}, {pipeline_mode = #tpu.pipeline_mode<synchronous>, transform_indices = @transform_4, window_bounds = array<i64: 64, 48>}, {pipeline_mode = #tpu.pipeline_mode<synchronous>, transform_indices = @transform_5, window_bounds = array<i64: 1, 48>}, {pipeline_mode = #tpu.pipeline_mode<synchronous>, transform_indices = @transform_6, window_bounds = array<i64: 48, 32>}, {pipeline_mode = #tpu.pipeline_mode<synchronous>, transform_indices = @transform_7, window_bounds = array<i64: 1, 32>}, {pipeline_mode = #tpu.pipeline_mode<synchronous>, transform_indices = @transform_8, window_bounds = array<i64: 64, 1>}, {pipeline_mode = #tpu.pipeline_mode<synchronous>, transform_indices = @transform_9, window_bounds = array<i64: 48, 1>}, {pipeline_mode = #tpu.pipeline_mode<synchronous>, transform_indices = @transform_10, window_bounds = array<i64: 32, 1>}, {pipeline_mode = #tpu.pipeline_mode<synchronous>, transform_indices = @transform_11, window_bounds = array<i64: 32, 48>}, {pipeline_mode = #tpu.pipeline_mode<synchronous>, transform_indices = @transform_12, window_bounds = array<i64: 1, 48>}, {pipeline_mode = #tpu.pipeline_mode<synchronous>, transform_indices = @transform_13, window_bounds = array<i64: 48, 64>}, {pipeline_mode = #tpu.pipeline_mode<synchronous>, transform_indices = @transform_14, window_bounds = array<i64: 1, 64>}, {pipeline_mode = #tpu.pipeline_mode<synchronous>, transform_indices = @transform_15, window_bounds = array<i64: 64, 5>}, {pipeline_mode = #tpu.pipeline_mode<synchronous>, transform_indices = @transform_16, window_bounds = array<i64: 1, 5>}, {transform_indices = @transform_17, window_bounds = array<i64: 1, 16, 5>}, {transform_indices = @transform_18, window_bounds = array<i64: 1, 9, 32>}, {transform_indices = @transform_19, window_bounds = array<i64: 1, 9, 9>}]} {
    %c0 = arith.constant 0 : index
    %c0_0 = arith.constant 0 : index
    %c0_1 = arith.constant 0 : index
    %0 = vector.load %arg2[%c0, %c0_0, %c0_1] : memref<1x16x5xf32, #tpu.memory_space<vmem>>, vector<1x16x5xf32>
    %1 = vector.shape_cast %0 : vector<1x16x5xf32> to vector<16x5xf32>
    %c0_2 = arith.constant 0 : index
    %c0_3 = arith.constant 0 : index
    %c0_4 = arith.constant 0 : index
    %2 = vector.load %arg1[%c0_2, %c0_3, %c0_4] : memref<1x16x16xf32, #tpu.memory_space<vmem>>, vector<1x16x16xf32>
    %3 = vector.shape_cast %2 : vector<1x16x16xf32> to vector<16x16xf32>
    %cst = arith.constant dense<0.000000e+00> : vector<16xf32>
    %4 = vector.multi_reduction <add>, %3, %cst [1] : vector<16x16xf32> to vector<16xf32>
    %5 = vector.shape_cast %4 : vector<16xf32> to vector<16x1xf32>
    %cst_5 = arith.constant 1.000000e+00 : f32
    %6 = vector.broadcast %cst_5 : f32 to vector<16x1xf32>
    %7 = arith.maximumf %5, %6 : vector<16x1xf32>
    %8 = math.rsqrt %7 : vector<16x1xf32>
    %cst_6 = arith.constant dense<0.000000e+00> : vector<16xf32>
    %9 = vector.multi_reduction <add>, %3, %cst_6 [0] : vector<16x16xf32> to vector<16xf32>
    %10 = vector.shape_cast %9 : vector<16xf32> to vector<1x16xf32>
    %cst_7 = arith.constant 1.000000e+00 : f32
    %11 = vector.broadcast %cst_7 : f32 to vector<1x16xf32>
    %12 = arith.maximumf %10, %11 : vector<1x16xf32>
    %13 = math.rsqrt %12 : vector<1x16xf32>
    %14 = vector.broadcast %8 : vector<16x1xf32> to vector<16x16xf32>
    %15 = arith.mulf %14, %3 : vector<16x16xf32>
    %16 = vector.broadcast %13 : vector<1x16xf32> to vector<16x16xf32>
    %17 = arith.mulf %15, %16 : vector<16x16xf32>
    %cst_8 = arith.constant dense<0.000000e+00> : vector<16x16xf32>
    %18 = tpu.matmul %17, %17, %cst_8 {dimension_numbers = #tpu.dot_dimension_numbers<[1], [0], [0], [1], [0, 0, 1, 1], [], []>} : vector<16x16xf32>, vector<16x16xf32>, vector<16x16xf32> -> vector<16x16xf32>
    %cst_9 = arith.constant dense<0.000000e+00> : vector<16x16xf32>
    %19 = tpu.matmul %18, %17, %cst_9 {dimension_numbers = #tpu.dot_dimension_numbers<[1], [0], [0], [1], [0, 0, 1, 1], [], []>} : vector<16x16xf32>, vector<16x16xf32>, vector<16x16xf32> -> vector<16x16xf32>
    %cst_10 = arith.constant dense<0.000000e+00> : vector<16x5xf32>
    %20 = tpu.matmul %19, %1, %cst_10 {dimension_numbers = #tpu.dot_dimension_numbers<[1], [0], [0], [1], [0, 0, 1, 1], [], []>} : vector<16x16xf32>, vector<16x5xf32>, vector<16x5xf32> -> vector<16x5xf32>
    %c0_11 = arith.constant 0 : index
    %c0_12 = arith.constant 0 : index
    %21 = vector.load %arg3[%c0_11, %c0_12] : memref<5x64xf32, #tpu.memory_space<vmem>>, vector<5x64xf32>
    %cst_13 = arith.constant dense<0.000000e+00> : vector<16x64xf32>
    %22 = tpu.matmul %20, %21, %cst_13 {dimension_numbers = #tpu.dot_dimension_numbers<[1], [0], [0], [1], [0, 0, 1, 1], [], []>} : vector<16x5xf32>, vector<5x64xf32>, vector<16x64xf32> -> vector<16x64xf32>
    %c0_14 = arith.constant 0 : index
    %c0_15 = arith.constant 0 : index
    %23 = vector.load %arg4[%c0_14, %c0_15] : memref<1x64xf32, #tpu.memory_space<vmem>>, vector<1x64xf32>
    %24 = vector.broadcast %23 : vector<1x64xf32> to vector<16x64xf32>
    %25 = arith.addf %22, %24 : vector<16x64xf32>
    %cst_16 = arith.constant 0.000000e+00 : f32
    %26 = vector.broadcast %cst_16 : f32 to vector<16x64xf32>
    %27 = arith.maximumf %25, %26 : vector<16x64xf32>
    %c0_17 = arith.constant 0 : index
    %c0_18 = arith.constant 0 : index
    %28 = vector.load %arg9[%c0_17, %c0_18] : memref<64x1xf32, #tpu.memory_space<vmem>>, vector<64x1xf32>
    %29 = arith.mulf %28, %28 : vector<64x1xf32>
    %30 = vector.shape_cast %29 : vector<64x1xf32> to vector<1x64x1xf32>
    %cst_19 = arith.constant dense<0.000000e+00> : vector<1xf32>
    %31 = vector.multi_reduction <add>, %30, %cst_19 [1, 2] : vector<1x64x1xf32> to vector<1xf32>
    %32 = vector.shape_cast %31 : vector<1xf32> to vector<1x1x1xf32>
    %33 = vector.extract %32[0, 0, 0] : f32 from vector<1x1x1xf32>
    %34 = math.rsqrt %33 : f32
    %cst_20 = arith.constant dense<0.000000e+00> : vector<16x1xf32>
    %35 = tpu.matmul %27, %28, %cst_20 {dimension_numbers = #tpu.dot_dimension_numbers<[1], [0], [0], [1], [0, 0, 1, 1], [], []>} : vector<16x64xf32>, vector<64x1xf32>, vector<16x1xf32> -> vector<16x1xf32>
    %36 = vector.broadcast %34 : f32 to vector<16x1xf32>
    %37 = arith.mulf %35, %36 : vector<16x1xf32>
    %38 = math.tanh %37 : vector<16x1xf32>
    %39 = tpu.iota {dimensions = array<i32: 0>} : vector<16x16xi32>
    %40 = tpu.iota {dimensions = array<i32: 1>} : vector<16x16xi32>
    %41 = arith.cmpi eq, %39, %40 : vector<16x16xi32>
    %42 = arith.extui %41 : vector<16x16xi1> to vector<16x16xi32>
    %43 = arith.sitofp %42 : vector<16x16xi32> to vector<16x16xf32>
    %44 = vector.broadcast %38 : vector<16x1xf32> to vector<16x16xf32>
    %45 = arith.mulf %43, %44 : vector<16x16xf32>
    %cst_21 = arith.constant dense<0.000000e+00> : vector<16xf32>
    %46 = vector.multi_reduction <add>, %45, %cst_21 [0] : vector<16x16xf32> to vector<16xf32>
    %47 = vector.shape_cast %46 : vector<16xf32> to vector<1x16xf32>
    %48 = vector.broadcast %47 : vector<1x16xf32> to vector<16x16xf32>
    %49 = vector.broadcast %38 : vector<16x1xf32> to vector<16x16xf32>
    %50 = arith.cmpf ogt, %48, %49 : vector<16x16xf32>
    %51 = vector.broadcast %47 : vector<1x16xf32> to vector<16x16xf32>
    %52 = vector.broadcast %38 : vector<16x1xf32> to vector<16x16xf32>
    %53 = arith.cmpf oeq, %51, %52 : vector<16x16xf32>
    %54 = arith.cmpi slt, %40, %39 : vector<16x16xi32>
    %55 = arith.andi %53, %54 : vector<16x16xi1>
    %56 = arith.ori %50, %55 : vector<16x16xi1>
    %57 = arith.extui %56 : vector<16x16xi1> to vector<16x16xi32>
    %58 = arith.sitofp %57 : vector<16x16xi32> to vector<16x16xf32>
    %cst_22 = arith.constant dense<0.000000e+00> : vector<16xf32>
    %59 = vector.multi_reduction <add>, %58, %cst_22 [1] : vector<16x16xf32> to vector<16xf32>
    %60 = vector.shape_cast %59 : vector<16xf32> to vector<16x1xf32>
    %cst_23 = arith.constant dense<0.000000e+00> : vector<16xf32>
    %61 = vector.multi_reduction <add>, %58, %cst_23 [0] : vector<16x16xf32> to vector<16xf32>
    %62 = vector.shape_cast %61 : vector<16xf32> to vector<1x16xf32>
    %cst_24 = arith.constant 1.500000e+01 : f32
    %63 = vector.broadcast %cst_24 : f32 to vector<1x16xf32>
    %64 = arith.subf %63, %62 : vector<1x16xf32>
    %65 = tpu.iota {dimensions = array<i32: 0>} : vector<13x1xi32>
    %66 = arith.sitofp %65 : vector<13x1xi32> to vector<13x1xf32>
    %67 = tpu.iota {dimensions = array<i32: 1>} : vector<1x13xi32>
    %68 = arith.sitofp %67 : vector<1x13xi32> to vector<1x13xf32>
    %69 = vector.broadcast %64 : vector<1x16xf32> to vector<13x16xf32>
    %70 = vector.broadcast %66 : vector<13x1xf32> to vector<13x16xf32>
    %71 = arith.cmpf oeq, %69, %70 : vector<13x16xf32>
    %72 = arith.extui %71 : vector<13x16xi1> to vector<13x16xi32>
    %73 = arith.sitofp %72 : vector<13x16xi32> to vector<13x16xf32>
    %74 = vector.broadcast %60 : vector<16x1xf32> to vector<16x13xf32>
    %75 = vector.broadcast %68 : vector<1x13xf32> to vector<16x13xf32>
    %76 = arith.cmpf oeq, %74, %75 : vector<16x13xf32>
    %77 = arith.extui %76 : vector<16x13xi1> to vector<16x13xi32>
    %78 = arith.sitofp %77 : vector<16x13xi32> to vector<16x13xf32>
    %79 = vector.broadcast %38 : vector<16x1xf32> to vector<16x64xf32>
    %80 = arith.mulf %27, %79 : vector<16x64xf32>
    %cst_25 = arith.constant dense<0.000000e+00> : vector<13x64xf32>
    %81 = tpu.matmul %73, %80, %cst_25 {dimension_numbers = #tpu.dot_dimension_numbers<[1], [0], [0], [1], [0, 0, 1, 1], [], []>} : vector<13x16xf32>, vector<16x64xf32>, vector<13x64xf32> -> vector<13x64xf32>
    %cst_26 = arith.constant dense<0.000000e+00> : vector<13x16xf32>
    %82 = tpu.matmul %73, %3, %cst_26 {dimension_numbers = #tpu.dot_dimension_numbers<[1], [0], [0], [1], [0, 0, 1, 1], [], []>} : vector<13x16xf32>, vector<16x16xf32>, vector<13x16xf32> -> vector<13x16xf32>
    %cst_27 = arith.constant dense<0.000000e+00> : vector<16x13xf32>
    %83 = tpu.matmul %3, %78, %cst_27 {dimension_numbers = #tpu.dot_dimension_numbers<[1], [0], [0], [1], [0, 0, 1, 1], [], []>} : vector<16x16xf32>, vector<16x13xf32>, vector<16x13xf32> -> vector<16x13xf32>
    %cst_28 = arith.constant dense<0.000000e+00> : vector<13x13xf32>
    %84 = tpu.matmul %82, %83, %cst_28 {dimension_numbers = #tpu.dot_dimension_numbers<[1], [0], [0], [1], [0, 0, 1, 1], [], []>} : vector<13x16xf32>, vector<16x13xf32>, vector<13x13xf32> -> vector<13x13xf32>
    %cst_29 = arith.constant 5.000000e-01 : f32
    %85 = vector.broadcast %cst_29 : f32 to vector<13x13xf32>
    %86 = arith.cmpf ogt, %84, %85 : vector<13x13xf32>
    %87 = arith.extui %86 : vector<13x13xi1> to vector<13x13xi32>
    %88 = arith.sitofp %87 : vector<13x13xi32> to vector<13x13xf32>
    %cst_30 = arith.constant dense<0.000000e+00> : vector<13xf32>
    %89 = vector.multi_reduction <add>, %88, %cst_30 [1] : vector<13x13xf32> to vector<13xf32>
    %90 = vector.shape_cast %89 : vector<13xf32> to vector<13x1xf32>
    %cst_31 = arith.constant 1.000000e+00 : f32
    %91 = vector.broadcast %cst_31 : f32 to vector<13x1xf32>
    %92 = arith.maximumf %90, %91 : vector<13x1xf32>
    %93 = math.rsqrt %92 : vector<13x1xf32>
    %cst_32 = arith.constant dense<0.000000e+00> : vector<13xf32>
    %94 = vector.multi_reduction <add>, %88, %cst_32 [0] : vector<13x13xf32> to vector<13xf32>
    %95 = vector.shape_cast %94 : vector<13xf32> to vector<1x13xf32>
    %cst_33 = arith.constant 1.000000e+00 : f32
    %96 = vector.broadcast %cst_33 : f32 to vector<1x13xf32>
    %97 = arith.maximumf %95, %96 : vector<1x13xf32>
    %98 = math.rsqrt %97 : vector<1x13xf32>
    %99 = vector.broadcast %93 : vector<13x1xf32> to vector<13x13xf32>
    %100 = arith.mulf %99, %88 : vector<13x13xf32>
    %101 = vector.broadcast %98 : vector<1x13xf32> to vector<13x13xf32>
    %102 = arith.mulf %100, %101 : vector<13x13xf32>
    %cst_34 = arith.constant dense<0.000000e+00> : vector<13x13xf32>
    %103 = tpu.matmul %102, %102, %cst_34 {dimension_numbers = #tpu.dot_dimension_numbers<[1], [0], [0], [1], [0, 0, 1, 1], [], []>} : vector<13x13xf32>, vector<13x13xf32>, vector<13x13xf32> -> vector<13x13xf32>
    %cst_35 = arith.constant dense<0.000000e+00> : vector<13x13xf32>
    %104 = tpu.matmul %103, %102, %cst_35 {dimension_numbers = #tpu.dot_dimension_numbers<[1], [0], [0], [1], [0, 0, 1, 1], [], []>} : vector<13x13xf32>, vector<13x13xf32>, vector<13x13xf32> -> vector<13x13xf32>
    %cst_36 = arith.constant dense<0.000000e+00> : vector<13x64xf32>
    %105 = tpu.matmul %104, %81, %cst_36 {dimension_numbers = #tpu.dot_dimension_numbers<[1], [0], [0], [1], [0, 0, 1, 1], [], []>} : vector<13x13xf32>, vector<13x64xf32>, vector<13x64xf32> -> vector<13x64xf32>
    %c0_37 = arith.constant 0 : index
    %c0_38 = arith.constant 0 : index
    %106 = vector.load %arg5[%c0_37, %c0_38] : memref<64x48xf32, #tpu.memory_space<vmem>>, vector<64x48xf32>
    %cst_39 = arith.constant dense<0.000000e+00> : vector<13x48xf32>
    %107 = tpu.matmul %105, %106, %cst_39 {dimension_numbers = #tpu.dot_dimension_numbers<[1], [0], [0], [1], [0, 0, 1, 1], [], []>} : vector<13x64xf32>, vector<64x48xf32>, vector<13x48xf32> -> vector<13x48xf32>
    %c0_40 = arith.constant 0 : index
    %c0_41 = arith.constant 0 : index
    %108 = vector.load %arg6[%c0_40, %c0_41] : memref<1x48xf32, #tpu.memory_space<vmem>>, vector<1x48xf32>
    %109 = vector.broadcast %108 : vector<1x48xf32> to vector<13x48xf32>
    %110 = arith.addf %107, %109 : vector<13x48xf32>
    %cst_42 = arith.constant 0.000000e+00 : f32
    %111 = vector.broadcast %cst_42 : f32 to vector<13x48xf32>
    %112 = arith.maximumf %110, %111 : vector<13x48xf32>
    %c0_43 = arith.constant 0 : index
    %c0_44 = arith.constant 0 : index
    %113 = vector.load %arg10[%c0_43, %c0_44] : memref<48x1xf32, #tpu.memory_space<vmem>>, vector<48x1xf32>
    %114 = arith.mulf %113, %113 : vector<48x1xf32>
    %115 = vector.shape_cast %114 : vector<48x1xf32> to vector<1x48x1xf32>
    %cst_45 = arith.constant dense<0.000000e+00> : vector<1xf32>
    %116 = vector.multi_reduction <add>, %115, %cst_45 [1, 2] : vector<1x48x1xf32> to vector<1xf32>
    %117 = vector.shape_cast %116 : vector<1xf32> to vector<1x1x1xf32>
    %118 = vector.extract %117[0, 0, 0] : f32 from vector<1x1x1xf32>
    %119 = math.rsqrt %118 : f32
    %cst_46 = arith.constant dense<0.000000e+00> : vector<13x1xf32>
    %120 = tpu.matmul %112, %113, %cst_46 {dimension_numbers = #tpu.dot_dimension_numbers<[1], [0], [0], [1], [0, 0, 1, 1], [], []>} : vector<13x48xf32>, vector<48x1xf32>, vector<13x1xf32> -> vector<13x1xf32>
    %121 = vector.broadcast %119 : f32 to vector<13x1xf32>
    %122 = arith.mulf %120, %121 : vector<13x1xf32>
    %123 = math.tanh %122 : vector<13x1xf32>
    %124 = tpu.iota {dimensions = array<i32: 0>} : vector<13x13xi32>
    %125 = tpu.iota {dimensions = array<i32: 1>} : vector<13x13xi32>
    %126 = arith.cmpi eq, %124, %125 : vector<13x13xi32>
    %127 = arith.extui %126 : vector<13x13xi1> to vector<13x13xi32>
    %128 = arith.sitofp %127 : vector<13x13xi32> to vector<13x13xf32>
    %129 = vector.broadcast %123 : vector<13x1xf32> to vector<13x13xf32>
    %130 = arith.mulf %128, %129 : vector<13x13xf32>
    %cst_47 = arith.constant dense<0.000000e+00> : vector<13xf32>
    %131 = vector.multi_reduction <add>, %130, %cst_47 [0] : vector<13x13xf32> to vector<13xf32>
    %132 = vector.shape_cast %131 : vector<13xf32> to vector<1x13xf32>
    %133 = vector.broadcast %132 : vector<1x13xf32> to vector<13x13xf32>
    %134 = vector.broadcast %123 : vector<13x1xf32> to vector<13x13xf32>
    %135 = arith.cmpf ogt, %133, %134 : vector<13x13xf32>
    %136 = vector.broadcast %132 : vector<1x13xf32> to vector<13x13xf32>
    %137 = vector.broadcast %123 : vector<13x1xf32> to vector<13x13xf32>
    %138 = arith.cmpf oeq, %136, %137 : vector<13x13xf32>
    %139 = arith.cmpi slt, %125, %124 : vector<13x13xi32>
    %140 = arith.andi %138, %139 : vector<13x13xi1>
    %141 = arith.ori %135, %140 : vector<13x13xi1>
    %142 = arith.extui %141 : vector<13x13xi1> to vector<13x13xi32>
    %143 = arith.sitofp %142 : vector<13x13xi32> to vector<13x13xf32>
    %cst_48 = arith.constant dense<0.000000e+00> : vector<13xf32>
    %144 = vector.multi_reduction <add>, %143, %cst_48 [1] : vector<13x13xf32> to vector<13xf32>
    %145 = vector.shape_cast %144 : vector<13xf32> to vector<13x1xf32>
    %cst_49 = arith.constant dense<0.000000e+00> : vector<13xf32>
    %146 = vector.multi_reduction <add>, %143, %cst_49 [0] : vector<13x13xf32> to vector<13xf32>
    %147 = vector.shape_cast %146 : vector<13xf32> to vector<1x13xf32>
    %cst_50 = arith.constant 1.200000e+01 : f32
    %148 = vector.broadcast %cst_50 : f32 to vector<1x13xf32>
    %149 = arith.subf %148, %147 : vector<1x13xf32>
    %150 = tpu.iota {dimensions = array<i32: 0>} : vector<11x1xi32>
    %151 = arith.sitofp %150 : vector<11x1xi32> to vector<11x1xf32>
    %152 = tpu.iota {dimensions = array<i32: 1>} : vector<1x11xi32>
    %153 = arith.sitofp %152 : vector<1x11xi32> to vector<1x11xf32>
    %154 = vector.broadcast %149 : vector<1x13xf32> to vector<11x13xf32>
    %155 = vector.broadcast %151 : vector<11x1xf32> to vector<11x13xf32>
    %156 = arith.cmpf oeq, %154, %155 : vector<11x13xf32>
    %157 = arith.extui %156 : vector<11x13xi1> to vector<11x13xi32>
    %158 = arith.sitofp %157 : vector<11x13xi32> to vector<11x13xf32>
    %159 = vector.broadcast %145 : vector<13x1xf32> to vector<13x11xf32>
    %160 = vector.broadcast %153 : vector<1x11xf32> to vector<13x11xf32>
    %161 = arith.cmpf oeq, %159, %160 : vector<13x11xf32>
    %162 = arith.extui %161 : vector<13x11xi1> to vector<13x11xi32>
    %163 = arith.sitofp %162 : vector<13x11xi32> to vector<13x11xf32>
    %164 = vector.broadcast %123 : vector<13x1xf32> to vector<13x48xf32>
    %165 = arith.mulf %112, %164 : vector<13x48xf32>
    %cst_51 = arith.constant dense<0.000000e+00> : vector<11x48xf32>
    %166 = tpu.matmul %158, %165, %cst_51 {dimension_numbers = #tpu.dot_dimension_numbers<[1], [0], [0], [1], [0, 0, 1, 1], [], []>} : vector<11x13xf32>, vector<13x48xf32>, vector<11x48xf32> -> vector<11x48xf32>
    %cst_52 = arith.constant dense<0.000000e+00> : vector<11x13xf32>
    %167 = tpu.matmul %158, %88, %cst_52 {dimension_numbers = #tpu.dot_dimension_numbers<[1], [0], [0], [1], [0, 0, 1, 1], [], []>} : vector<11x13xf32>, vector<13x13xf32>, vector<11x13xf32> -> vector<11x13xf32>
    %cst_53 = arith.constant dense<0.000000e+00> : vector<13x11xf32>
    %168 = tpu.matmul %88, %163, %cst_53 {dimension_numbers = #tpu.dot_dimension_numbers<[1], [0], [0], [1], [0, 0, 1, 1], [], []>} : vector<13x13xf32>, vector<13x11xf32>, vector<13x11xf32> -> vector<13x11xf32>
    %cst_54 = arith.constant dense<0.000000e+00> : vector<11x11xf32>
    %169 = tpu.matmul %167, %168, %cst_54 {dimension_numbers = #tpu.dot_dimension_numbers<[1], [0], [0], [1], [0, 0, 1, 1], [], []>} : vector<11x13xf32>, vector<13x11xf32>, vector<11x11xf32> -> vector<11x11xf32>
    %cst_55 = arith.constant 5.000000e-01 : f32
    %170 = vector.broadcast %cst_55 : f32 to vector<11x11xf32>
    %171 = arith.cmpf ogt, %169, %170 : vector<11x11xf32>
    %172 = arith.extui %171 : vector<11x11xi1> to vector<11x11xi32>
    %173 = arith.sitofp %172 : vector<11x11xi32> to vector<11x11xf32>
    %cst_56 = arith.constant dense<0.000000e+00> : vector<11xf32>
    %174 = vector.multi_reduction <add>, %173, %cst_56 [1] : vector<11x11xf32> to vector<11xf32>
    %175 = vector.shape_cast %174 : vector<11xf32> to vector<11x1xf32>
    %cst_57 = arith.constant 1.000000e+00 : f32
    %176 = vector.broadcast %cst_57 : f32 to vector<11x1xf32>
    %177 = arith.maximumf %175, %176 : vector<11x1xf32>
    %178 = math.rsqrt %177 : vector<11x1xf32>
    %cst_58 = arith.constant dense<0.000000e+00> : vector<11xf32>
    %179 = vector.multi_reduction <add>, %173, %cst_58 [0] : vector<11x11xf32> to vector<11xf32>
    %180 = vector.shape_cast %179 : vector<11xf32> to vector<1x11xf32>
    %cst_59 = arith.constant 1.000000e+00 : f32
    %181 = vector.broadcast %cst_59 : f32 to vector<1x11xf32>
    %182 = arith.maximumf %180, %181 : vector<1x11xf32>
    %183 = math.rsqrt %182 : vector<1x11xf32>
    %184 = vector.broadcast %178 : vector<11x1xf32> to vector<11x11xf32>
    %185 = arith.mulf %184, %173 : vector<11x11xf32>
    %186 = vector.broadcast %183 : vector<1x11xf32> to vector<11x11xf32>
    %187 = arith.mulf %185, %186 : vector<11x11xf32>
    %cst_60 = arith.constant dense<0.000000e+00> : vector<11x11xf32>
    %188 = tpu.matmul %187, %187, %cst_60 {dimension_numbers = #tpu.dot_dimension_numbers<[1], [0], [0], [1], [0, 0, 1, 1], [], []>} : vector<11x11xf32>, vector<11x11xf32>, vector<11x11xf32> -> vector<11x11xf32>
    %cst_61 = arith.constant dense<0.000000e+00> : vector<11x11xf32>
    %189 = tpu.matmul %188, %187, %cst_61 {dimension_numbers = #tpu.dot_dimension_numbers<[1], [0], [0], [1], [0, 0, 1, 1], [], []>} : vector<11x11xf32>, vector<11x11xf32>, vector<11x11xf32> -> vector<11x11xf32>
    %cst_62 = arith.constant dense<0.000000e+00> : vector<11x48xf32>
    %190 = tpu.matmul %189, %166, %cst_62 {dimension_numbers = #tpu.dot_dimension_numbers<[1], [0], [0], [1], [0, 0, 1, 1], [], []>} : vector<11x11xf32>, vector<11x48xf32>, vector<11x48xf32> -> vector<11x48xf32>
    %c0_63 = arith.constant 0 : index
    %c0_64 = arith.constant 0 : index
    %191 = vector.load %arg7[%c0_63, %c0_64] : memref<48x32xf32, #tpu.memory_space<vmem>>, vector<48x32xf32>
    %cst_65 = arith.constant dense<0.000000e+00> : vector<11x32xf32>
    %192 = tpu.matmul %190, %191, %cst_65 {dimension_numbers = #tpu.dot_dimension_numbers<[1], [0], [0], [1], [0, 0, 1, 1], [], []>} : vector<11x48xf32>, vector<48x32xf32>, vector<11x32xf32> -> vector<11x32xf32>
    %c0_66 = arith.constant 0 : index
    %c0_67 = arith.constant 0 : index
    %193 = vector.load %arg8[%c0_66, %c0_67] : memref<1x32xf32, #tpu.memory_space<vmem>>, vector<1x32xf32>
    %194 = vector.broadcast %193 : vector<1x32xf32> to vector<11x32xf32>
    %195 = arith.addf %192, %194 : vector<11x32xf32>
    %cst_68 = arith.constant 0.000000e+00 : f32
    %196 = vector.broadcast %cst_68 : f32 to vector<11x32xf32>
    %197 = arith.maximumf %195, %196 : vector<11x32xf32>
    %c0_69 = arith.constant 0 : index
    %c0_70 = arith.constant 0 : index
    %198 = vector.load %arg11[%c0_69, %c0_70] : memref<32x1xf32, #tpu.memory_space<vmem>>, vector<32x1xf32>
    %199 = arith.mulf %198, %198 : vector<32x1xf32>
    %200 = vector.shape_cast %199 : vector<32x1xf32> to vector<1x32x1xf32>
    %cst_71 = arith.constant dense<0.000000e+00> : vector<1xf32>
    %201 = vector.multi_reduction <add>, %200, %cst_71 [1, 2] : vector<1x32x1xf32> to vector<1xf32>
    %202 = vector.shape_cast %201 : vector<1xf32> to vector<1x1x1xf32>
    %203 = vector.extract %202[0, 0, 0] : f32 from vector<1x1x1xf32>
    %204 = math.rsqrt %203 : f32
    %cst_72 = arith.constant dense<0.000000e+00> : vector<11x1xf32>
    %205 = tpu.matmul %197, %198, %cst_72 {dimension_numbers = #tpu.dot_dimension_numbers<[1], [0], [0], [1], [0, 0, 1, 1], [], []>} : vector<11x32xf32>, vector<32x1xf32>, vector<11x1xf32> -> vector<11x1xf32>
    %206 = vector.broadcast %204 : f32 to vector<11x1xf32>
    %207 = arith.mulf %205, %206 : vector<11x1xf32>
    %208 = math.tanh %207 : vector<11x1xf32>
    %209 = tpu.iota {dimensions = array<i32: 0>} : vector<11x11xi32>
    %210 = tpu.iota {dimensions = array<i32: 1>} : vector<11x11xi32>
    %211 = arith.cmpi eq, %209, %210 : vector<11x11xi32>
    %212 = arith.extui %211 : vector<11x11xi1> to vector<11x11xi32>
    %213 = arith.sitofp %212 : vector<11x11xi32> to vector<11x11xf32>
    %214 = vector.broadcast %208 : vector<11x1xf32> to vector<11x11xf32>
    %215 = arith.mulf %213, %214 : vector<11x11xf32>
    %cst_73 = arith.constant dense<0.000000e+00> : vector<11xf32>
    %216 = vector.multi_reduction <add>, %215, %cst_73 [0] : vector<11x11xf32> to vector<11xf32>
    %217 = vector.shape_cast %216 : vector<11xf32> to vector<1x11xf32>
    %218 = vector.broadcast %217 : vector<1x11xf32> to vector<11x11xf32>
    %219 = vector.broadcast %208 : vector<11x1xf32> to vector<11x11xf32>
    %220 = arith.cmpf ogt, %218, %219 : vector<11x11xf32>
    %221 = vector.broadcast %217 : vector<1x11xf32> to vector<11x11xf32>
    %222 = vector.broadcast %208 : vector<11x1xf32> to vector<11x11xf32>
    %223 = arith.cmpf oeq, %221, %222 : vector<11x11xf32>
    %224 = arith.cmpi slt, %210, %209 : vector<11x11xi32>
    %225 = arith.andi %223, %224 : vector<11x11xi1>
    %226 = arith.ori %220, %225 : vector<11x11xi1>
    %227 = arith.extui %226 : vector<11x11xi1> to vector<11x11xi32>
    %228 = arith.sitofp %227 : vector<11x11xi32> to vector<11x11xf32>
    %cst_74 = arith.constant dense<0.000000e+00> : vector<11xf32>
    %229 = vector.multi_reduction <add>, %228, %cst_74 [1] : vector<11x11xf32> to vector<11xf32>
    %230 = vector.shape_cast %229 : vector<11xf32> to vector<11x1xf32>
    %cst_75 = arith.constant dense<0.000000e+00> : vector<11xf32>
    %231 = vector.multi_reduction <add>, %228, %cst_75 [0] : vector<11x11xf32> to vector<11xf32>
    %232 = vector.shape_cast %231 : vector<11xf32> to vector<1x11xf32>
    %cst_76 = arith.constant 1.000000e+01 : f32
    %233 = vector.broadcast %cst_76 : f32 to vector<1x11xf32>
    %234 = arith.subf %233, %232 : vector<1x11xf32>
    %235 = tpu.iota {dimensions = array<i32: 0>} : vector<9x1xi32>
    %236 = arith.sitofp %235 : vector<9x1xi32> to vector<9x1xf32>
    %237 = tpu.iota {dimensions = array<i32: 1>} : vector<1x9xi32>
    %238 = arith.sitofp %237 : vector<1x9xi32> to vector<1x9xf32>
    %239 = vector.broadcast %234 : vector<1x11xf32> to vector<9x11xf32>
    %240 = vector.broadcast %236 : vector<9x1xf32> to vector<9x11xf32>
    %241 = arith.cmpf oeq, %239, %240 : vector<9x11xf32>
    %242 = arith.extui %241 : vector<9x11xi1> to vector<9x11xi32>
    %243 = arith.sitofp %242 : vector<9x11xi32> to vector<9x11xf32>
    %244 = vector.broadcast %230 : vector<11x1xf32> to vector<11x9xf32>
    %245 = vector.broadcast %238 : vector<1x9xf32> to vector<11x9xf32>
    %246 = arith.cmpf oeq, %244, %245 : vector<11x9xf32>
    %247 = arith.extui %246 : vector<11x9xi1> to vector<11x9xi32>
    %248 = arith.sitofp %247 : vector<11x9xi32> to vector<11x9xf32>
    %249 = vector.broadcast %208 : vector<11x1xf32> to vector<11x32xf32>
    %250 = arith.mulf %197, %249 : vector<11x32xf32>
    %cst_77 = arith.constant dense<0.000000e+00> : vector<9x32xf32>
    %251 = tpu.matmul %243, %250, %cst_77 {dimension_numbers = #tpu.dot_dimension_numbers<[1], [0], [0], [1], [0, 0, 1, 1], [], []>} : vector<9x11xf32>, vector<11x32xf32>, vector<9x32xf32> -> vector<9x32xf32>
    %cst_78 = arith.constant dense<0.000000e+00> : vector<9x11xf32>
    %252 = tpu.matmul %243, %173, %cst_78 {dimension_numbers = #tpu.dot_dimension_numbers<[1], [0], [0], [1], [0, 0, 1, 1], [], []>} : vector<9x11xf32>, vector<11x11xf32>, vector<9x11xf32> -> vector<9x11xf32>
    %cst_79 = arith.constant dense<0.000000e+00> : vector<11x9xf32>
    %253 = tpu.matmul %173, %248, %cst_79 {dimension_numbers = #tpu.dot_dimension_numbers<[1], [0], [0], [1], [0, 0, 1, 1], [], []>} : vector<11x11xf32>, vector<11x9xf32>, vector<11x9xf32> -> vector<11x9xf32>
    %cst_80 = arith.constant dense<0.000000e+00> : vector<9x9xf32>
    %254 = tpu.matmul %252, %253, %cst_80 {dimension_numbers = #tpu.dot_dimension_numbers<[1], [0], [0], [1], [0, 0, 1, 1], [], []>} : vector<9x11xf32>, vector<11x9xf32>, vector<9x9xf32> -> vector<9x9xf32>
    %cst_81 = arith.constant 5.000000e-01 : f32
    %255 = vector.broadcast %cst_81 : f32 to vector<9x9xf32>
    %256 = arith.cmpf ogt, %254, %255 : vector<9x9xf32>
    %257 = arith.extui %256 : vector<9x9xi1> to vector<9x9xi32>
    %258 = arith.sitofp %257 : vector<9x9xi32> to vector<9x9xf32>
    %c0_82 = arith.constant 0 : index
    %c0_83 = arith.constant 0 : index
    %c0_84 = arith.constant 0 : index
    %259 = vector.load %arg19[%c0_82, %c0_83, %c0_84] : memref<1x9x32xf32, #tpu.memory_space<vmem>>, vector<1x9x32xf32>
    %260 = vector.shape_cast %259 : vector<1x9x32xf32> to vector<9x32xf32>
    %261 = vector.shape_cast %251 : vector<9x32xf32> to vector<1x9x32xf32>
    tpu.vector_store %arg19[%c0_82, %c0_83, %c0_84], %261 {strides = array<i32>} : memref<1x9x32xf32, #tpu.memory_space<vmem>>, vector<1x9x32xf32>,
    %c0_85 = arith.constant 0 : index
    %c0_86 = arith.constant 0 : index
    %c0_87 = arith.constant 0 : index
    %262 = vector.load %arg20[%c0_85, %c0_86, %c0_87] : memref<1x9x9xf32, #tpu.memory_space<vmem>>, vector<1x9x9xf32>
    %263 = vector.shape_cast %262 : vector<1x9x9xf32> to vector<9x9xf32>
    %264 = vector.shape_cast %258 : vector<9x9xf32> to vector<1x9x9xf32>
    tpu.vector_store %arg20[%c0_85, %c0_86, %c0_87], %264 {strides = array<i32>} : memref<1x9x9xf32, #tpu.memory_space<vmem>>, vector<1x9x9xf32>,
    %cst_88 = arith.constant dense<0.000000e+00> : vector<11x32xf32>
    %265 = tpu.matmul %248, %251, %cst_88 {dimension_numbers = #tpu.dot_dimension_numbers<[1], [0], [0], [1], [0, 0, 1, 1], [], []>} : vector<11x9xf32>, vector<9x32xf32>, vector<11x32xf32> -> vector<11x32xf32>
    %cst_89 = arith.constant dense<0.000000e+00> : vector<11x32xf32>
    %266 = tpu.matmul %189, %265, %cst_89 {dimension_numbers = #tpu.dot_dimension_numbers<[1], [0], [0], [1], [0, 0, 1, 1], [], []>} : vector<11x11xf32>, vector<11x32xf32>, vector<11x32xf32> -> vector<11x32xf32>
    %c0_90 = arith.constant 0 : index
    %c0_91 = arith.constant 0 : index
    %267 = vector.load %arg12[%c0_90, %c0_91] : memref<32x48xf32, #tpu.memory_space<vmem>>, vector<32x48xf32>
    %cst_92 = arith.constant dense<0.000000e+00> : vector<11x48xf32>
    %268 = tpu.matmul %266, %267, %cst_92 {dimension_numbers = #tpu.dot_dimension_numbers<[1], [0], [0], [1], [0, 0, 1, 1], [], []>} : vector<11x32xf32>, vector<32x48xf32>, vector<11x48xf32> -> vector<11x48xf32>
    %c0_93 = arith.constant 0 : index
    %c0_94 = arith.constant 0 : index
    %269 = vector.load %arg13[%c0_93, %c0_94] : memref<1x48xf32, #tpu.memory_space<vmem>>, vector<1x48xf32>
    %270 = vector.broadcast %269 : vector<1x48xf32> to vector<11x48xf32>
    %271 = arith.addf %268, %270 : vector<11x48xf32>
    %cst_95 = arith.constant 0.000000e+00 : f32
    %272 = vector.broadcast %cst_95 : f32 to vector<11x48xf32>
    %273 = arith.maximumf %271, %272 : vector<11x48xf32>
    %cst_96 = arith.constant dense<0.000000e+00> : vector<13x48xf32>
    %274 = tpu.matmul %163, %273, %cst_96 {dimension_numbers = #tpu.dot_dimension_numbers<[1], [0], [0], [1], [0, 0, 1, 1], [], []>} : vector<13x11xf32>, vector<11x48xf32>, vector<13x48xf32> -> vector<13x48xf32>
    %cst_97 = arith.constant dense<0.000000e+00> : vector<13x48xf32>
    %275 = tpu.matmul %104, %274, %cst_97 {dimension_numbers = #tpu.dot_dimension_numbers<[1], [0], [0], [1], [0, 0, 1, 1], [], []>} : vector<13x13xf32>, vector<13x48xf32>, vector<13x48xf32> -> vector<13x48xf32>
    %c0_98 = arith.constant 0 : index
    %c0_99 = arith.constant 0 : index
    %276 = vector.load %arg14[%c0_98, %c0_99] : memref<48x64xf32, #tpu.memory_space<vmem>>, vector<48x64xf32>
    %cst_100 = arith.constant dense<0.000000e+00> : vector<13x64xf32>
    %277 = tpu.matmul %275, %276, %cst_100 {dimension_numbers = #tpu.dot_dimension_numbers<[1], [0], [0], [1], [0, 0, 1, 1], [], []>} : vector<13x48xf32>, vector<48x64xf32>, vector<13x64xf32> -> vector<13x64xf32>
    %c0_101 = arith.constant 0 : index
    %c0_102 = arith.constant 0 : index
    %278 = vector.load %arg15[%c0_101, %c0_102] : memref<1x64xf32, #tpu.memory_space<vmem>>, vector<1x64xf32>
    %279 = vector.broadcast %278 : vector<1x64xf32> to vector<13x64xf32>
    %280 = arith.addf %277, %279 : vector<13x64xf32>
    %cst_103 = arith.constant 0.000000e+00 : f32
    %281 = vector.broadcast %cst_103 : f32 to vector<13x64xf32>
    %282 = arith.maximumf %280, %281 : vector<13x64xf32>
    %cst_104 = arith.constant dense<0.000000e+00> : vector<16x64xf32>
    %283 = tpu.matmul %78, %282, %cst_104 {dimension_numbers = #tpu.dot_dimension_numbers<[1], [0], [0], [1], [0, 0, 1, 1], [], []>} : vector<16x13xf32>, vector<13x64xf32>, vector<16x64xf32> -> vector<16x64xf32>
    %cst_105 = arith.constant dense<0.000000e+00> : vector<16x64xf32>
    %284 = tpu.matmul %17, %283, %cst_105 {dimension_numbers = #tpu.dot_dimension_numbers<[1], [0], [0], [1], [0, 0, 1, 1], [], []>} : vector<16x16xf32>, vector<16x64xf32>, vector<16x64xf32> -> vector<16x64xf32>
    %c0_106 = arith.constant 0 : index
    %c0_107 = arith.constant 0 : index
    %285 = vector.load %arg16[%c0_106, %c0_107] : memref<64x5xf32, #tpu.memory_space<vmem>>, vector<64x5xf32>
    %cst_108 = arith.constant dense<0.000000e+00> : vector<16x5xf32>
    %286 = tpu.matmul %284, %285, %cst_108 {dimension_numbers = #tpu.dot_dimension_numbers<[1], [0], [0], [1], [0, 0, 1, 1], [], []>} : vector<16x64xf32>, vector<64x5xf32>, vector<16x5xf32> -> vector<16x5xf32>
    %c0_109 = arith.constant 0 : index
    %c0_110 = arith.constant 0 : index
    %287 = vector.load %arg17[%c0_109, %c0_110] : memref<1x5xf32, #tpu.memory_space<vmem>>, vector<1x5xf32>
    %288 = vector.broadcast %287 : vector<1x5xf32> to vector<16x5xf32>
    %289 = arith.addf %286, %288 : vector<16x5xf32>
    %c0_111 = arith.constant 0 : index
    %c0_112 = arith.constant 0 : index
    %c0_113 = arith.constant 0 : index
    %290 = vector.load %arg18[%c0_111, %c0_112, %c0_113] : memref<1x16x5xf32, #tpu.memory_space<vmem>>, vector<1x16x5xf32>
    %291 = vector.shape_cast %290 : vector<1x16x5xf32> to vector<16x5xf32>
    %292 = vector.shape_cast %289 : vector<16x5xf32> to vector<1x16x5xf32>
    tpu.vector_store %arg18[%c0_111, %c0_112, %c0_113], %292 {strides = array<i32>} : memref<1x16x5xf32, #tpu.memory_space<vmem>>, vector<1x16x5xf32>,
    return
  }
  func.func @transform_0(%arg0: i32) -> (i32, i32, i32) {
    %c0_i32 = arith.constant 0 : i32
    %c0_i32_0 = arith.constant 0 : i32
    %c0_i32_1 = arith.constant 0 : i32
    return %arg0, %c0_i32, %c0_i32_0 : i32, i32, i32
  }
  func.func @transform_1(%arg0: i32) -> (i32, i32, i32) {
    %c0_i32 = arith.constant 0 : i32
    %c0_i32_0 = arith.constant 0 : i32
    %c0_i32_1 = arith.constant 0 : i32
    return %arg0, %c0_i32, %c0_i32_0 : i32, i32, i32
  }
  func.func @transform_2(%arg0: i32) -> (i32, i32) {
    %c0_i32 = arith.constant 0 : i32
    %c0_i32_0 = arith.constant 0 : i32
    %c0_i32_1 = arith.constant 0 : i32
    return %c0_i32, %c0_i32_0 : i32, i32
  }
  func.func @transform_3(%arg0: i32) -> (i32, i32) {
    %c0_i32 = arith.constant 0 : i32
    %c0_i32_0 = arith.constant 0 : i32
    %c0_i32_1 = arith.constant 0 : i32
    return %c0_i32, %c0_i32_0 : i32, i32
  }
  func.func @transform_4(%arg0: i32) -> (i32, i32) {
    %c0_i32 = arith.constant 0 : i32
    %c0_i32_0 = arith.constant 0 : i32
    %c0_i32_1 = arith.constant 0 : i32
    return %c0_i32, %c0_i32_0 : i32, i32
  }
  func.func @transform_5(%arg0: i32) -> (i32, i32) {
    %c0_i32 = arith.constant 0 : i32
    %c0_i32_0 = arith.constant 0 : i32
    %c0_i32_1 = arith.constant 0 : i32
    return %c0_i32, %c0_i32_0 : i32, i32
  }
  func.func @transform_6(%arg0: i32) -> (i32, i32) {
    %c0_i32 = arith.constant 0 : i32
    %c0_i32_0 = arith.constant 0 : i32
    %c0_i32_1 = arith.constant 0 : i32
    return %c0_i32, %c0_i32_0 : i32, i32
  }
  func.func @transform_7(%arg0: i32) -> (i32, i32) {
    %c0_i32 = arith.constant 0 : i32
    %c0_i32_0 = arith.constant 0 : i32
    %c0_i32_1 = arith.constant 0 : i32
    return %c0_i32, %c0_i32_0 : i32, i32
  }
  func.func @transform_8(%arg0: i32) -> (i32, i32) {
    %c0_i32 = arith.constant 0 : i32
    %c0_i32_0 = arith.constant 0 : i32
    %c0_i32_1 = arith.constant 0 : i32
    return %c0_i32, %c0_i32_0 : i32, i32
  }
  func.func @transform_9(%arg0: i32) -> (i32, i32) {
    %c0_i32 = arith.constant 0 : i32
    %c0_i32_0 = arith.constant 0 : i32
    %c0_i32_1 = arith.constant 0 : i32
    return %c0_i32, %c0_i32_0 : i32, i32
  }
  func.func @transform_10(%arg0: i32) -> (i32, i32) {
    %c0_i32 = arith.constant 0 : i32
    %c0_i32_0 = arith.constant 0 : i32
    %c0_i32_1 = arith.constant 0 : i32
    return %c0_i32, %c0_i32_0 : i32, i32
  }
  func.func @transform_11(%arg0: i32) -> (i32, i32) {
    %c0_i32 = arith.constant 0 : i32
    %c0_i32_0 = arith.constant 0 : i32
    %c0_i32_1 = arith.constant 0 : i32
    return %c0_i32, %c0_i32_0 : i32, i32
  }
  func.func @transform_12(%arg0: i32) -> (i32, i32) {
    %c0_i32 = arith.constant 0 : i32
    %c0_i32_0 = arith.constant 0 : i32
    %c0_i32_1 = arith.constant 0 : i32
    return %c0_i32, %c0_i32_0 : i32, i32
  }
  func.func @transform_13(%arg0: i32) -> (i32, i32) {
    %c0_i32 = arith.constant 0 : i32
    %c0_i32_0 = arith.constant 0 : i32
    %c0_i32_1 = arith.constant 0 : i32
    return %c0_i32, %c0_i32_0 : i32, i32
  }
  func.func @transform_14(%arg0: i32) -> (i32, i32) {
    %c0_i32 = arith.constant 0 : i32
    %c0_i32_0 = arith.constant 0 : i32
    %c0_i32_1 = arith.constant 0 : i32
    return %c0_i32, %c0_i32_0 : i32, i32
  }
  func.func @transform_15(%arg0: i32) -> (i32, i32) {
    %c0_i32 = arith.constant 0 : i32
    %c0_i32_0 = arith.constant 0 : i32
    %c0_i32_1 = arith.constant 0 : i32
    return %c0_i32, %c0_i32_0 : i32, i32
  }
  func.func @transform_16(%arg0: i32) -> (i32, i32) {
    %c0_i32 = arith.constant 0 : i32
    %c0_i32_0 = arith.constant 0 : i32
    %c0_i32_1 = arith.constant 0 : i32
    return %c0_i32, %c0_i32_0 : i32, i32
  }
  func.func @transform_17(%arg0: i32) -> (i32, i32, i32) {
    %c0_i32 = arith.constant 0 : i32
    %c0_i32_0 = arith.constant 0 : i32
    %c0_i32_1 = arith.constant 0 : i32
    return %arg0, %c0_i32, %c0_i32_0 : i32, i32, i32
  }
  func.func @transform_18(%arg0: i32) -> (i32, i32, i32) {
    %c0_i32 = arith.constant 0 : i32
    %c0_i32_0 = arith.constant 0 : i32
    %c0_i32_1 = arith.constant 0 : i32
    return %arg0, %c0_i32, %c0_i32_0 : i32, i32, i32
  }
  func.func @transform_19(%arg0: i32) -> (i32, i32, i32) {
    %c0_i32 = arith.constant 0 : i32
    %c0_i32_0 = arith.constant 0 : i32
    %c0_i32_1 = arith.constant 0 : i32
    return %arg0, %c0_i32, %c0_i32_0 : i32, i32, i32
  }
}

</mosaic_0001>

<llo_original>
// kernel: net_forward.1
$region0: #{net_forward.1}
  #allocation0 [shape = 'u32[]', space=smem, size = 0x4, offset = 0x4, fixed_abs, tag = 'smem constant byte address 0x4 - core index']
  #allocation1 [shape = 'u32[144,128]{1,0:T(1,128)}', space=vmem, size = 0x12000, scoped, tag = 'internal scratch']
  %s0 = inlined_call_operand.vmem [shape: f32[4,16,16], index: 0, kind: input, shape index: {}]
  %s1 = inlined_call_operand.vmem [shape: f32[4,16,5], index: 1, kind: input, shape index: {}]
  %s2 = inlined_call_operand.vmem [shape: f32[5,64], index: 2, kind: input, shape index: {}]
  %s3 = inlined_call_operand.vmem [shape: f32[1,64], index: 3, kind: input, shape index: {}]
  %s4 = inlined_call_operand.vmem [shape: f32[64,48], index: 4, kind: input, shape index: {}]
  %s5 = inlined_call_operand.vmem [shape: f32[1,48], index: 5, kind: input, shape index: {}]
  %s6 = inlined_call_operand.vmem [shape: f32[48,32], index: 6, kind: input, shape index: {}]
  %s7 = inlined_call_operand.vmem [shape: f32[1,32], index: 7, kind: input, shape index: {}]
  %s8 = inlined_call_operand.vmem [shape: f32[64,1], index: 8, kind: input, shape index: {}]
  %s9 = inlined_call_operand.vmem [shape: f32[48,1], index: 9, kind: input, shape index: {}]
  %s10 = inlined_call_operand.vmem [shape: f32[32,1], index: 10, kind: input, shape index: {}]
  %s11 = inlined_call_operand.vmem [shape: f32[32,48], index: 11, kind: input, shape index: {}]
  %s12 = inlined_call_operand.vmem [shape: f32[1,48], index: 12, kind: input, shape index: {}]
  %s13 = inlined_call_operand.vmem [shape: f32[48,64], index: 13, kind: input, shape index: {}]
  %s14 = inlined_call_operand.vmem [shape: f32[1,64], index: 14, kind: input, shape index: {}]
  %s15 = inlined_call_operand.vmem [shape: f32[64,5], index: 15, kind: input, shape index: {}]
  %s16 = inlined_call_operand.vmem [shape: f32[1,5], index: 16, kind: input, shape index: {}]
  %s17 = inlined_call_operand.vmem [shape: f32[4,16,5], index: 17, kind: output, shape index: {0}]
  %s18 = inlined_call_operand.vmem [shape: f32[4,9,32], index: 18, kind: output, shape index: {1}]
  %s19 = inlined_call_operand.vmem [shape: f32[4,9,9], index: 19, kind: output, shape index: {2}]
  %20 = xla_tuple %s17, %s18, %s19
  %s21 = sld [smem:[#allocation0]]
  $region117: #{net_forward.1} parent=0
    _
  %s23 = ssub.s32 1, %s21
  %s24 = scalar_select 0, %s23, %s21
  loop: start=0, step=1, limit=6
  $region2: #{net_forward.1} parent=0 // loop_pre_header
    _
  $region3: #{net_forward.1} parent=0 // loop_header
    %s26 = sphi 0, %s30
    %p27 = scmp.ge.s32.totalorder %s26, 6
    %s36 = sphi 0, %s38
    %s39 = sphi 0, %s36
    %s40 = sphi 0, %s39
    %s56 = sphi 0, %s40
    %s62 = sphi 0, %s64
    %s65 = sphi 0, %s62
    %s66 = sphi 0, %s65
    %s82 = sphi 0, %s66
    %s86 = sphi 0, %s86
    %s88 = sphi 0, %s86
    %s89 = sphi 0, %s88
    %s103 = sphi 0, %s89
    %s107 = sphi 0, %s107
    %s109 = sphi 0, %s107
    %s110 = sphi 0, %s109
    %s124 = sphi 0, %s110
    %s128 = sphi 0, %s128
    %s130 = sphi 0, %s128
    %s131 = sphi 0, %s130
    %s145 = sphi 0, %s131
    %s149 = sphi 0, %s149
    %s151 = sphi 0, %s149
    %s152 = sphi 0, %s151
    %s166 = sphi 0, %s152
    %s170 = sphi 0, %s170
    %s172 = sphi 0, %s170
    %s173 = sphi 0, %s172
    %s187 = sphi 0, %s173
    %s191 = sphi 0, %s191
    %s193 = sphi 0, %s191
    %s194 = sphi 0, %s193
    %s208 = sphi 0, %s194
    %s212 = sphi 0, %s212
    %s214 = sphi 0, %s212
    %s215 = sphi 0, %s214
    %s229 = sphi 0, %s215
    %s233 = sphi 0, %s233
    %s235 = sphi 0, %s233
    %s236 = sphi 0, %s235
    %s250 = sphi 0, %s236
    %s254 = sphi 0, %s254
    %s256 = sphi 0, %s254
    %s257 = sphi 0, %s256
    %s271 = sphi 0, %s257
    %s275 = sphi 0, %s275
    %s277 = sphi 0, %s275
    %s278 = sphi 0, %s277
    %s292 = sphi 0, %s278
    %s296 = sphi 0, %s296
    %s298 = sphi 0, %s296
    %s299 = sphi 0, %s298
    %s313 = sphi 0, %s299
    %s317 = sphi 0, %s317
    %s319 = sphi 0, %s317
    %s320 = sphi 0, %s319
    %s334 = sphi 0, %s320
    %s338 = sphi 0, %s338
    %s340 = sphi 0, %s338
    %s341 = sphi 0, %s340
    %s355 = sphi 0, %s341
    %s359 = sphi 0, %s359
    %s361 = sphi 0, %s359
    %s362 = sphi 0, %s361
    %s376 = sphi 0, %s362
    %s380 = sphi 0, %s380
    %s382 = sphi 0, %s380
    %s383 = sphi 0, %s382
    %s397 = sphi 0, %s383
    %s403 = sphi 0, %s405
    %s406 = sphi 0, %s403
    %s407 = sphi 0, %s406
    %s423 = sphi 0, %s407
    %s429 = sphi 0, %s431
    %s432 = sphi 0, %s429
    %s433 = sphi 0, %s432
    %s449 = sphi 0, %s433
    %s455 = sphi 0, %s457
    %s458 = sphi 0, %s455
    %s459 = sphi 0, %s458
    %s475 = sphi 0, %s459
  $region4: #{net_forward.1} parent=0 // loop_header_branch
    %29 = sbr.rel (%p27) target = $region8
  $region5: #{net_forward.1} parent=0 // loop_body
    %s31 = ssub.s32 %s26, 1
    %s32 = ssub.s32 %s26, 2
    %s33 = sadd.s32 %s26, 1
    %s34 = ssub.s32 %s26, %s33
    %p35 = scmp.eq.s32.totalorder %s34, 0
    %s37 = sadd.s32 %s36, 1
    %s38 = scalar_select %p35, %s36, %s37
    %p41 = pneg %p35
    %p42 = scmp.eq.s32.totalorder %s26, 3
    %p43 = por %p41, %p42
    %p44 = scmp.ne.s32.totalorder %s36, %s39
    %p45 = scmp.eq.s32.totalorder %s26, 0
    %p46 = por %p44, %p45
    %p47 = scmp.ne.s32.totalorder %s36, %s39
    %p48 = scmp.eq.s32.totalorder %s31, 3
    %p49 = por %p47, %p48
    %p50 = scmp.ne.s32.totalorder %s39, %s40
    %p51 = scmp.eq.s32.totalorder %s31, 0
    %p52 = por %p50, %p51
    %p53 = scmp.ne.s32.totalorder %s39, %s40
    %p54 = scmp.eq.s32.totalorder %s32, 3
    %p55 = por %p53, %p54
    %p57 = scmp.ne.s32.totalorder %s40, %s56
    %p58 = scmp.eq.s32.totalorder %s32, 0
    %p59 = por %p57, %p58
    %s60 = ssub.s32 %s26, %s33
    %p61 = scmp.eq.s32.totalorder %s60, 0
    %s63 = sadd.s32 %s62, 1
    %s64 = scalar_select %p61, %s62, %s63
    %p67 = pneg %p61
    %p68 = scmp.eq.s32.totalorder %s26, 3
    %p69 = por %p67, %p68
    %p70 = scmp.ne.s32.totalorder %s62, %s65
    %p71 = scmp.eq.s32.totalorder %s26, 0
    %p72 = por %p70, %p71
    %p73 = scmp.ne.s32.totalorder %s62, %s65
    %p74 = scmp.eq.s32.totalorder %s31, 3
    %p75 = por %p73, %p74
    %p76 = scmp.ne.s32.totalorder %s65, %s66
    %p77 = scmp.eq.s32.totalorder %s31, 0
    %p78 = por %p76, %p77
    %p79 = scmp.ne.s32.totalorder %s65, %s66
    %p80 = scmp.eq.s32.totalorder %s32, 3
    %p81 = por %p79, %p80
    %p83 = scmp.ne.s32.totalorder %s66, %s82
    %p84 = scmp.eq.s32.totalorder %s32, 0
    %p85 = por %p83, %p84
    %s87 = sadd.s32 %s86, 1
    %p90 = scmp.eq.s32.totalorder %s26, 3
    %p91 = scmp.ne.s32.totalorder %s86, %s88
    %p92 = scmp.eq.s32.totalorder %s26, 0
    %p93 = por %p91, %p92
    %p94 = scmp.ne.s32.totalorder %s86, %s88
    %p95 = scmp.eq.s32.totalorder %s31, 3
    %p96 = por %p94, %p95
    %p97 = scmp.ne.s32.totalorder %s88, %s89
    %p98 = scmp.eq.s32.totalorder %s31, 0
    %p99 = por %p97, %p98
    %p100 = scmp.ne.s32.totalorder %s88, %s89
    %p101 = scmp.eq.s32.totalorder %s32, 3
    %p102 = por %p100, %p101
    %p104 = scmp.ne.s32.totalorder %s89, %s103
    %p105 = scmp.eq.s32.totalorder %s32, 0
    %p106 = por %p104, %p105
    %s108 = sadd.s32 %s107, 1
    %p111 = scmp.eq.s32.totalorder %s26, 3
    %p112 = scmp.ne.s32.totalorder %s107, %s109
    %p113 = scmp.eq.s32.totalorder %s26, 0
    %p114 = por %p112, %p113
    %p115 = scmp.ne.s32.totalorder %s107, %s109
    %p116 = scmp.eq.s32.totalorder %s31, 3
    %p117 = por %p115, %p116
    %p118 = scmp.ne.s32.totalorder %s109, %s110
    %p119 = scmp.eq.s32.totalorder %s31, 0
    %p120 = por %p118, %p119
    %p121 = scmp.ne.s32.totalorder %s109, %s110
    %p122 = scmp.eq.s32.totalorder %s32, 3
    %p123 = por %p121, %p122
    %p125 = scmp.ne.s32.totalorder %s110, %s124
    %p126 = scmp.eq.s32.totalorder %s32, 0
    %p127 = por %p125, %p126
    %s129 = sadd.s32 %s128, 1
    %p132 = scmp.eq.s32.totalorder %s26, 3
    %p133 = scmp.ne.s32.totalorder %s128, %s130
    %p134 = scmp.eq.s32.totalorder %s26, 0
    %p135 = por %p133, %p134
    %p136 = scmp.ne.s32.totalorder %s128, %s130
    %p137 = scmp.eq.s32.totalorder %s31, 3
    %p138 = por %p136, %p137
    %p139 = scmp.ne.s32.totalorder %s130, %s131
    %p140 = scmp.eq.s32.totalorder %s31, 0
    %p141 = por %p139, %p140
    %p142 = scmp.ne.s32.totalorder %s130, %s131
    %p143 = scmp.eq.s32.totalorder %s32, 3
    %p144 = por %p142, %p143
    %p146 = scmp.ne.s32.totalorder %s131, %s145
    %p147 = scmp.eq.s32.totalorder %s32, 0
    %p148 = por %p146, %p147
    %s150 = sadd.s32 %s149, 1
    %p153 = scmp.eq.s32.totalorder %s26, 3
    %p154 = scmp.ne.s32.totalorder %s149, %s151
    %p155 = scmp.eq.s32.totalorder %s26, 0
    %p156 = por %p154, %p155
    %p157 = scmp.ne.s32.totalorder %s149, %s151
    %p158 = scmp.eq.s32.totalorder %s31, 3
    %p159 = por %p157, %p158
    %p160 = scmp.ne.s32.totalorder %s151, %s152
    %p161 = scmp.eq.s32.totalorder %s31, 0
    %p162 = por %p160, %p161
    %p163 = scmp.ne.s32.totalorder %s151, %s152
    %p164 = scmp.eq.s32.totalorder %s32, 3
    %p165 = por %p163, %p164
    %p167 = scmp.ne.s32.totalorder %s152, %s166
    %p168 = scmp.eq.s32.totalorder %s32, 0
    %p169 = por %p167, %p168
    %s171 = sadd.s32 %s170, 1
    %p174 = scmp.eq.s32.totalorder %s26, 3
    %p175 = scmp.ne.s32.totalorder %s170, %s172
    %p176 = scmp.eq.s32.totalorder %s26, 0
    %p177 = por %p175, %p176
    %p178 = scmp.ne.s32.totalorder %s170, %s172
    %p179 = scmp.eq.s32.totalorder %s31, 3
    %p180 = por %p178, %p179
    %p181 = scmp.ne.s32.totalorder %s172, %s173
    %p182 = scmp.eq.s32.totalorder %s31, 0
    %p183 = por %p181, %p182
    %p184 = scmp.ne.s32.totalorder %s172, %s173
    %p185 = scmp.eq.s32.totalorder %s32, 3
    %p186 = por %p184, %p185
    %p188 = scmp.ne.s32.totalorder %s173, %s187
    %p189 = scmp.eq.s32.totalorder %s32, 0
    %p190 = por %p188, %p189
    %s192 = sadd.s32 %s191, 1
    %p195 = scmp.eq.s32.totalorder %s26, 3
    %p196 = scmp.ne.s32.totalorder %s191, %s193
    %p197 = scmp.eq.s32.totalorder %s26, 0
    %p198 = por %p196, %p197
    %p199 = scmp.ne.s32.totalorder %s191, %s193
    %p200 = scmp.eq.s32.totalorder %s31, 3
    %p201 = por %p199, %p200
    %p202 = scmp.ne.s32.totalorder %s193, %s194
    %p203 = scmp.eq.s32.totalorder %s31, 0
    %p204 = por %p202, %p203
    %p205 = scmp.ne.s32.totalorder %s193, %s194
    %p206 = scmp.eq.s32.totalorder %s32, 3
    %p207 = por %p205, %p206
    %p209 = scmp.ne.s32.totalorder %s194, %s208
    %p210 = scmp.eq.s32.totalorder %s32, 0
    %p211 = por %p209, %p210
    %s213 = sadd.s32 %s212, 1
    %p216 = scmp.eq.s32.totalorder %s26, 3
    %p217 = scmp.ne.s32.totalorder %s212, %s214
    %p218 = scmp.eq.s32.totalorder %s26, 0
    %p219 = por %p217, %p218
    %p220 = scmp.ne.s32.totalorder %s212, %s214
    %p221 = scmp.eq.s32.totalorder %s31, 3
    %p222 = por %p220, %p221
    %p223 = scmp.ne.s32.totalorder %s214, %s215
    %p224 = scmp.eq.s32.totalorder %s31, 0
    %p225 = por %p223, %p224
    %p226 = scmp.ne.s32.totalorder %s214, %s215
    %p227 = scmp.eq.s32.totalorder %s32, 3
    %p228 = por %p226, %p227
    %p230 = scmp.ne.s32.totalorder %s215, %s229
    %p231 = scmp.eq.s32.totalorder %s32, 0
    %p232 = por %p230, %p231
    %s234 = sadd.s32 %s233, 1
    %p237 = scmp.eq.s32.totalorder %s26, 3
    %p238 = scmp.ne.s32.totalorder %s233, %s235
    %p239 = scmp.eq.s32.totalorder %s26, 0
    %p240 = por %p238, %p239
    %p241 = scmp.ne.s32.totalorder %s233, %s235
    %p242 = scmp.eq.s32.totalorder %s31, 3
    %p243 = por %p241, %p242
    %p244 = scmp.ne.s32.totalorder %s235, %s236
    %p245 = scmp.eq.s32.totalorder %s31, 0
    %p246 = por %p244, %p245
    %p247 = scmp.ne.s32.totalorder %s235, %s236
    %p248 = scmp.eq.s32.totalorder %s32, 3
    %p249 = por %p247, %p248
    %p251 = scmp.ne.s32.totalorder %s236, %s250
    %p252 = scmp.eq.s32.totalorder %s32, 0
    %p253 = por %p251, %p252
    %s255 = sadd.s32 %s254, 1
    %p258 = scmp.eq.s32.totalorder %s26, 3
    %p259 = scmp.ne.s32.totalorder %s254, %s256
    %p260 = scmp.eq.s32.totalorder %s26, 0
    %p261 = por %p259, %p260
    %p262 = scmp.ne.s32.totalorder %s254, %s256
    %p263 = scmp.eq.s32.totalorder %s31, 3
    %p264 = por %p262, %p263
    %p265 = scmp.ne.s32.totalorder %s256, %s257
    %p266 = scmp.eq.s32.totalorder %s31, 0
    %p267 = por %p265, %p266
    %p268 = scmp.ne.s32.totalorder %s256, %s257
    %p269 = scmp.eq.s32.totalorder %s32, 3
    %p270 = por %p268, %p269
    %p272 = scmp.ne.s32.totalorder %s257, %s271
    %p273 = scmp.eq.s32.totalorder %s32, 0
    %p274 = por %p272, %p273
    %s276 = sadd.s32 %s275, 1
    %p279 = scmp.eq.s32.totalorder %s26, 3
    %p280 = scmp.ne.s32.totalorder %s275, %s277
    %p281 = scmp.eq.s32.totalorder %s26, 0
    %p282 = por %p280, %p281
    %p283 = scmp.ne.s32.totalorder %s275, %s277
    %p284 = scmp.eq.s32.totalorder %s31, 3
    %p285 = por %p283, %p284
    %p286 = scmp.ne.s32.totalorder %s277, %s278
    %p287 = scmp.eq.s32.totalorder %s31, 0
    %p288 = por %p286, %p287
    %p289 = scmp.ne.s32.totalorder %s277, %s278
    %p290 = scmp.eq.s32.totalorder %s32, 3
    %p291 = por %p289, %p290
    %p293 = scmp.ne.s32.totalorder %s278, %s292
    %p294 = scmp.eq.s32.totalorder %s32, 0
    %p295 = por %p293, %p294
    %s297 = sadd.s32 %s296, 1
    %p300 = scmp.eq.s32.totalorder %s26, 3
    %p301 = scmp.ne.s32.totalorder %s296, %s298
    %p302 = scmp.eq.s32.totalorder %s26, 0
    %p303 = por %p301, %p302
    %p304 = scmp.ne.s32.totalorder %s296, %s298
    %p305 = scmp.eq.s32.totalorder %s31, 3
    %p306 = por %p304, %p305
    %p307 = scmp.ne.s32.totalorder %s298, %s299
    %p308 = scmp.eq.s32.totalorder %s31, 0
    %p309 = por %p307, %p308
    %p310 = scmp.ne.s32.totalorder %s298, %s299
    %p311 = scmp.eq.s32.totalorder %s32, 3
    %p312 = por %p310, %p311
    %p314 = scmp.ne.s32.totalorder %s299, %s313
    %p315 = scmp.eq.s32.totalorder %s32, 0
    %p316 = por %p314, %p315
    %s318 = sadd.s32 %s317, 1
    %p321 = scmp.eq.s32.totalorder %s26, 3
    %p322 = scmp.ne.s32.totalorder %s317, %s319
    %p323 = scmp.eq.s32.totalorder %s26, 0
    %p324 = por %p322, %p323
    %p325 = scmp.ne.s32.totalorder %s317, %s319
    %p326 = scmp.eq.s32.totalorder %s31, 3
    %p327 = por %p325, %p326
    %p328 = scmp.ne.s32.totalorder %s319, %s320
    %p329 = scmp.eq.s32.totalorder %s31, 0
    %p330 = por %p328, %p329
    %p331 = scmp.ne.s32.totalorder %s319, %s320
    %p332 = scmp.eq.s32.totalorder %s32, 3
    %p333 = por %p331, %p332
    %p335 = scmp.ne.s32.totalorder %s320, %s334
    %p336 = scmp.eq.s32.totalorder %s32, 0
    %p337 = por %p335, %p336
    %s339 = sadd.s32 %s338, 1
    %p342 = scmp.eq.s32.totalorder %s26, 3
    %p343 = scmp.ne.s32.totalorder %s338, %s340
    %p344 = scmp.eq.s32.totalorder %s26, 0
    %p345 = por %p343, %p344
    %p346 = scmp.ne.s32.totalorder %s338, %s340
    %p347 = scmp.eq.s32.totalorder %s31, 3
    %p348 = por %p346, %p347
    %p349 = scmp.ne.s32.totalorder %s340, %s341
    %p350 = scmp.eq.s32.totalorder %s31, 0
    %p351 = por %p349, %p350
    %p352 = scmp.ne.s32.totalorder %s340, %s341
    %p353 = scmp.eq.s32.totalorder %s32, 3
    %p354 = por %p352, %p353
    %p356 = scmp.ne.s32.totalorder %s341, %s355
    %p357 = scmp.eq.s32.totalorder %s32, 0
    %p358 = por %p356, %p357
    %s360 = sadd.s32 %s359, 1
    %p363 = scmp.eq.s32.totalorder %s26, 3
    %p364 = scmp.ne.s32.totalorder %s359, %s361
    %p365 = scmp.eq.s32.totalorder %s26, 0
    %p366 = por %p364, %p365
    %p367 = scmp.ne.s32.totalorder %s359, %s361
    %p368 = scmp.eq.s32.totalorder %s31, 3
    %p369 = por %p367, %p368
    %p370 = scmp.ne.s32.totalorder %s361, %s362
    %p371 = scmp.eq.s32.totalorder %s31, 0
    %p372 = por %p370, %p371
    %p373 = scmp.ne.s32.totalorder %s361, %s362
    %p374 = scmp.eq.s32.totalorder %s32, 3
    %p375 = por %p373, %p374
    %p377 = scmp.ne.s32.totalorder %s362, %s376
    %p378 = scmp.eq.s32.totalorder %s32, 0
    %p379 = por %p377, %p378
    %s381 = sadd.s32 %s380, 1
    %p384 = scmp.eq.s32.totalorder %s26, 3
    %p385 = scmp.ne.s32.totalorder %s380, %s382
    %p386 = scmp.eq.s32.totalorder %s26, 0
    %p387 = por %p385, %p386
    %p388 = scmp.ne.s32.totalorder %s380, %s382
    %p389 = scmp.eq.s32.totalorder %s31, 3
    %p390 = por %p388, %p389
    %p391 = scmp.ne.s32.totalorder %s382, %s383
    %p392 = scmp.eq.s32.totalorder %s31, 0
    %p393 = por %p391, %p392
    %p394 = scmp.ne.s32.totalorder %s382, %s383
    %p395 = scmp.eq.s32.totalorder %s32, 3
    %p396 = por %p394, %p395
    %p398 = scmp.ne.s32.totalorder %s383, %s397
    %p399 = scmp.eq.s32.totalorder %s32, 0
    %p400 = por %p398, %p399
    %s401 = ssub.s32 %s26, %s33
    %p402 = scmp.eq.s32.totalorder %s401, 0
    %s404 = sadd.s32 %s403, 1
    %s405 = scalar_select %p402, %s403, %s404
    %p408 = pneg %p402
    %p409 = scmp.eq.s32.totalorder %s26, 3
    %p410 = por %p408, %p409
    %p411 = scmp.ne.s32.totalorder %s403, %s406
    %p412 = scmp.eq.s32.totalorder %s26, 0
    %p413 = por %p411, %p412
    %p414 = scmp.ne.s32.totalorder %s403, %s406
    %p415 = scmp.eq.s32.totalorder %s31, 3
    %p416 = por %p414, %p415
    %p417 = scmp.ne.s32.totalorder %s406, %s407
    %p418 = scmp.eq.s32.totalorder %s31, 0
    %p419 = por %p417, %p418
    %p420 = scmp.ne.s32.totalorder %s406, %s407
    %p421 = scmp.eq.s32.totalorder %s32, 3
    %p422 = por %p420, %p421
    %p424 = scmp.ne.s32.totalorder %s407, %s423
    %p425 = scmp.eq.s32.totalorder %s32, 0
    %p426 = por %p424, %p425
    %s427 = ssub.s32 %s26, %s33
    %p428 = scmp.eq.s32.totalorder %s427, 0
    %s430 = sadd.s32 %s429, 1
    %s431 = scalar_select %p428, %s429, %s430
    %p434 = pneg %p428
    %p435 = scmp.eq.s32.totalorder %s26, 3
    %p436 = por %p434, %p435
    %p437 = scmp.ne.s32.totalorder %s429, %s432
    %p438 = scmp.eq.s32.totalorder %s26, 0
    %p439 = por %p437, %p438
    %p440 = scmp.ne.s32.totalorder %s429, %s432
    %p441 = scmp.eq.s32.totalorder %s31, 3
    %p442 = por %p440, %p441
    %p443 = scmp.ne.s32.totalorder %s432, %s433
    %p444 = scmp.eq.s32.totalorder %s31, 0
    %p445 = por %p443, %p444
    %p446 = scmp.ne.s32.totalorder %s432, %s433
    %p447 = scmp.eq.s32.totalorder %s32, 3
    %p448 = por %p446, %p447
    %p450 = scmp.ne.s32.totalorder %s433, %s449
    %p451 = scmp.eq.s32.totalorder %s32, 0
    %p452 = por %p450, %p451
    %s453 = ssub.s32 %s26, %s33
    %p454 = scmp.eq.s32.totalorder %s453, 0
    %s456 = sadd.s32 %s455, 1
    %s457 = scalar_select %p454, %s455, %s456
    %p460 = pneg %p454
    %p461 = scmp.eq.s32.totalorder %s26, 3
    %p462 = por %p460, %p461
    %p463 = scmp.ne.s32.totalorder %s455, %s458
    %p464 = scmp.eq.s32.totalorder %s26, 0
    %p465 = por %p463, %p464
    %p466 = scmp.ne.s32.totalorder %s455, %s458
    %p467 = scmp.eq.s32.totalorder %s31, 3
    %p468 = por %p466, %p467
    %p469 = scmp.ne.s32.totalorder %s458, %s459
    %p470 = scmp.eq.s32.totalorder %s31, 0
    %p471 = por %p469, %p470
    %p472 = scmp.ne.s32.totalorder %s458, %s459
    %p473 = scmp.eq.s32.totalorder %s32, 3
    %p474 = por %p472, %p473
    %p476 = scmp.ne.s32.totalorder %s459, %s475
    %p477 = scmp.eq.s32.totalorder %s32, 0
    %p478 = por %p476, %p477
    %p479 = scmp.le.s32.totalorder 1, %s26
    %p480 = scmp.lt.s32.totalorder %s26, 5
    %p481 = pnand %p479, %p480
    %p482 = pneg %p481
    // Predicated region
    $region9: #{net_forward.1} parent=5 // pred_check
      _
    $region10: #{net_forward.1} parent=5 // pred_check_branch
      %484 = sbr.rel (%p481) target = $region12
    $region11: #{net_forward.1} parent=5 // pred_region
      %s485 = ssub.s32 %s26, 1
      // Predicated region
      $region13: #{net_forward.1} parent=11 // pred_check
        %p486 = pneg %p99
      $region14: #{net_forward.1} parent=11 // pred_check_branch
        %488 = sbr.rel (%p486) target = $region16
      $region15: #{net_forward.1} parent=11 // pred_region
        _
      $region16: #{net_forward.1} parent=11 // pred_fallthru
        _
      // Predicated region
      $region17: #{net_forward.1} parent=11 // pred_check
        %p489 = pneg %p120
      $region18: #{net_forward.1} parent=11 // pred_check_branch
        %491 = sbr.rel (%p489) target = $region20
      $region19: #{net_forward.1} parent=11 // pred_region
        _
      $region20: #{net_forward.1} parent=11 // pred_fallthru
        _
      // Predicated region
      $region21: #{net_forward.1} parent=11 // pred_check
        %p492 = pneg %p141
      $region22: #{net_forward.1} parent=11 // pred_check_branch
        %494 = sbr.rel (%p492) target = $region24
      $region23: #{net_forward.1} parent=11 // pred_region
        _
      $region24: #{net_forward.1} parent=11 // pred_fallthru
        _
      // Predicated region
      $region25: #{net_forward.1} parent=11 // pred_check
        %p495 = pneg %p162
      $region26: #{net_forward.1} parent=11 // pred_check_branch
        %497 = sbr.rel (%p495) target = $region28
      $region27: #{net_forward.1} parent=11 // pred_region
        _
      $region28: #{net_forward.1} parent=11 // pred_fallthru
        _
      // Predicated region
      $region29: #{net_forward.1} parent=11 // pred_check
        %p498 = pneg %p183
      $region30: #{net_forward.1} parent=11 // pred_check_branch
        %500 = sbr.rel (%p498) target = $region32
      $region31: #{net_forward.1} parent=11 // pred_region
        _
      $region32: #{net_forward.1} parent=11 // pred_fallthru
        _
      // Predicated region
      $region33: #{net_forward.1} parent=11 // pred_check
        %p501 = pneg %p204
      $region34: #{net_forward.1} parent=11 // pred_check_branch
        %503 = sbr.rel (%p501) target = $region36
      $region35: #{net_forward.1} parent=11 // pred_region
        _
      $region36: #{net_forward.1} parent=11 // pred_fallthru
        _
      // Predicated region
      $region37: #{net_forward.1} parent=11 // pred_check
        %p504 = pneg %p225
      $region38: #{net_forward.1} parent=11 // pred_check_branch
        %506 = sbr.rel (%p504) target = $region40
      $region39: #{net_forward.1} parent=11 // pred_region
        _
      $region40: #{net_forward.1} parent=11 // pred_fallthru
        _
      // Predicated region
      $region41: #{net_forward.1} parent=11 // pred_check
        %p507 = pneg %p246
      $region42: #{net_forward.1} parent=11 // pred_check_branch
        %509 = sbr.rel (%p507) target = $region44
      $region43: #{net_forward.1} parent=11 // pred_region
        _
      $region44: #{net_forward.1} parent=11 // pred_fallthru
        _
      // Predicated region
      $region45: #{net_forward.1} parent=11 // pred_check
        %p510 = pneg %p267
      $region46: #{net_forward.1} parent=11 // pred_check_branch
        %512 = sbr.rel (%p510) target = $region48
      $region47: #{net_forward.1} parent=11 // pred_region
        _
      $region48: #{net_forward.1} parent=11 // pred_fallthru
        _
      // Predicated region
      $region49: #{net_forward.1} parent=11 // pred_check
        %p513 = pneg %p288
      $region50: #{net_forward.1} parent=11 // pred_check_branch
        %515 = sbr.rel (%p513) target = $region52
      $region51: #{net_forward.1} parent=11 // pred_region
        _
      $region52: #{net_forward.1} parent=11 // pred_fallthru
        _
      // Predicated region
      $region53: #{net_forward.1} parent=11 // pred_check
        %p516 = pneg %p309
      $region54: #{net_forward.1} parent=11 // pred_check_branch
        %518 = sbr.rel (%p516) target = $region56
      $region55: #{net_forward.1} parent=11 // pred_region
        _
      $region56: #{net_forward.1} parent=11 // pred_fallthru
        _
      // Predicated region
      $region57: #{net_forward.1} parent=11 // pred_check
        %p519 = pneg %p330
      $region58: #{net_forward.1} parent=11 // pred_check_branch
        %521 = sbr.rel (%p519) target = $region60
      $region59: #{net_forward.1} parent=11 // pred_region
        _
      $region60: #{net_forward.1} parent=11 // pred_fallthru
        _
      // Predicated region
      $region61: #{net_forward.1} parent=11 // pred_check
        %p522 = pneg %p351
      $region62: #{net_forward.1} parent=11 // pred_check_branch
        %524 = sbr.rel (%p522) target = $region64
      $region63: #{net_forward.1} parent=11 // pred_region
        _
      $region64: #{net_forward.1} parent=11 // pred_fallthru
        _
      // Predicated region
      $region65: #{net_forward.1} parent=11 // pred_check
        %p525 = pneg %p372
      $region66: #{net_forward.1} parent=11 // pred_check_branch
        %527 = sbr.rel (%p525) target = $region68
      $region67: #{net_forward.1} parent=11 // pred_region
        _
      $region68: #{net_forward.1} parent=11 // pred_fallthru
        _
      // Predicated region
      $region69: #{net_forward.1} parent=11 // pred_check
        %p528 = pneg %p393
      $region70: #{net_forward.1} parent=11 // pred_check_branch
        %530 = sbr.rel (%p528) target = $region72
      $region71: #{net_forward.1} parent=11 // pred_region
        _
      $region72: #{net_forward.1} parent=11 // pred_fallthru
        _
    $region12: #{net_forward.1} parent=5 // pred_fallthru
      _
    %p531 = scmp.lt.s32.totalorder %s26, 4
    // Predicated region
    $region73: #{net_forward.1} parent=5 // pred_check
      %p532 = pneg %p531
    $region74: #{net_forward.1} parent=5 // pred_check_branch
      %534 = sbr.rel (%p532) target = $region76
    $region75: #{net_forward.1} parent=5 // pred_region
      // Predicated region
      $region77: #{net_forward.1} parent=75 // pred_check
        %p535 = pneg %p46
      $region78: #{net_forward.1} parent=75 // pred_check_branch
        %537 = sbr.rel (%p535) target = $region80
      $region79: #{net_forward.1} parent=75 // pred_region
        %p538 = scmp.lt.s32.totalorder %s26, 3
        %s539 = scalar_select %p538, %s26, 3
        %s540 = smul.addr %s539, 2
        %s541 = smul.addr %s540, 8
        %s542 = scalar_lea.vmem %s0, %s541
      $region80: #{net_forward.1} parent=75 // pred_fallthru
        _
      // Predicated region
      $region81: #{net_forward.1} parent=75 // pred_check
        %p543 = pneg %p72
      $region82: #{net_forward.1} parent=75 // pred_check_branch
        %545 = sbr.rel (%p543) target = $region84
      $region83: #{net_forward.1} parent=75 // pred_region
        %p546 = scmp.lt.s32.totalorder %s26, 3
        %s547 = scalar_select %p546, %s26, 3
        %s548 = smul.addr %s547, 2
        %s549 = smul.addr %s548, 8
        %s550 = scalar_lea.vmem %s1, %s549
      $region84: #{net_forward.1} parent=75 // pred_fallthru
        _
    $region76: #{net_forward.1} parent=5 // pred_fallthru
      _
    %p551 = scmp.le.s32.totalorder 1, %s26
    %p552 = scmp.lt.s32.totalorder %s26, 5
    %p553 = pnand %p551, %p552
    %p554 = pneg %p553
    // Predicated region
    $region85: #{net_forward.1} parent=5 // pred_check
      _
    $region86: #{net_forward.1} parent=5 // pred_check_branch
      %556 = sbr.rel (%p553) target = $region88
    $region87: #{net_forward.1} parent=5 // pred_region
      %s557 = ssub.s32 %s26, 1
      %p558 = scmp.lt.s32.totalorder %s31, 3
      %s559 = scalar_select %p558, %s31, 3
      %s560 = smul.addr %s559, 2
      %s561 = smul.addr %s560, 8
      %s562 = scalar_lea.vmem %s0, %s561
      %p563 = pneg %p52
      %p564 = pneg %p49
      %p565 = scmp.lt.s32.totalorder %s31, 3
      %s566 = scalar_select %p565, %s31, 3
      %s567 = smul.addr %s566, 2
      %s568 = smul.addr %s567, 8
      %s569 = scalar_lea.vmem %s1, %s568
      %p570 = pneg %p78
      %p571 = pneg %p75
      %p572 = pneg %p99
      %p573 = pneg %p96
      %p574 = pneg %p120
      %p575 = pneg %p117
      %p576 = pneg %p141
      %p577 = pneg %p138
      %p578 = pneg %p162
      %p579 = pneg %p159
      %p580 = pneg %p183
      %p581 = pneg %p180
      %p582 = pneg %p204
      %p583 = pneg %p201
      %p584 = pneg %p225
      %p585 = pneg %p222
      %p586 = pneg %p246
      %p587 = pneg %p243
      %p588 = pneg %p267
      %p589 = pneg %p264
      %p590 = pneg %p288
      %p591 = pneg %p285
      %p592 = pneg %p309
      %p593 = pneg %p306
      %p594 = pneg %p330
      %p595 = pneg %p327
      %p596 = pneg %p351
      %p597 = pneg %p348
      %p598 = pneg %p372
      %p599 = pneg %p369
      %p600 = pneg %p393
      %p601 = pneg %p390
      %p602 = pneg %p419
      %p603 = pneg %p416
      %p604 = scmp.lt.s32.totalorder %s31, 3
      %s605 = scalar_select %p604, %s31, 3
      %s606 = smul.addr %s605, 2
      %s607 = smul.addr %s606, 8
      %s608 = scalar_lea.vmem %s17, %s607
      %p609 = pneg %p445
      %p610 = pneg %p442
      %p611 = scmp.lt.s32.totalorder %s31, 3
      %s612 = scalar_select %p611, %s31, 3
      %s613 = smul.addr %s612, 2
      %s614 = smul.addr %s613, 8
      %s615 = scalar_lea.vmem %s18, %s614
      %p616 = pneg %p471
      %p617 = pneg %p468
      %p618 = scmp.lt.s32.totalorder %s31, 3
      %s619 = scalar_select %p618, %s31, 3
      %s620 = smul.addr %s619, 2
      %s621 = smul.addr %s620, 8
      %s622 = scalar_lea.vmem %s19, %s621
      %p623 = scmp.lt.s32.totalorder %s31, 3
      %s624 = scalar_select %p623, %s31, 3
      %s625 = smul.addr %s624, 2
      %s626 = smul.addr %s625, 8
      %s627 = scalar_lea.vmem %s0, %s626
      %p628 = scmp.lt.s32.totalorder %s31, 3
      %s629 = scalar_select %p628, %s31, 3
      %s630 = smul.addr %s629, 2
      %s631 = smul.addr %s630, 8
      %s632 = scalar_lea.vmem %s1, %s631
      %p633 = scmp.lt.s32.totalorder %s31, 3
      %s634 = scalar_select %p633, %s31, 3
      %s635 = smul.addr %s634, 2
      %s636 = smul.addr %s635, 8
      %s637 = scalar_lea.vmem %s17, %s636
      %p638 = scmp.lt.s32.totalorder %s31, 3
      %s639 = scalar_select %p638, %s31, 3
      %s640 = smul.addr %s639, 2
      %s641 = smul.addr %s640, 8
      %s642 = scalar_lea.vmem %s18, %s641
      %p643 = scmp.lt.s32.totalorder %s31, 3
      %s644 = scalar_select %p643, %s31, 3
      %s645 = smul.addr %s644, 2
      %s646 = smul.addr %s645, 8
      %s647 = scalar_lea.vmem %s19, %s646
      %v648 = vld [vmem:[%s632] sm:$0xff]
      %v649 = vld [vmem:[%s632 + $0x8] sm:$0xff]
      %v650 = vld [vmem:[%s627] sm:$0xff]
      %v651 = vld [vmem:[%s627 + $0x8] sm:$0xff]
      %vm652 = vcmask 130048
      %v653 = vsel %vm652, %v650, 0.0
      %654 = vadd.xlane.f32.xlu0 %v653
      %v655 = vpop.xlane.xlu0 %654
      %v656 = vsel %vm652, %v651, 0.0
      %657 = vadd.xlane.f32.xlu0 %v656
      %v658 = vpop.xlane.xlu0 %657
      %v659 = vmax.f32 %v655, 1.0
      %v660 = vmax.f32 %v658, 1.0
      %v661 = vrsqrt.pop %v659
      %v662 = vrsqrt.pop %v660
      %v663 = vadd.f32 %v653, %v656
      %v664 = vrot.slane %v663, 4
      %v665 = vadd.f32 %v663, %v664
      %v666 = vrot.slane %v665, 2
      %v667 = vadd.f32 %v665, %v666
      %v668 = vrot.slane %v667, 1
      %v669 = vadd.f32 %v667, %v668
      %v670 = vmax.f32 %v669, 1.0
      %v671 = vrsqrt.pop %v670
      %v672 = vmul.f32 %v661, %v650
      %v673 = vmul.f32 %v662, %v651
      %v674 = vmul.f32 %v672, %v671
      %v675 = vmul.f32 %v673, %v671
      %v677 = vsel %vm652, %v674, 0
      %v680 = vsel %vm652, %v675, 0
      %682 = vmatprep.subr.mxu0 0.0
      %683 = vmatpush1.msra.mxu0 %v674
      %684 = vmatprep.subr.mxu0 0.0
      %685 = vmatpush1.msra.mxu0 %v675
      %686 = vmatprep.subr.mxu0 0.0
      %687 = vmatpush1.msra.mxu0 0.0
      %688 = vmatprep.subr.mxu0 0.0
      %689 = vmatpush1.msra.mxu0 0.0
      %690 = vmatprep.subr.mxu0 0.0
      %691 = vmatpush1.msra.mxu0 0.0
      %692 = vmatprep.subr.mxu0 0.0
      %693 = vmatpush1.msra.mxu0 0.0
      %694 = vmatprep.subr.mxu0 0.0
      %695 = vmatpush1.msra.mxu0 0.0
      %696 = vmatprep.subr.mxu0 0.0
      %697 = vmatpush1.msra.mxu0 0.0
      %698 = vmatprep.subr.mxu0 0.0
      %699 = vmatpush1.msra.mxu0 0.0
      %700 = vmatprep.subr.mxu0 0.0
      %701 = vmatpush1.msra.mxu0 0.0
      %702 = vmatprep.subr.mxu0 0.0
      %703 = vmatpush1.msra.mxu0 0.0
      %704 = vmatprep.subr.mxu0 0.0
      %705 = vmatpush1.msra.mxu0 0.0
      %706 = vmatprep.subr.mxu0 0.0
      %707 = vmatpush1.msra.mxu0 0.0
      %708 = vmatprep.subr.mxu0 0.0
      %709 = vmatpush1.msra.mxu0 0.0
      %710 = vmatprep.subr.mxu0 0.0
      %711 = vmatpush1.msra.mxu0 0.0
      %712 = vmatprep.subr.mxu0 0.0
      %713 = vmatpush1.msra.mxu0 0.0
      %714 = vmatprep.subr.mxu0 0.0
      %715 = vmatpush1.msra.mxu0 0.0
      %716 = vmatprep.subr.mxu0 0.0
      %717 = vmatpush1.msra.mxu0 0.0
      %718 = vmatprep.subr.mxu0 0.0
      %719 = vmatpush1.msra.mxu0 0.0
      %720 = vmatprep.subr.mxu0 0.0
      %721 = vmatpush1.msra.mxu0 0.0
      %722 = vmatprep.subr.mxu0 0.0
      %723 = vmatpush1.msra.mxu0 0.0
      %724 = vmatprep.subr.mxu0 0.0
      %725 = vmatpush1.msra.mxu0 0.0
      %726 = vmatprep.subr.mxu0 0.0
      %727 = vmatpush1.msra.mxu0 0.0
      %728 = vmatprep.subr.mxu0 0.0
      %729 = vmatpush1.msra.mxu0 0.0
      %730 = vmatprep.subr.mxu0 0.0
      %731 = vmatpush1.msra.mxu0 0.0
      %732 = vmatprep.subr.mxu0 0.0
      %733 = vmatpush1.msra.mxu0 0.0
      %734 = vmatprep.subr.mxu0 0.0
      %735 = vmatpush1.msra.mxu0 0.0
      %736 = vmatprep.subr.mxu0 0.0
      %737 = vmatpush1.msra.mxu0 0.0
      %738 = vmatprep.subr.mxu0 0.0
      %739 = vmatpush1.msra.mxu0 0.0
      %740 = vmatprep.subr.mxu0 0.0
      %741 = vmatpush1.msra.mxu0 0.0
      %742 = vmatprep.subr.mxu0 0.0
      %743 = vmatpush1.msra.mxu0 0.0
      %744 = vmatprep.subr.mxu0 0.0
      %745 = vmatpush1.msra.mxu0 0.0
      %746 = vmatprep.mubr.f32.mxu0 0.0
      %747 = vmatmul.mubr.f32.gmra.mrb[0].mxu0 %v677
      %v748 = vpop.f32.mrb[0].mxu0
      %v749 = vadd.f32 0.0, %v748
      %v750 = vpop.f32.mrb[0].mxu0
      %751 = vmatprep.mubr.f32.mxu0 0.0
      %752 = vmatmul.mubr.f32.gmra.mrb[0].mxu0 %v680
      %v753 = vpop.f32.mrb[0].mxu0
      %v754 = vadd.f32 0.0, %v753
      %v755 = vpop.f32.mrb[0].mxu0
      %756 = vdwg.mxu0
      %v758 = vsel %vm652, %v749, 0
      %v761 = vsel %vm652, %v754, 0
      %763 = vmatprep.subr.mxu0 0.0
      %764 = vmatpush1.msra.mxu0 %v674
      %765 = vmatprep.subr.mxu0 0.0
      %766 = vmatpush1.msra.mxu0 %v675
      %767 = vmatprep.subr.mxu0 0.0
      %768 = vmatpush1.msra.mxu0 0.0
      %769 = vmatprep.subr.mxu0 0.0
      %770 = vmatpush1.msra.mxu0 0.0
      %771 = vmatprep.subr.mxu0 0.0
      %772 = vmatpush1.msra.mxu0 0.0
      %773 = vmatprep.subr.mxu0 0.0
      %774 = vmatpush1.msra.mxu0 0.0
      %775 = vmatprep.subr.mxu0 0.0
      %776 = vmatpush1.msra.mxu0 0.0
      %777 = vmatprep.subr.mxu0 0.0
      %778 = vmatpush1.msra.mxu0 0.0
      %779 = vmatprep.subr.mxu0 0.0
      %780 = vmatpush1.msra.mxu0 0.0
      %781 = vmatprep.subr.mxu0 0.0
      %782 = vmatpush1.msra.mxu0 0.0
      %783 = vmatprep.subr.mxu0 0.0
      %784 = vmatpush1.msra.mxu0 0.0
      %785 = vmatprep.subr.mxu0 0.0
      %786 = vmatpush1.msra.mxu0 0.0
      %787 = vmatprep.subr.mxu0 0.0
      %788 = vmatpush1.msra.mxu0 0.0
      %789 = vmatprep.subr.mxu0 0.0
      %790 = vmatpush1.msra.mxu0 0.0
      %791 = vmatprep.subr.mxu0 0.0
      %792 = vmatpush1.msra.mxu0 0.0
      %793 = vmatprep.subr.mxu0 0.0
      %794 = vmatpush1.msra.mxu0 0.0
      %795 = vmatprep.subr.mxu0 0.0
      %796 = vmatpush1.msra.mxu0 0.0
      %797 = vmatprep.subr.mxu0 0.0
      %798 = vmatpush1.msra.mxu0 0.0
      %799 = vmatprep.subr.mxu0 0.0
      %800 = vmatpush1.msra.mxu0 0.0
      %801 = vmatprep.subr.mxu0 0.0
      %802 = vmatpush1.msra.mxu0 0.0
      %803 = vmatprep.subr.mxu0 0.0
      %804 = vmatpush1.msra.mxu0 0.0
      %805 = vmatprep.subr.mxu0 0.0
      %806 = vmatpush1.msra.mxu0 0.0
      %807 = vmatprep.subr.mxu0 0.0
      %808 = vmatpush1.msra.mxu0 0.0
      %809 = vmatprep.subr.mxu0 0.0
      %810 = vmatpush1.msra.mxu0 0.0
      %811 = vmatprep.subr.mxu0 0.0
      %812 = vmatpush1.msra.mxu0 0.0
      %813 = vmatprep.subr.mxu0 0.0
      %814 = vmatpush1.msra.mxu0 0.0
      %815 = vmatprep.subr.mxu0 0.0
      %816 = vmatpush1.msra.mxu0 0.0
      %817 = vmatprep.subr.mxu0 0.0
      %818 = vmatpush1.msra.mxu0 0.0
      %819 = vmatprep.subr.mxu0 0.0
      %820 = vmatpush1.msra.mxu0 0.0
      %821 = vmatprep.subr.mxu0 0.0
      %822 = vmatpush1.msra.mxu0 0.0
      %823 = vmatprep.subr.mxu0 0.0
      %824 = vmatpush1.msra.mxu0 0.0
      %825 = vmatprep.subr.mxu0 0.0
      %826 = vmatpush1.msra.mxu0 0.0
      %827 = vmatprep.mubr.f32.mxu0 0.0
      %828 = vmatmul.mubr.f32.gmra.mrb[0].mxu0 %v758
      %v829 = vpop.f32.mrb[0].mxu0
      %v830 = vadd.f32 0.0, %v829
      %v831 = vpop.f32.mrb[0].mxu0
      %832 = vmatprep.mubr.f32.mxu0 0.0
      %833 = vmatmul.mubr.f32.gmra.mrb[0].mxu0 %v761
      %v834 = vpop.f32.mrb[0].mxu0
      %v835 = vadd.f32 0.0, %v834
      %v836 = vpop.f32.mrb[0].mxu0
      %837 = vdwg.mxu0
      %v839 = vsel %vm652, %v830, 0
      %v842 = vsel %vm652, %v835, 0
      %844 = vmatprep.subr.mxu0 0.0
      %845 = vmatpush1.msra.mxu0 %v648
      %846 = vmatprep.subr.mxu0 0.0
      %847 = vmatpush1.msra.mxu0 %v649
      %848 = vmatprep.subr.mxu0 0.0
      %849 = vmatpush1.msra.mxu0 0.0
      %850 = vmatprep.subr.mxu0 0.0
      %851 = vmatpush1.msra.mxu0 0.0
      %852 = vmatprep.subr.mxu0 0.0
      %853 = vmatpush1.msra.mxu0 0.0
      %854 = vmatprep.subr.mxu0 0.0
      %855 = vmatpush1.msra.mxu0 0.0
      %856 = vmatprep.subr.mxu0 0.0
      %857 = vmatpush1.msra.mxu0 0.0
      %858 = vmatprep.subr.mxu0 0.0
      %859 = vmatpush1.msra.mxu0 0.0
      %860 = vmatprep.subr.mxu0 0.0
      %861 = vmatpush1.msra.mxu0 0.0
      %862 = vmatprep.subr.mxu0 0.0
      %863 = vmatpush1.msra.mxu0 0.0
      %864 = vmatprep.subr.mxu0 0.0
      %865 = vmatpush1.msra.mxu0 0.0
      %866 = vmatprep.subr.mxu0 0.0
      %867 = vmatpush1.msra.mxu0 0.0
      %868 = vmatprep.subr.mxu0 0.0
      %869 = vmatpush1.msra.mxu0 0.0
      %870 = vmatprep.subr.mxu0 0.0
      %871 = vmatpush1.msra.mxu0 0.0
      %872 = vmatprep.subr.mxu0 0.0
      %873 = vmatpush1.msra.mxu0 0.0
      %874 = vmatprep.subr.mxu0 0.0
      %875 = vmatpush1.msra.mxu0 0.0
      %876 = vmatprep.subr.mxu0 0.0
      %877 = vmatpush1.msra.mxu0 0.0
      %878 = vmatprep.subr.mxu0 0.0
      %879 = vmatpush1.msra.mxu0 0.0
      %880 = vmatprep.subr.mxu0 0.0
      %881 = vmatpush1.msra.mxu0 0.0
      %882 = vmatprep.subr.mxu0 0.0
      %883 = vmatpush1.msra.mxu0 0.0
      %884 = vmatprep.subr.mxu0 0.0
      %885 = vmatpush1.msra.mxu0 0.0
      %886 = vmatprep.subr.mxu0 0.0
      %887 = vmatpush1.msra.mxu0 0.0
      %888 = vmatprep.subr.mxu0 0.0
      %889 = vmatpush1.msra.mxu0 0.0
      %890 = vmatprep.subr.mxu0 0.0
      %891 = vmatpush1.msra.mxu0 0.0
      %892 = vmatprep.subr.mxu0 0.0
      %893 = vmatpush1.msra.mxu0 0.0
      %894 = vmatprep.subr.mxu0 0.0
      %895 = vmatpush1.msra.mxu0 0.0
      %896 = vmatprep.subr.mxu0 0.0
      %897 = vmatpush1.msra.mxu0 0.0
      %898 = vmatprep.subr.mxu0 0.0
      %899 = vmatpush1.msra.mxu0 0.0
      %900 = vmatprep.subr.mxu0 0.0
      %901 = vmatpush1.msra.mxu0 0.0
      %902 = vmatprep.subr.mxu0 0.0
      %903 = vmatpush1.msra.mxu0 0.0
      %904 = vmatprep.subr.mxu0 0.0
      %905 = vmatpush1.msra.mxu0 0.0
      %906 = vmatprep.subr.mxu0 0.0
      %907 = vmatpush1.msra.mxu0 0.0
      %908 = vmatprep.mubr.f32.mxu0 0.0
      %909 = vmatmul.mubr.f32.gmra.mrb[0].mxu0 %v839
      %v910 = vpop.f32.mrb[0].mxu0
      %v911 = vadd.f32 0.0, %v910
      %v912 = vpop.f32.mrb[0].mxu0
      %913 = vmatprep.mubr.f32.mxu0 0.0
      %914 = vmatmul.mubr.f32.gmra.mrb[0].mxu0 %v842
      %v915 = vpop.f32.mrb[0].mxu0
      %v916 = vadd.f32 0.0, %v915
      %v917 = vpop.f32.mrb[0].mxu0
      %918 = vdwg.mxu0
      %v919 = vld [vmem:[%s2] sm:$0x1f]
      %v920 = vld [vmem:[%s3] sm:$0x1]
      %v922 = vlaneseq
      %v923 = vshrl.u32 %v922, 7
      %v924 = vsub.s32 0, %v923
      %v925 = vrot.slane %v920, %v924
      %vm927 = vcmask 39936
      %v929 = vsel %vm927, %v911, 0
      %v932 = vsel %vm927, %v916, 0
      %vm934 = vcmask 1044480
      %v936 = vsel %vm934, %v919, 0
      %938 = vmatprep.subr.mxu0 0.0
      %939 = vmatpush1.msra.mxu0 %v936
      %940 = vmatprep.subr.mxu0 0.0
      %941 = vmatpush1.msra.mxu0 0.0
      %942 = vmatprep.subr.mxu0 0.0
      %943 = vmatpush1.msra.mxu0 0.0
      %944 = vmatprep.subr.mxu0 0.0
      %945 = vmatpush1.msra.mxu0 0.0
      %946 = vmatprep.subr.mxu0 0.0
      %947 = vmatpush1.msra.mxu0 0.0
      %948 = vmatprep.subr.mxu0 0.0
      %949 = vmatpush1.msra.mxu0 0.0
      %950 = vmatprep.subr.mxu0 0.0
      %951 = vmatpush1.msra.mxu0 0.0
      %952 = vmatprep.subr.mxu0 0.0
      %953 = vmatpush1.msra.mxu0 0.0
      %954 = vmatprep.subr.mxu0 0.0
      %955 = vmatpush1.msra.mxu0 0.0
      %956 = vmatprep.subr.mxu0 0.0
      %957 = vmatpush1.msra.mxu0 0.0
      %958 = vmatprep.subr.mxu0 0.0
      %959 = vmatpush1.msra.mxu0 0.0
      %960 = vmatprep.subr.mxu0 0.0
      %961 = vmatpush1.msra.mxu0 0.0
      %962 = vmatprep.subr.mxu0 0.0
      %963 = vmatpush1.msra.mxu0 0.0
      %964 = vmatprep.subr.mxu0 0.0
      %965 = vmatpush1.msra.mxu0 0.0
      %966 = vmatprep.subr.mxu0 0.0
      %967 = vmatpush1.msra.mxu0 0.0
      %968 = vmatprep.subr.mxu0 0.0
      %969 = vmatpush1.msra.mxu0 0.0
      %970 = vmatprep.subr.mxu0 0.0
      %971 = vmatpush1.msra.mxu0 0.0
      %972 = vmatprep.subr.mxu0 0.0
      %973 = vmatpush1.msra.mxu0 0.0
      %974 = vmatprep.subr.mxu0 0.0
      %975 = vmatpush1.msra.mxu0 0.0
      %976 = vmatprep.subr.mxu0 0.0
      %977 = vmatpush1.msra.mxu0 0.0
      %978 = vmatprep.subr.mxu0 0.0
      %979 = vmatpush1.msra.mxu0 0.0
      %980 = vmatprep.subr.mxu0 0.0
      %981 = vmatpush1.msra.mxu0 0.0
      %982 = vmatprep.subr.mxu0 0.0
      %983 = vmatpush1.msra.mxu0 0.0
      %984 = vmatprep.subr.mxu0 0.0
      %985 = vmatpush1.msra.mxu0 0.0
      %986 = vmatprep.subr.mxu0 0.0
      %987 = vmatpush1.msra.mxu0 0.0
      %988 = vmatprep.subr.mxu0 0.0
      %989 = vmatpush1.msra.mxu0 0.0
      %990 = vmatprep.subr.mxu0 0.0
      %991 = vmatpush1.msra.mxu0 0.0
      %992 = vmatprep.subr.mxu0 0.0
      %993 = vmatpush1.msra.mxu0 0.0
      %994 = vmatprep.subr.mxu0 0.0
      %995 = vmatpush1.msra.mxu0 0.0
      %996 = vmatprep.subr.mxu0 0.0
      %997 = vmatpush1.msra.mxu0 0.0
      %998 = vmatprep.subr.mxu0 0.0
      %999 = vmatpush1.msra.mxu0 0.0
      %1000 = vmatprep.subr.mxu0 0.0
      %1001 = vmatpush1.msra.mxu0 0.0
      %1002 = vmatprep.mubr.f32.mxu0 0.0
      %1003 = vmatmul.mubr.f32.gmra.mrb[0].mxu0 %v929
      %v1004 = vpop.f32.mrb[0].mxu0
      %v1005 = vadd.f32 %v925, %v1004
      %v1006 = vpop.f32.mrb[0].mxu0
      %1007 = vmatprep.mubr.f32.mxu0 0.0
      %1008 = vmatmul.mubr.f32.gmra.mrb[0].mxu0 %v932
      %v1009 = vpop.f32.mrb[0].mxu0
      %v1010 = vadd.f32 %v925, %v1009
      %v1011 = vpop.f32.mrb[0].mxu0
      %1012 = vdwg.mxu0
      %v1013 = vmax.f32 %v1005, 0.0
      %v1014 = vmax.f32 %v1010, 0.0
      %v1015 = vld [vmem:[%s8] sm:$0xff]
      %v1016 = vld [vmem:[%s8 + $0x8] sm:$0xff]
      %v1017 = vld [vmem:[%s8 + $0x10] sm:$0xff]
      %v1018 = vld [vmem:[%s8 + $0x18] sm:$0xff]
      %v1019 = vld [vmem:[%s8 + $0x20] sm:$0xff]
      %v1020 = vld [vmem:[%s8 + $0x28] sm:$0xff]
      %v1021 = vld [vmem:[%s8 + $0x30] sm:$0xff]
      %v1022 = vld [vmem:[%s8 + $0x38] sm:$0xff]
      %v1023 = vmul.f32 %v1015, %v1015
      %v1024 = vmul.f32 %v1016, %v1016
      %v1025 = vmul.f32 %v1017, %v1017
      %v1026 = vmul.f32 %v1018, %v1018
      %v1027 = vmul.f32 %v1019, %v1019
      %v1028 = vmul.f32 %v1020, %v1020
      %v1029 = vmul.f32 %v1021, %v1021
      %v1030 = vmul.f32 %v1022, %v1022
      %vm1031 = vcmask 7168
      %v1032 = vsel %vm1031, %v1023, 0.0
      %v1033 = vsel %vm1031, %v1024, 0.0
      %v1034 = vadd.f32 %v1032, %v1033
      %v1035 = vsel %vm1031, %v1025, 0.0
      %v1036 = vadd.f32 %v1034, %v1035
      %v1037 = vsel %vm1031, %v1026, 0.0
      %v1038 = vadd.f32 %v1036, %v1037
      %v1039 = vsel %vm1031, %v1027, 0.0
      %v1040 = vadd.f32 %v1038, %v1039
      %v1041 = vsel %vm1031, %v1028, 0.0
      %v1042 = vadd.f32 %v1040, %v1041
      %v1043 = vsel %vm1031, %v1029, 0.0
      %v1044 = vadd.f32 %v1042, %v1043
      %v1045 = vsel %vm1031, %v1030, 0.0
      %v1046 = vadd.f32 %v1044, %v1045
      %1047 = vadd.xlane.f32.xlu0 %v1046
      %v1048 = vpop.xlane.xlu0 %1047
      %v1049 = vrot.slane %v1048, 4
      %v1050 = vadd.f32 %v1048, %v1049
      %v1051 = vrot.slane %v1050, 2
      %v1052 = vadd.f32 %v1050, %v1051
      %v1053 = vrot.slane %v1052, 1
      %v1054 = vadd.f32 %v1052, %v1053
      %s1055 = vtos %v1054
      %v1056 = vstv %s1055
      %v1057 = vrsqrt.pop %v1056
      %s1058 = vtos %v1057
      %vm1059 = vcmask 523264
      %v1061 = vsel %vm1059, %v1013, 0
      %v1064 = vsel %vm1059, %v1014, 0
      %1066 = vmatprep.subr.mxu0 0.0
      %1067 = vmatpush1.msra.mxu0 %v1015
      %1068 = vmatprep.subr.mxu0 0.0
      %1069 = vmatpush1.msra.mxu0 %v1016
      %1070 = vmatprep.subr.mxu0 0.0
      %1071 = vmatpush1.msra.mxu0 %v1017
      %1072 = vmatprep.subr.mxu0 0.0
      %1073 = vmatpush1.msra.mxu0 %v1018
      %1074 = vmatprep.subr.mxu0 0.0
      %1075 = vmatpush1.msra.mxu0 %v1019
      %1076 = vmatprep.subr.mxu0 0.0
      %1077 = vmatpush1.msra.mxu0 %v1020
      %1078 = vmatprep.subr.mxu0 0.0
      %1079 = vmatpush1.msra.mxu0 %v1021
      %1080 = vmatprep.subr.mxu0 0.0
      %1081 = vmatpush1.msra.mxu0 %v1022
      %1082 = vmatprep.subr.mxu0 0.0
      %1083 = vmatpush1.msra.mxu0 0.0
      %1084 = vmatprep.subr.mxu0 0.0
      %1085 = vmatpush1.msra.mxu0 0.0
      %1086 = vmatprep.subr.mxu0 0.0
      %1087 = vmatpush1.msra.mxu0 0.0
      %1088 = vmatprep.subr.mxu0 0.0
      %1089 = vmatpush1.msra.mxu0 0.0
      %1090 = vmatprep.subr.mxu0 0.0
      %1091 = vmatpush1.msra.mxu0 0.0
      %1092 = vmatprep.subr.mxu0 0.0
      %1093 = vmatpush1.msra.mxu0 0.0
      %1094 = vmatprep.subr.mxu0 0.0
      %1095 = vmatpush1.msra.mxu0 0.0
      %1096 = vmatprep.subr.mxu0 0.0
      %1097 = vmatpush1.msra.mxu0 0.0
      %1098 = vmatprep.subr.mxu0 0.0
      %1099 = vmatpush1.msra.mxu0 0.0
      %1100 = vmatprep.subr.mxu0 0.0
      %1101 = vmatpush1.msra.mxu0 0.0
      %1102 = vmatprep.subr.mxu0 0.0
      %1103 = vmatpush1.msra.mxu0 0.0
      %1104 = vmatprep.subr.mxu0 0.0
      %1105 = vmatpush1.msra.mxu0 0.0
      %1106 = vmatprep.subr.mxu0 0.0
      %1107 = vmatpush1.msra.mxu0 0.0
      %1108 = vmatprep.subr.mxu0 0.0
      %1109 = vmatpush1.msra.mxu0 0.0
      %1110 = vmatprep.subr.mxu0 0.0
      %1111 = vmatpush1.msra.mxu0 0.0
      %1112 = vmatprep.subr.mxu0 0.0
      %1113 = vmatpush1.msra.mxu0 0.0
      %1114 = vmatprep.subr.mxu0 0.0
      %1115 = vmatpush1.msra.mxu0 0.0
      %1116 = vmatprep.subr.mxu0 0.0
      %1117 = vmatpush1.msra.mxu0 0.0
      %1118 = vmatprep.subr.mxu0 0.0
      %1119 = vmatpush1.msra.mxu0 0.0
      %1120 = vmatprep.subr.mxu0 0.0
      %1121 = vmatpush1.msra.mxu0 0.0
      %1122 = vmatprep.subr.mxu0 0.0
      %1123 = vmatpush1.msra.mxu0 0.0
      %1124 = vmatprep.subr.mxu0 0.0
      %1125 = vmatpush1.msra.mxu0 0.0
      %1126 = vmatprep.subr.mxu0 0.0
      %1127 = vmatpush1.msra.mxu0 0.0
      %1128 = vmatprep.subr.mxu0 0.0
      %1129 = vmatpush1.msra.mxu0 0.0
      %1130 = vmatprep.mubr.f32.mxu0 0.0
      %1131 = vmatmul.mubr.f32.gmra.mrb[0].mxu0 %v1061
      %v1132 = vpop.f32.mrb[0].mxu0
      %v1133 = vadd.f32 0.0, %v1132
      %v1134 = vpop.f32.mrb[0].mxu0
      %1135 = vmatprep.mubr.f32.mxu0 0.0
      %1136 = vmatmul.mubr.f32.gmra.mrb[0].mxu0 %v1064
      %v1137 = vpop.f32.mrb[0].mxu0
      %v1138 = vadd.f32 0.0, %v1137
      %v1139 = vpop.f32.mrb[0].mxu0
      %1140 = vdwg.mxu0
      %v1141 = vstv %s1058
      %v1142 = vmul.f32 %v1133, %v1141
      %v1143 = vmul.f32 %v1138, %v1141
      %v1144 = vtanh.pop %v1142
      %v1145 = vtanh.pop %v1143
      %v1146 = vlaneseq
      %v1147 = vshrl.u32 %v1146, 7
      %v1148 = vadd.s32 %v1147, 8
      %v1149 = vlaneseq
      %v1150 = vand.u32 %v1149, 127
      %vm1151 = vcmp.eq.s32.totalorder %v1147, %v1150
      %vm1152 = vcmp.eq.s32.totalorder %v1148, %v1150
      %v1153 = vsel %vm1151, 1, 0
      %v1154 = vsel %vm1152, 1, 0
      %v1155 = vcvt.s32.f32 %v1153
      %v1156 = vcvt.s32.f32 %v1154
      %1158 = vset.pattern.permute.xlu0 0
      %1159 = vperm.xlu0 %1158, %v1144
      %v1160 = vpop.permute.xlu0 %1159
      %1163 = vset.pattern.permute.xlu0 0
      %1164 = vperm.xlu0 %1163, %v1145
      %v1165 = vpop.permute.xlu0 %1164
      %v1167 = vmul.f32 %v1155, %v1160
      %v1168 = vmul.f32 %v1156, %v1165
      %v1169 = vsel %vm652, %v1167, 0.0
      %v1170 = vsel %vm652, %v1168, 0.0
      %v1171 = vadd.f32 %v1169, %v1170
      %v1172 = vrot.slane %v1171, 4
      %v1173 = vadd.f32 %v1171, %v1172
      %v1174 = vrot.slane %v1173, 2
      %v1175 = vadd.f32 %v1173, %v1174
      %v1176 = vrot.slane %v1175, 1
      %v1177 = vadd.f32 %v1175, %v1176
      %vm1178 = vcmp.gt.f32.partialorder %v1177, %v1160
      %vm1179 = vcmp.gt.f32.partialorder %v1177, %v1165
      %vm1180 = vcmp.eq.f32.partialorder %v1177, %v1160
      %vm1181 = vcmp.eq.f32.partialorder %v1177, %v1165
      %vm1182 = vcmp.lt.s32.totalorder %v1150, %v1147
      %vm1183 = vcmp.lt.s32.totalorder %v1150, %v1148
      %vm1184 = vmand %vm1180, %vm1182
      %vm1185 = vmand %vm1181, %vm1183
      %vm1186 = vmor %vm1178, %vm1184
      %vm1187 = vmor %vm1179, %vm1185
      %v1188 = vsel %vm1186, 1, 0
      %v1189 = vsel %vm1187, 1, 0
      %v1190 = vcvt.s32.f32 %v1188
      %v1191 = vcvt.s32.f32 %v1189
      %v1192 = vsel %vm652, %v1190, 0.0
      %1193 = vadd.xlane.f32.xlu0 %v1192
      %v1194 = vpop.xlane.xlu0 %1193
      %v1195 = vsel %vm652, %v1191, 0.0
      %1196 = vadd.xlane.f32.xlu0 %v1195
      %v1197 = vpop.xlane.xlu0 %1196
      %v1198 = vadd.f32 %v1192, %v1195
      %v1199 = vrot.slane %v1198, 4
      %v1200 = vadd.f32 %v1198, %v1199
      %v1201 = vrot.slane %v1200, 2
      %v1202 = vadd.f32 %v1200, %v1201
      %v1203 = vrot.slane %v1202, 1
      %v1204 = vadd.f32 %v1202, %v1203
      %v1205 = vsub.f32 15.0, %v1204
      %v1206 = vcvt.s32.f32 %v1147
      %v1207 = vcvt.s32.f32 %v1148
      %v1208 = vcvt.s32.f32 %v1150
      %vm1209 = vcmp.eq.f32.partialorder %v1205, %v1206
      %vm1210 = vcmp.eq.f32.partialorder %v1205, %v1207
      %v1211 = vsel %vm1209, 1, 0
      %v1212 = vsel %vm1210, 1, 0
      %v1213 = vcvt.s32.f32 %v1211
      %v1214 = vcvt.s32.f32 %v1212
      %vm1215 = vcmp.eq.f32.partialorder %v1194, %v1208
      %vm1216 = vcmp.eq.f32.partialorder %v1197, %v1208
      %v1217 = vsel %vm1215, 1, 0
      %v1218 = vsel %vm1216, 1, 0
      %v1219 = vcvt.s32.f32 %v1217
      %v1220 = vcvt.s32.f32 %v1218
      %v1221 = vmul.f32 %v1013, %v1160
      %v1222 = vmul.f32 %v1014, %v1165
      %v1224 = vsel %vm652, %v1213, 0
      %v1227 = vsel %vm652, %v1214, 0
      %1229 = vmatprep.subr.mxu0 0.0
      %1230 = vmatpush1.msra.mxu0 %v1221
      %1231 = vmatprep.subr.mxu0 0.0
      %1232 = vmatpush1.msra.mxu0 %v1222
      %1233 = vmatprep.subr.mxu0 0.0
      %1234 = vmatpush1.msra.mxu0 0.0
      %1235 = vmatprep.subr.mxu0 0.0
      %1236 = vmatpush1.msra.mxu0 0.0
      %1237 = vmatprep.subr.mxu0 0.0
      %1238 = vmatpush1.msra.mxu0 0.0
      %1239 = vmatprep.subr.mxu0 0.0
      %1240 = vmatpush1.msra.mxu0 0.0
      %1241 = vmatprep.subr.mxu0 0.0
      %1242 = vmatpush1.msra.mxu0 0.0
      %1243 = vmatprep.subr.mxu0 0.0
      %1244 = vmatpush1.msra.mxu0 0.0
      %1245 = vmatprep.subr.mxu0 0.0
      %1246 = vmatpush1.msra.mxu0 0.0
      %1247 = vmatprep.subr.mxu0 0.0
      %1248 = vmatpush1.msra.mxu0 0.0
      %1249 = vmatprep.subr.mxu0 0.0
      %1250 = vmatpush1.msra.mxu0 0.0
      %1251 = vmatprep.subr.mxu0 0.0
      %1252 = vmatpush1.msra.mxu0 0.0
      %1253 = vmatprep.subr.mxu0 0.0
      %1254 = vmatpush1.msra.mxu0 0.0
      %1255 = vmatprep.subr.mxu0 0.0
      %1256 = vmatpush1.msra.mxu0 0.0
      %1257 = vmatprep.subr.mxu0 0.0
      %1258 = vmatpush1.msra.mxu0 0.0
      %1259 = vmatprep.subr.mxu0 0.0
      %1260 = vmatpush1.msra.mxu0 0.0
      %1261 = vmatprep.subr.mxu0 0.0
      %1262 = vmatpush1.msra.mxu0 0.0
      %1263 = vmatprep.subr.mxu0 0.0
      %1264 = vmatpush1.msra.mxu0 0.0
      %1265 = vmatprep.subr.mxu0 0.0
      %1266 = vmatpush1.msra.mxu0 0.0
      %1267 = vmatprep.subr.mxu0 0.0
      %1268 = vmatpush1.msra.mxu0 0.0
      %1269 = vmatprep.subr.mxu0 0.0
      %1270 = vmatpush1.msra.mxu0 0.0
      %1271 = vmatprep.subr.mxu0 0.0
      %1272 = vmatpush1.msra.mxu0 0.0
      %1273 = vmatprep.subr.mxu0 0.0
      %1274 = vmatpush1.msra.mxu0 0.0
      %1275 = vmatprep.subr.mxu0 0.0
      %1276 = vmatpush1.msra.mxu0 0.0
      %1277 = vmatprep.subr.mxu0 0.0
      %1278 = vmatpush1.msra.mxu0 0.0
      %1279 = vmatprep.subr.mxu0 0.0
      %1280 = vmatpush1.msra.mxu0 0.0
      %1281 = vmatprep.subr.mxu0 0.0
      %1282 = vmatpush1.msra.mxu0 0.0
      %1283 = vmatprep.subr.mxu0 0.0
      %1284 = vmatpush1.msra.mxu0 0.0
      %1285 = vmatprep.subr.mxu0 0.0
      %1286 = vmatpush1.msra.mxu0 0.0
      %1287 = vmatprep.subr.mxu0 0.0
      %1288 = vmatpush1.msra.mxu0 0.0
      %1289 = vmatprep.subr.mxu0 0.0
      %1290 = vmatpush1.msra.mxu0 0.0
      %1291 = vmatprep.subr.mxu0 0.0
      %1292 = vmatpush1.msra.mxu0 0.0
      %1293 = vmatprep.mubr.f32.mxu0 0.0
      %1294 = vmatmul.mubr.f32.gmra.mrb[0].mxu0 %v1224
      %v1295 = vpop.f32.mrb[0].mxu0
      %v1296 = vadd.f32 0.0, %v1295
      %v1297 = vpop.f32.mrb[0].mxu0
      %1298 = vmatprep.mubr.f32.mxu0 0.0
      %1299 = vmatmul.mubr.f32.gmra.mrb[0].mxu0 %v1227
      %v1300 = vpop.f32.mrb[0].mxu0
      %v1301 = vadd.f32 0.0, %v1300
      %v1302 = vpop.f32.mrb[0].mxu0
      %1303 = vdwg.mxu0
      %1304 = vmatprep.subr.mxu0 0.0
      %1305 = vmatpush1.msra.mxu0 %v650
      %1306 = vmatprep.subr.mxu0 0.0
      %1307 = vmatpush1.msra.mxu0 %v651
      %1308 = vmatprep.subr.mxu0 0.0
      %1309 = vmatpush1.msra.mxu0 0.0
      %1310 = vmatprep.subr.mxu0 0.0
      %1311 = vmatpush1.msra.mxu0 0.0
      %1312 = vmatprep.subr.mxu0 0.0
      %1313 = vmatpush1.msra.mxu0 0.0
      %1314 = vmatprep.subr.mxu0 0.0
      %1315 = vmatpush1.msra.mxu0 0.0
      %1316 = vmatprep.subr.mxu0 0.0
      %1317 = vmatpush1.msra.mxu0 0.0
      %1318 = vmatprep.subr.mxu0 0.0
      %1319 = vmatpush1.msra.mxu0 0.0
      %1320 = vmatprep.subr.mxu0 0.0
      %1321 = vmatpush1.msra.mxu0 0.0
      %1322 = vmatprep.subr.mxu0 0.0
      %1323 = vmatpush1.msra.mxu0 0.0
      %1324 = vmatprep.subr.mxu0 0.0
      %1325 = vmatpush1.msra.mxu0 0.0
      %1326 = vmatprep.subr.mxu0 0.0
      %1327 = vmatpush1.msra.mxu0 0.0
      %1328 = vmatprep.subr.mxu0 0.0
      %1329 = vmatpush1.msra.mxu0 0.0
      %1330 = vmatprep.subr.mxu0 0.0
      %1331 = vmatpush1.msra.mxu0 0.0
      %1332 = vmatprep.subr.mxu0 0.0
      %1333 = vmatpush1.msra.mxu0 0.0
      %1334 = vmatprep.subr.mxu0 0.0
      %1335 = vmatpush1.msra.mxu0 0.0
      %1336 = vmatprep.subr.mxu0 0.0
      %1337 = vmatpush1.msra.mxu0 0.0
      %1338 = vmatprep.subr.mxu0 0.0
      %1339 = vmatpush1.msra.mxu0 0.0
      %1340 = vmatprep.subr.mxu0 0.0
      %1341 = vmatpush1.msra.mxu0 0.0
      %1342 = vmatprep.subr.mxu0 0.0
      %1343 = vmatpush1.msra.mxu0 0.0
      %1344 = vmatprep.subr.mxu0 0.0
      %1345 = vmatpush1.msra.mxu0 0.0
      %1346 = vmatprep.subr.mxu0 0.0
      %1347 = vmatpush1.msra.mxu0 0.0
      %1348 = vmatprep.subr.mxu0 0.0
      %1349 = vmatpush1.msra.mxu0 0.0
      %1350 = vmatprep.subr.mxu0 0.0
      %1351 = vmatpush1.msra.mxu0 0.0
      %1352 = vmatprep.subr.mxu0 0.0
      %1353 = vmatpush1.msra.mxu0 0.0
      %1354 = vmatprep.subr.mxu0 0.0
      %1355 = vmatpush1.msra.mxu0 0.0
      %1356 = vmatprep.subr.mxu0 0.0
      %1357 = vmatpush1.msra.mxu0 0.0
      %1358 = vmatprep.subr.mxu0 0.0
      %1359 = vmatpush1.msra.mxu0 0.0
      %1360 = vmatprep.subr.mxu0 0.0
      %1361 = vmatpush1.msra.mxu0 0.0
      %1362 = vmatprep.subr.mxu0 0.0
      %1363 = vmatpush1.msra.mxu0 0.0
      %1364 = vmatprep.subr.mxu0 0.0
      %1365 = vmatpush1.msra.mxu0 0.0
      %1366 = vmatprep.subr.mxu0 0.0
      %1367 = vmatpush1.msra.mxu0 0.0
      %1368 = vmatprep.mubr.f32.mxu0 0.0
      %1369 = vmatmul.mubr.f32.gmra.mrb[0].mxu0 %v1224
      %v1370 = vpop.f32.mrb[0].mxu0
      %v1371 = vadd.f32 0.0, %v1370
      %v1372 = vpop.f32.mrb[0].mxu0
      %1373 = vmatprep.mubr.f32.mxu0 0.0
      %1374 = vmatmul.mubr.f32.gmra.mrb[0].mxu0 %v1227
      %v1375 = vpop.f32.mrb[0].mxu0
      %v1376 = vadd.f32 0.0, %v1375
      %v1377 = vpop.f32.mrb[0].mxu0
      %1378 = vdwg.mxu0
      %v1380 = vsel %vm652, %v650, 0
      %v1383 = vsel %vm652, %v651, 0
      %1385 = vmatprep.subr.mxu0 0.0
      %1386 = vmatpush1.msra.mxu0 %v1219
      %1387 = vmatprep.subr.mxu0 0.0
      %1388 = vmatpush1.msra.mxu0 %v1220
      %1389 = vmatprep.subr.mxu0 0.0
      %1390 = vmatpush1.msra.mxu0 0.0
      %1391 = vmatprep.subr.mxu0 0.0
      %1392 = vmatpush1.msra.mxu0 0.0
      %1393 = vmatprep.subr.mxu0 0.0
      %1394 = vmatpush1.msra.mxu0 0.0
      %1395 = vmatprep.subr.mxu0 0.0
      %1396 = vmatpush1.msra.mxu0 0.0
      %1397 = vmatprep.subr.mxu0 0.0
      %1398 = vmatpush1.msra.mxu0 0.0
      %1399 = vmatprep.subr.mxu0 0.0
      %1400 = vmatpush1.msra.mxu0 0.0
      %1401 = vmatprep.subr.mxu0 0.0
      %1402 = vmatpush1.msra.mxu0 0.0
      %1403 = vmatprep.subr.mxu0 0.0
      %1404 = vmatpush1.msra.mxu0 0.0
      %1405 = vmatprep.subr.mxu0 0.0
      %1406 = vmatpush1.msra.mxu0 0.0
      %1407 = vmatprep.subr.mxu0 0.0
      %1408 = vmatpush1.msra.mxu0 0.0
      %1409 = vmatprep.subr.mxu0 0.0
      %1410 = vmatpush1.msra.mxu0 0.0
      %1411 = vmatprep.subr.mxu0 0.0
      %1412 = vmatpush1.msra.mxu0 0.0
      %1413 = vmatprep.subr.mxu0 0.0
      %1414 = vmatpush1.msra.mxu0 0.0
      %1415 = vmatprep.subr.mxu0 0.0
      %1416 = vmatpush1.msra.mxu0 0.0
      %1417 = vmatprep.subr.mxu0 0.0
      %1418 = vmatpush1.msra.mxu0 0.0
      %1419 = vmatprep.subr.mxu0 0.0
      %1420 = vmatpush1.msra.mxu0 0.0
      %1421 = vmatprep.subr.mxu0 0.0
      %1422 = vmatpush1.msra.mxu0 0.0
      %1423 = vmatprep.subr.mxu0 0.0
      %1424 = vmatpush1.msra.mxu0 0.0
      %1425 = vmatprep.subr.mxu0 0.0
      %1426 = vmatpush1.msra.mxu0 0.0
      %1427 = vmatprep.subr.mxu0 0.0
      %1428 = vmatpush1.msra.mxu0 0.0
      %1429 = vmatprep.subr.mxu0 0.0
      %1430 = vmatpush1.msra.mxu0 0.0
      %1431 = vmatprep.subr.mxu0 0.0
      %1432 = vmatpush1.msra.mxu0 0.0
      %1433 = vmatprep.subr.mxu0 0.0
      %1434 = vmatpush1.msra.mxu0 0.0
      %1435 = vmatprep.subr.mxu0 0.0
      %1436 = vmatpush1.msra.mxu0 0.0
      %1437 = vmatprep.subr.mxu0 0.0
      %1438 = vmatpush1.msra.mxu0 0.0
      %1439 = vmatprep.subr.mxu0 0.0
      %1440 = vmatpush1.msra.mxu0 0.0
      %1441 = vmatprep.subr.mxu0 0.0
      %1442 = vmatpush1.msra.mxu0 0.0
      %1443 = vmatprep.subr.mxu0 0.0
      %1444 = vmatpush1.msra.mxu0 0.0
      %1445 = vmatprep.subr.mxu0 0.0
      %1446 = vmatpush1.msra.mxu0 0.0
      %1447 = vmatprep.subr.mxu0 0.0
      %1448 = vmatpush1.msra.mxu0 0.0
      %1449 = vmatprep.mubr.f32.mxu0 0.0
      %1450 = vmatmul.mubr.f32.gmra.mrb[0].mxu0 %v1380
      %v1451 = vpop.f32.mrb[0].mxu0
      %v1452 = vadd.f32 0.0, %v1451
      %v1453 = vpop.f32.mrb[0].mxu0
      %1454 = vmatprep.mubr.f32.mxu0 0.0
      %1455 = vmatmul.mubr.f32.gmra.mrb[0].mxu0 %v1383
      %v1456 = vpop.f32.mrb[0].mxu0
      %v1457 = vadd.f32 0.0, %v1456
      %v1458 = vpop.f32.mrb[0].mxu0
      %1459 = vdwg.mxu0
      %v1461 = vsel %vm652, %v1371, 0
      %v1464 = vsel %vm652, %v1376, 0
      %1466 = vmatprep.subr.mxu0 0.0
      %1467 = vmatpush1.msra.mxu0 %v1452
      %1468 = vmatprep.subr.mxu0 0.0
      %1469 = vmatpush1.msra.mxu0 %v1457
      %1470 = vmatprep.subr.mxu0 0.0
      %1471 = vmatpush1.msra.mxu0 0.0
      %1472 = vmatprep.subr.mxu0 0.0
      %1473 = vmatpush1.msra.mxu0 0.0
      %1474 = vmatprep.subr.mxu0 0.0
      %1475 = vmatpush1.msra.mxu0 0.0
      %1476 = vmatprep.subr.mxu0 0.0
      %1477 = vmatpush1.msra.mxu0 0.0
      %1478 = vmatprep.subr.mxu0 0.0
      %1479 = vmatpush1.msra.mxu0 0.0
      %1480 = vmatprep.subr.mxu0 0.0
      %1481 = vmatpush1.msra.mxu0 0.0
      %1482 = vmatprep.subr.mxu0 0.0
      %1483 = vmatpush1.msra.mxu0 0.0
      %1484 = vmatprep.subr.mxu0 0.0
      %1485 = vmatpush1.msra.mxu0 0.0
      %1486 = vmatprep.subr.mxu0 0.0
      %1487 = vmatpush1.msra.mxu0 0.0
      %1488 = vmatprep.subr.mxu0 0.0
      %1489 = vmatpush1.msra.mxu0 0.0
      %1490 = vmatprep.subr.mxu0 0.0
      %1491 = vmatpush1.msra.mxu0 0.0
      %1492 = vmatprep.subr.mxu0 0.0
      %1493 = vmatpush1.msra.mxu0 0.0
      %1494 = vmatprep.subr.mxu0 0.0
      %1495 = vmatpush1.msra.mxu0 0.0
      %1496 = vmatprep.subr.mxu0 0.0
      %1497 = vmatpush1.msra.mxu0 0.0
      %1498 = vmatprep.subr.mxu0 0.0
      %1499 = vmatpush1.msra.mxu0 0.0
      %1500 = vmatprep.subr.mxu0 0.0
      %1501 = vmatpush1.msra.mxu0 0.0
      %1502 = vmatprep.subr.mxu0 0.0
      %1503 = vmatpush1.msra.mxu0 0.0
      %1504 = vmatprep.subr.mxu0 0.0
      %1505 = vmatpush1.msra.mxu0 0.0
      %1506 = vmatprep.subr.mxu0 0.0
      %1507 = vmatpush1.msra.mxu0 0.0
      %1508 = vmatprep.subr.mxu0 0.0
      %1509 = vmatpush1.msra.mxu0 0.0
      %1510 = vmatprep.subr.mxu0 0.0
      %1511 = vmatpush1.msra.mxu0 0.0
      %1512 = vmatprep.subr.mxu0 0.0
      %1513 = vmatpush1.msra.mxu0 0.0
      %1514 = vmatprep.subr.mxu0 0.0
      %1515 = vmatpush1.msra.mxu0 0.0
      %1516 = vmatprep.subr.mxu0 0.0
      %1517 = vmatpush1.msra.mxu0 0.0
      %1518 = vmatprep.subr.mxu0 0.0
      %1519 = vmatpush1.msra.mxu0 0.0
      %1520 = vmatprep.subr.mxu0 0.0
      %1521 = vmatpush1.msra.mxu0 0.0
      %1522 = vmatprep.subr.mxu0 0.0
      %1523 = vmatpush1.msra.mxu0 0.0
      %1524 = vmatprep.subr.mxu0 0.0
      %1525 = vmatpush1.msra.mxu0 0.0
      %1526 = vmatprep.subr.mxu0 0.0
      %1527 = vmatpush1.msra.mxu0 0.0
      %1528 = vmatprep.subr.mxu0 0.0
      %1529 = vmatpush1.msra.mxu0 0.0
      %1530 = vmatprep.mubr.f32.mxu0 0.0
      %1531 = vmatmul.mubr.f32.gmra.mrb[0].mxu0 %v1461
      %v1532 = vpop.f32.mrb[0].mxu0
      %v1533 = vadd.f32 0.0, %v1532
      %v1534 = vpop.f32.mrb[0].mxu0
      %1535 = vmatprep.mubr.f32.mxu0 0.0
      %1536 = vmatmul.mubr.f32.gmra.mrb[0].mxu0 %v1464
      %v1537 = vpop.f32.mrb[0].mxu0
      %v1538 = vadd.f32 0.0, %v1537
      %v1539 = vpop.f32.mrb[0].mxu0
      %1540 = vdwg.mxu0
      %vm1541 = vcmp.gt.f32.partialorder %v1533, 0.5
      %vm1542 = vcmp.gt.f32.partialorder %v1538, 0.5
      %v1543 = vsel %vm1541, 1, 0
      %v1544 = vsel %vm1542, 1, 0
      %v1545 = vcvt.s32.f32 %v1543
      %v1546 = vcvt.s32.f32 %v1544
      %vm1547 = vcmask 105472
      %v1548 = vsel %vm1547, %v1545, 0.0
      %1549 = vadd.xlane.f32.xlu0 %v1548
      %v1550 = vpop.xlane.xlu0 %1549
      %vm1551 = vcmask 102400
      %v1552 = vsel %vm1551, %v1546, 0.0
      %1553 = vadd.xlane.f32.xlu0 %v1552
      %v1554 = vpop.xlane.xlu0 %1553
      %v1555 = vmax.f32 %v1550, 1.0
      %v1556 = vmax.f32 %v1554, 1.0
      %v1557 = vrsqrt.pop %v1555
      %v1558 = vrsqrt.pop %v1556
      %v1559 = vadd.f32 %v1548, %v1552
      %v1560 = vrot.slane %v1559, 4
      %v1561 = vadd.f32 %v1559, %v1560
      %v1562 = vrot.slane %v1561, 2
      %v1563 = vadd.f32 %v1561, %v1562
      %v1564 = vrot.slane %v1563, 1
      %v1565 = vadd.f32 %v1563, %v1564
      %v1566 = vmax.f32 %v1565, 1.0
      %v1567 = vrsqrt.pop %v1566
      %v1568 = vmul.f32 %v1557, %v1545
      %v1569 = vmul.f32 %v1558, %v1546
      %v1570 = vmul.f32 %v1568, %v1567
      %v1571 = vmul.f32 %v1569, %v1567
      %v1573 = vsel %vm1547, %v1570, 0
      %v1576 = vsel %vm1547, %v1571, 0
      %v1578 = vsel %vm934, %v1571, 0
      %1580 = vmatprep.subr.mxu0 0.0
      %1581 = vmatpush1.msra.mxu0 %v1570
      %1582 = vmatprep.subr.mxu0 0.0
      %1583 = vmatpush1.msra.mxu0 %v1578
      %1584 = vmatprep.subr.mxu0 0.0
      %1585 = vmatpush1.msra.mxu0 0.0
      %1586 = vmatprep.subr.mxu0 0.0
      %1587 = vmatpush1.msra.mxu0 0.0
      %1588 = vmatprep.subr.mxu0 0.0
      %1589 = vmatpush1.msra.mxu0 0.0
      %1590 = vmatprep.subr.mxu0 0.0
      %1591 = vmatpush1.msra.mxu0 0.0
      %1592 = vmatprep.subr.mxu0 0.0
      %1593 = vmatpush1.msra.mxu0 0.0
      %1594 = vmatprep.subr.mxu0 0.0
      %1595 = vmatpush1.msra.mxu0 0.0
      %1596 = vmatprep.subr.mxu0 0.0
      %1597 = vmatpush1.msra.mxu0 0.0
      %1598 = vmatprep.subr.mxu0 0.0
      %1599 = vmatpush1.msra.mxu0 0.0
      %1600 = vmatprep.subr.mxu0 0.0
      %1601 = vmatpush1.msra.mxu0 0.0
      %1602 = vmatprep.subr.mxu0 0.0
      %1603 = vmatpush1.msra.mxu0 0.0
      %1604 = vmatprep.subr.mxu0 0.0
      %1605 = vmatpush1.msra.mxu0 0.0
      %1606 = vmatprep.subr.mxu0 0.0
      %1607 = vmatpush1.msra.mxu0 0.0
      %1608 = vmatprep.subr.mxu0 0.0
      %1609 = vmatpush1.msra.mxu0 0.0
      %1610 = vmatprep.subr.mxu0 0.0
      %1611 = vmatpush1.msra.mxu0 0.0
      %1612 = vmatprep.subr.mxu0 0.0
      %1613 = vmatpush1.msra.mxu0 0.0
      %1614 = vmatprep.subr.mxu0 0.0
      %1615 = vmatpush1.msra.mxu0 0.0
      %1616 = vmatprep.subr.mxu0 0.0
      %1617 = vmatpush1.msra.mxu0 0.0
      %1618 = vmatprep.subr.mxu0 0.0
      %1619 = vmatpush1.msra.mxu0 0.0
      %1620 = vmatprep.subr.mxu0 0.0
      %1621 = vmatpush1.msra.mxu0 0.0
      %1622 = vmatprep.subr.mxu0 0.0
      %1623 = vmatpush1.msra.mxu0 0.0
      %1624 = vmatprep.subr.mxu0 0.0
      %1625 = vmatpush1.msra.mxu0 0.0
      %1626 = vmatprep.subr.mxu0 0.0
      %1627 = vmatpush1.msra.mxu0 0.0
      %1628 = vmatprep.subr.mxu0 0.0
      %1629 = vmatpush1.msra.mxu0 0.0
      %1630 = vmatprep.subr.mxu0 0.0
      %1631 = vmatpush1.msra.mxu0 0.0
      %1632 = vmatprep.subr.mxu0 0.0
      %1633 = vmatpush1.msra.mxu0 0.0
      %1634 = vmatprep.subr.mxu0 0.0
      %1635 = vmatpush1.msra.mxu0 0.0
      %1636 = vmatprep.subr.mxu0 0.0
      %1637 = vmatpush1.msra.mxu0 0.0
      %1638 = vmatprep.subr.mxu0 0.0
      %1639 = vmatpush1.msra.mxu0 0.0
      %1640 = vmatprep.subr.mxu0 0.0
      %1641 = vmatpush1.msra.mxu0 0.0
      %1642 = vmatprep.subr.mxu0 0.0
      %1643 = vmatpush1.msra.mxu0 0.0
      %1644 = vmatprep.mubr.f32.mxu0 0.0
      %1645 = vmatmul.mubr.f32.gmra.mrb[0].mxu0 %v1573
      %v1646 = vpop.f32.mrb[0].mxu0
      %v1647 = vadd.f32 0.0, %v1646
      %v1648 = vpop.f32.mrb[0].mxu0
      %1649 = vmatprep.mubr.f32.mxu0 0.0
      %1650 = vmatmul.mubr.f32.gmra.mrb[0].mxu0 %v1576
      %v1651 = vpop.f32.mrb[0].mxu0
      %v1652 = vadd.f32 0.0, %v1651
      %v1653 = vpop.f32.mrb[0].mxu0
      %1654 = vdwg.mxu0
      %v1656 = vsel %vm1547, %v1647, 0
      %v1659 = vsel %vm1547, %v1652, 0
      %1661 = vmatprep.subr.mxu0 0.0
      %1662 = vmatpush1.msra.mxu0 %v1570
      %1663 = vmatprep.subr.mxu0 0.0
      %1664 = vmatpush1.msra.mxu0 %v1578
      %1665 = vmatprep.subr.mxu0 0.0
      %1666 = vmatpush1.msra.mxu0 0.0
      %1667 = vmatprep.subr.mxu0 0.0
      %1668 = vmatpush1.msra.mxu0 0.0
      %1669 = vmatprep.subr.mxu0 0.0
      %1670 = vmatpush1.msra.mxu0 0.0
      %1671 = vmatprep.subr.mxu0 0.0
      %1672 = vmatpush1.msra.mxu0 0.0
      %1673 = vmatprep.subr.mxu0 0.0
      %1674 = vmatpush1.msra.mxu0 0.0
      %1675 = vmatprep.subr.mxu0 0.0
      %1676 = vmatpush1.msra.mxu0 0.0
      %1677 = vmatprep.subr.mxu0 0.0
      %1678 = vmatpush1.msra.mxu0 0.0
      %1679 = vmatprep.subr.mxu0 0.0
      %1680 = vmatpush1.msra.mxu0 0.0
      %1681 = vmatprep.subr.mxu0 0.0
      %1682 = vmatpush1.msra.mxu0 0.0
      %1683 = vmatprep.subr.mxu0 0.0
      %1684 = vmatpush1.msra.mxu0 0.0
      %1685 = vmatprep.subr.mxu0 0.0
      %1686 = vmatpush1.msra.mxu0 0.0
      %1687 = vmatprep.subr.mxu0 0.0
      %1688 = vmatpush1.msra.mxu0 0.0
      %1689 = vmatprep.subr.mxu0 0.0
      %1690 = vmatpush1.msra.mxu0 0.0
      %1691 = vmatprep.subr.mxu0 0.0
      %1692 = vmatpush1.msra.mxu0 0.0
      %1693 = vmatprep.subr.mxu0 0.0
      %1694 = vmatpush1.msra.mxu0 0.0
      %1695 = vmatprep.subr.mxu0 0.0
      %1696 = vmatpush1.msra.mxu0 0.0
      %1697 = vmatprep.subr.mxu0 0.0
      %1698 = vmatpush1.msra.mxu0 0.0
      %1699 = vmatprep.subr.mxu0 0.0
      %1700 = vmatpush1.msra.mxu0 0.0
      %1701 = vmatprep.subr.mxu0 0.0
      %1702 = vmatpush1.msra.mxu0 0.0
      %1703 = vmatprep.subr.mxu0 0.0
      %1704 = vmatpush1.msra.mxu0 0.0
      %1705 = vmatprep.subr.mxu0 0.0
      %1706 = vmatpush1.msra.mxu0 0.0
      %1707 = vmatprep.subr.mxu0 0.0
      %1708 = vmatpush1.msra.mxu0 0.0
      %1709 = vmatprep.subr.mxu0 0.0
      %1710 = vmatpush1.msra.mxu0 0.0
      %1711 = vmatprep.subr.mxu0 0.0
      %1712 = vmatpush1.msra.mxu0 0.0
      %1713 = vmatprep.subr.mxu0 0.0
      %1714 = vmatpush1.msra.mxu0 0.0
      %1715 = vmatprep.subr.mxu0 0.0
      %1716 = vmatpush1.msra.mxu0 0.0
      %1717 = vmatprep.subr.mxu0 0.0
      %1718 = vmatpush1.msra.mxu0 0.0
      %1719 = vmatprep.subr.mxu0 0.0
      %1720 = vmatpush1.msra.mxu0 0.0
      %1721 = vmatprep.subr.mxu0 0.0
      %1722 = vmatpush1.msra.mxu0 0.0
      %1723 = vmatprep.subr.mxu0 0.0
      %1724 = vmatpush1.msra.mxu0 0.0
      %1725 = vmatprep.mubr.f32.mxu0 0.0
      %1726 = vmatmul.mubr.f32.gmra.mrb[0].mxu0 %v1656
      %v1727 = vpop.f32.mrb[0].mxu0
      %v1728 = vadd.f32 0.0, %v1727
      %v1729 = vpop.f32.mrb[0].mxu0
      %1730 = vmatprep.mubr.f32.mxu0 0.0
      %1731 = vmatmul.mubr.f32.gmra.mrb[0].mxu0 %v1659
      %v1732 = vpop.f32.mrb[0].mxu0
      %v1733 = vadd.f32 0.0, %v1732
      %v1734 = vpop.f32.mrb[0].mxu0
      %1735 = vdwg.mxu0
      %v1737 = vsel %vm1547, %v1728, 0
      %v1740 = vsel %vm1547, %v1733, 0
      %v1743 = vsel %vm934, %v1301, 0
      %1745 = vmatprep.subr.mxu0 0.0
      %1746 = vmatpush1.msra.mxu0 %v1296
      %1747 = vmatprep.subr.mxu0 0.0
      %1748 = vmatpush1.msra.mxu0 %v1743
      %1749 = vmatprep.subr.mxu0 0.0
      %1750 = vmatpush1.msra.mxu0 0.0
      %1751 = vmatprep.subr.mxu0 0.0
      %1752 = vmatpush1.msra.mxu0 0.0
      %1753 = vmatprep.subr.mxu0 0.0
      %1754 = vmatpush1.msra.mxu0 0.0
      %1755 = vmatprep.subr.mxu0 0.0
      %1756 = vmatpush1.msra.mxu0 0.0
      %1757 = vmatprep.subr.mxu0 0.0
      %1758 = vmatpush1.msra.mxu0 0.0
      %1759 = vmatprep.subr.mxu0 0.0
      %1760 = vmatpush1.msra.mxu0 0.0
      %1761 = vmatprep.subr.mxu0 0.0
      %1762 = vmatpush1.msra.mxu0 0.0
      %1763 = vmatprep.subr.mxu0 0.0
      %1764 = vmatpush1.msra.mxu0 0.0
      %1765 = vmatprep.subr.mxu0 0.0
      %1766 = vmatpush1.msra.mxu0 0.0
      %1767 = vmatprep.subr.mxu0 0.0
      %1768 = vmatpush1.msra.mxu0 0.0
      %1769 = vmatprep.subr.mxu0 0.0
      %1770 = vmatpush1.msra.mxu0 0.0
      %1771 = vmatprep.subr.mxu0 0.0
      %1772 = vmatpush1.msra.mxu0 0.0
      %1773 = vmatprep.subr.mxu0 0.0
      %1774 = vmatpush1.msra.mxu0 0.0
      %1775 = vmatprep.subr.mxu0 0.0
      %1776 = vmatpush1.msra.mxu0 0.0
      %1777 = vmatprep.subr.mxu0 0.0
      %1778 = vmatpush1.msra.mxu0 0.0
      %1779 = vmatprep.subr.mxu0 0.0
      %1780 = vmatpush1.msra.mxu0 0.0
      %1781 = vmatprep.subr.mxu0 0.0
      %1782 = vmatpush1.msra.mxu0 0.0
      %1783 = vmatprep.subr.mxu0 0.0
      %1784 = vmatpush1.msra.mxu0 0.0
      %1785 = vmatprep.subr.mxu0 0.0
      %1786 = vmatpush1.msra.mxu0 0.0
      %1787 = vmatprep.subr.mxu0 0.0
      %1788 = vmatpush1.msra.mxu0 0.0
      %1789 = vmatprep.subr.mxu0 0.0
      %1790 = vmatpush1.msra.mxu0 0.0
      %1791 = vmatprep.subr.mxu0 0.0
      %1792 = vmatpush1.msra.mxu0 0.0
      %1793 = vmatprep.subr.mxu0 0.0
      %1794 = vmatpush1.msra.mxu0 0.0
      %1795 = vmatprep.subr.mxu0 0.0
      %1796 = vmatpush1.msra.mxu0 0.0
      %1797 = vmatprep.subr.mxu0 0.0
      %1798 = vmatpush1.msra.mxu0 0.0
      %1799 = vmatprep.subr.mxu0 0.0
      %1800 = vmatpush1.msra.mxu0 0.0
      %1801 = vmatprep.subr.mxu0 0.0
      %1802 = vmatpush1.msra.mxu0 0.0
      %1803 = vmatprep.subr.mxu0 0.0
      %1804 = vmatpush1.msra.mxu0 0.0
      %1805 = vmatprep.subr.mxu0 0.0
      %1806 = vmatpush1.msra.mxu0 0.0
      %1807 = vmatprep.subr.mxu0 0.0
      %1808 = vmatpush1.msra.mxu0 0.0
      %1809 = vmatprep.mubr.f32.mxu0 0.0
      %1810 = vmatmul.mubr.f32.gmra.mrb[0].mxu0 %v1737
      %v1811 = vpop.f32.mrb[0].mxu0
      %v1812 = vadd.f32 0.0, %v1811
      %v1813 = vpop.f32.mrb[0].mxu0
      %1814 = vmatprep.mubr.f32.mxu0 0.0
      %1815 = vmatmul.mubr.f32.gmra.mrb[0].mxu0 %v1740
      %v1816 = vpop.f32.mrb[0].mxu0
      %v1817 = vadd.f32 0.0, %v1816
      %v1818 = vpop.f32.mrb[0].mxu0
      %1819 = vdwg.mxu0
      %v1820 = vld [vmem:[%s4] sm:$0xff]
      %v1821 = vld [vmem:[%s4 + $0x8] sm:$0xff]
      %v1822 = vld [vmem:[%s4 + $0x10] sm:$0xff]
      %v1823 = vld [vmem:[%s4 + $0x18] sm:$0xff]
      %v1824 = vld [vmem:[%s4 + $0x20] sm:$0xff]
      %v1825 = vld [vmem:[%s4 + $0x28] sm:$0xff]
      %v1826 = vld [vmem:[%s4 + $0x30] sm:$0xff]
      %v1827 = vld [vmem:[%s4 + $0x38] sm:$0xff]
      %v1828 = vld [vmem:[%s5] sm:$0x1]
      %v1830 = vlaneseq
      %v1831 = vshrl.u32 %v1830, 7
      %v1832 = vsub.s32 0, %v1831
      %v1833 = vrot.slane %v1828, %v1832
      %v1836 = vsel %vm1059, %v1812, 0
      %v1839 = vsel %vm1059, %v1817, 0
      %1841 = vmatprep.subr.mxu0 0.0
      %1842 = vmatpush1.msra.mxu0 %v1820
      %1843 = vmatprep.subr.mxu0 0.0
      %1844 = vmatpush1.msra.mxu0 %v1821
      %1845 = vmatprep.subr.mxu0 0.0
      %1846 = vmatpush1.msra.mxu0 %v1822
      %1847 = vmatprep.subr.mxu0 0.0
      %1848 = vmatpush1.msra.mxu0 %v1823
      %1849 = vmatprep.subr.mxu0 0.0
      %1850 = vmatpush1.msra.mxu0 %v1824
      %1851 = vmatprep.subr.mxu0 0.0
      %1852 = vmatpush1.msra.mxu0 %v1825
      %1853 = vmatprep.subr.mxu0 0.0
      %1854 = vmatpush1.msra.mxu0 %v1826
      %1855 = vmatprep.subr.mxu0 0.0
      %1856 = vmatpush1.msra.mxu0 %v1827
      %1857 = vmatprep.subr.mxu0 0.0
      %1858 = vmatpush1.msra.mxu0 0.0
      %1859 = vmatprep.subr.mxu0 0.0
      %1860 = vmatpush1.msra.mxu0 0.0
      %1861 = vmatprep.subr.mxu0 0.0
      %1862 = vmatpush1.msra.mxu0 0.0
      %1863 = vmatprep.subr.mxu0 0.0
      %1864 = vmatpush1.msra.mxu0 0.0
      %1865 = vmatprep.subr.mxu0 0.0
      %1866 = vmatpush1.msra.mxu0 0.0
      %1867 = vmatprep.subr.mxu0 0.0
      %1868 = vmatpush1.msra.mxu0 0.0
      %1869 = vmatprep.subr.mxu0 0.0
      %1870 = vmatpush1.msra.mxu0 0.0
      %1871 = vmatprep.subr.mxu0 0.0
      %1872 = vmatpush1.msra.mxu0 0.0
      %1873 = vmatprep.subr.mxu0 0.0
      %1874 = vmatpush1.msra.mxu0 0.0
      %1875 = vmatprep.subr.mxu0 0.0
      %1876 = vmatpush1.msra.mxu0 0.0
      %1877 = vmatprep.subr.mxu0 0.0
      %1878 = vmatpush1.msra.mxu0 0.0
      %1879 = vmatprep.subr.mxu0 0.0
      %1880 = vmatpush1.msra.mxu0 0.0
      %1881 = vmatprep.subr.mxu0 0.0
      %1882 = vmatpush1.msra.mxu0 0.0
      %1883 = vmatprep.subr.mxu0 0.0
      %1884 = vmatpush1.msra.mxu0 0.0
      %1885 = vmatprep.subr.mxu0 0.0
      %1886 = vmatpush1.msra.mxu0 0.0
      %1887 = vmatprep.subr.mxu0 0.0
      %1888 = vmatpush1.msra.mxu0 0.0
      %1889 = vmatprep.subr.mxu0 0.0
      %1890 = vmatpush1.msra.mxu0 0.0
      %1891 = vmatprep.subr.mxu0 0.0
      %1892 = vmatpush1.msra.mxu0 0.0
      %1893 = vmatprep.subr.mxu0 0.0
      %1894 = vmatpush1.msra.mxu0 0.0
      %1895 = vmatprep.subr.mxu0 0.0
      %1896 = vmatpush1.msra.mxu0 0.0
      %1897 = vmatprep.subr.mxu0 0.0
      %1898 = vmatpush1.msra.mxu0 0.0
      %1899 = vmatprep.subr.mxu0 0.0
      %1900 = vmatpush1.msra.mxu0 0.0
      %1901 = vmatprep.subr.mxu0 0.0
      %1902 = vmatpush1.msra.mxu0 0.0
      %1903 = vmatprep.subr.mxu0 0.0
      %1904 = vmatpush1.msra.mxu0 0.0
      %1905 = vmatprep.mubr.f32.mxu0 0.0
      %1906 = vmatmul.mubr.f32.gmra.mrb[0].mxu0 %v1836
      %v1907 = vpop.f32.mrb[0].mxu0
      %v1908 = vadd.f32 %v1833, %v1907
      %v1909 = vpop.f32.mrb[0].mxu0
      %1910 = vmatprep.mubr.f32.mxu0 0.0
      %1911 = vmatmul.mubr.f32.gmra.mrb[0].mxu0 %v1839
      %v1912 = vpop.f32.mrb[0].mxu0
      %v1913 = vadd.f32 %v1833, %v1912
      %v1914 = vpop.f32.mrb[0].mxu0
      %1915 = vdwg.mxu0
      %v1916 = vmax.f32 %v1908, 0.0
      %v1917 = vmax.f32 %v1913, 0.0
      %v1918 = vld [vmem:[%s9] sm:$0xff]
      %v1919 = vld [vmem:[%s9 + $0x8] sm:$0xff]
      %v1920 = vld [vmem:[%s9 + $0x10] sm:$0xff]
      %v1921 = vld [vmem:[%s9 + $0x18] sm:$0xff]
      %v1922 = vld [vmem:[%s9 + $0x20] sm:$0xff]
      %v1923 = vld [vmem:[%s9 + $0x28] sm:$0xff]
      %v1924 = vmul.f32 %v1918, %v1918
      %v1925 = vmul.f32 %v1919, %v1919
      %v1926 = vmul.f32 %v1920, %v1920
      %v1927 = vmul.f32 %v1921, %v1921
      %v1928 = vmul.f32 %v1922, %v1922
      %v1929 = vmul.f32 %v1923, %v1923
      %v1930 = vsel %vm1031, %v1924, 0.0
      %v1931 = vsel %vm1031, %v1925, 0.0
      %v1932 = vadd.f32 %v1930, %v1931
      %v1933 = vsel %vm1031, %v1926, 0.0
      %v1934 = vadd.f32 %v1932, %v1933
      %v1935 = vsel %vm1031, %v1927, 0.0
      %v1936 = vadd.f32 %v1934, %v1935
      %v1937 = vsel %vm1031, %v1928, 0.0
      %v1938 = vadd.f32 %v1936, %v1937
      %v1939 = vsel %vm1031, %v1929, 0.0
      %v1940 = vadd.f32 %v1938, %v1939
      %1941 = vadd.xlane.f32.xlu0 %v1940
      %v1942 = vpop.xlane.xlu0 %1941
      %v1943 = vrot.slane %v1942, 4
      %v1944 = vadd.f32 %v1942, %v1943
      %v1945 = vrot.slane %v1944, 2
      %v1946 = vadd.f32 %v1944, %v1945
      %v1947 = vrot.slane %v1946, 1
      %v1948 = vadd.f32 %v1946, %v1947
      %s1949 = vtos %v1948
      %v1950 = vstv %s1949
      %v1951 = vrsqrt.pop %v1950
      %s1952 = vtos %v1951
      %vm1953 = vcmask 392192
      %v1955 = vsel %vm1953, %v1916, 0
      %v1958 = vsel %vm1953, %v1917, 0
      %1960 = vmatprep.subr.mxu0 0.0
      %1961 = vmatpush1.msra.mxu0 %v1918
      %1962 = vmatprep.subr.mxu0 0.0
      %1963 = vmatpush1.msra.mxu0 %v1919
      %1964 = vmatprep.subr.mxu0 0.0
      %1965 = vmatpush1.msra.mxu0 %v1920
      %1966 = vmatprep.subr.mxu0 0.0
      %1967 = vmatpush1.msra.mxu0 %v1921
      %1968 = vmatprep.subr.mxu0 0.0
      %1969 = vmatpush1.msra.mxu0 %v1922
      %1970 = vmatprep.subr.mxu0 0.0
      %1971 = vmatpush1.msra.mxu0 %v1923
      %1972 = vmatprep.subr.mxu0 0.0
      %1973 = vmatpush1.msra.mxu0 0.0
      %1974 = vmatprep.subr.mxu0 0.0
      %1975 = vmatpush1.msra.mxu0 0.0
      %1976 = vmatprep.subr.mxu0 0.0
      %1977 = vmatpush1.msra.mxu0 0.0
      %1978 = vmatprep.subr.mxu0 0.0
      %1979 = vmatpush1.msra.mxu0 0.0
      %1980 = vmatprep.subr.mxu0 0.0
      %1981 = vmatpush1.msra.mxu0 0.0
      %1982 = vmatprep.subr.mxu0 0.0
      %1983 = vmatpush1.msra.mxu0 0.0
      %1984 = vmatprep.subr.mxu0 0.0
      %1985 = vmatpush1.msra.mxu0 0.0
      %1986 = vmatprep.subr.mxu0 0.0
      %1987 = vmatpush1.msra.mxu0 0.0
      %1988 = vmatprep.subr.mxu0 0.0
      %1989 = vmatpush1.msra.mxu0 0.0
      %1990 = vmatprep.subr.mxu0 0.0
      %1991 = vmatpush1.msra.mxu0 0.0
      %1992 = vmatprep.subr.mxu0 0.0
      %1993 = vmatpush1.msra.mxu0 0.0
      %1994 = vmatprep.subr.mxu0 0.0
      %1995 = vmatpush1.msra.mxu0 0.0
      %1996 = vmatprep.subr.mxu0 0.0
      %1997 = vmatpush1.msra.mxu0 0.0
      %1998 = vmatprep.subr.mxu0 0.0
      %1999 = vmatpush1.msra.mxu0 0.0
      %2000 = vmatprep.subr.mxu0 0.0
      %2001 = vmatpush1.msra.mxu0 0.0
      %2002 = vmatprep.subr.mxu0 0.0
      %2003 = vmatpush1.msra.mxu0 0.0
      %2004 = vmatprep.subr.mxu0 0.0
      %2005 = vmatpush1.msra.mxu0 0.0
      %2006 = vmatprep.subr.mxu0 0.0
      %2007 = vmatpush1.msra.mxu0 0.0
      %2008 = vmatprep.subr.mxu0 0.0
      %2009 = vmatpush1.msra.mxu0 0.0
      %2010 = vmatprep.subr.mxu0 0.0
      %2011 = vmatpush1.msra.mxu0 0.0
      %2012 = vmatprep.subr.mxu0 0.0
      %2013 = vmatpush1.msra.mxu0 0.0
      %2014 = vmatprep.subr.mxu0 0.0
      %2015 = vmatpush1.msra.mxu0 0.0
      %2016 = vmatprep.subr.mxu0 0.0
      %2017 = vmatpush1.msra.mxu0 0.0
      %2018 = vmatprep.subr.mxu0 0.0
      %2019 = vmatpush1.msra.mxu0 0.0
      %2020 = vmatprep.subr.mxu0 0.0
      %2021 = vmatpush1.msra.mxu0 0.0
      %2022 = vmatprep.subr.mxu0 0.0
      %2023 = vmatpush1.msra.mxu0 0.0
      %2024 = vmatprep.mubr.f32.mxu0 0.0
      %2025 = vmatmul.mubr.f32.gmra.mrb[0].mxu0 %v1955
      %v2026 = vpop.f32.mrb[0].mxu0
      %v2027 = vadd.f32 0.0, %v2026
      %v2028 = vpop.f32.mrb[0].mxu0
      %2029 = vmatprep.mubr.f32.mxu0 0.0
      %2030 = vmatmul.mubr.f32.gmra.mrb[0].mxu0 %v1958
      %v2031 = vpop.f32.mrb[0].mxu0
      %v2032 = vadd.f32 0.0, %v2031
      %v2033 = vpop.f32.mrb[0].mxu0
      %2034 = vdwg.mxu0
      %v2035 = vstv %s1952
      %v2036 = vmul.f32 %v2027, %v2035
      %v2037 = vmul.f32 %v2032, %v2035
      %v2038 = vtanh.pop %v2036
      %v2039 = vtanh.pop %v2037
      %2041 = vset.pattern.permute.xlu0 0
      %2042 = vperm.xlu0 %2041, %v2038
      %v2043 = vpop.permute.xlu0 %2042
      %2046 = vset.pattern.permute.xlu0 0
      %2047 = vperm.xlu0 %2046, %v2039
      %v2048 = vpop.permute.xlu0 %2047
      %v2050 = vmul.f32 %v1155, %v2043
      %v2051 = vmul.f32 %v1156, %v2048
      %v2052 = vsel %vm1547, %v2050, 0.0
      %v2053 = vsel %vm1551, %v2051, 0.0
      %v2054 = vadd.f32 %v2052, %v2053
      %v2055 = vrot.slane %v2054, 4
      %v2056 = vadd.f32 %v2054, %v2055
      %v2057 = vrot.slane %v2056, 2
      %v2058 = vadd.f32 %v2056, %v2057
      %v2059 = vrot.slane %v2058, 1
      %v2060 = vadd.f32 %v2058, %v2059
      %vm2061 = vcmp.gt.f32.partialorder %v2060, %v2043
      %vm2062 = vcmp.gt.f32.partialorder %v2060, %v2048
      %vm2063 = vcmp.eq.f32.partialorder %v2060, %v2043
      %vm2064 = vcmp.eq.f32.partialorder %v2060, %v2048
      %vm2065 = vmand %vm2063, %vm1182
      %vm2066 = vmand %vm2064, %vm1183
      %vm2067 = vmor %vm2061, %vm2065
      %vm2068 = vmor %vm2062, %vm2066
      %v2069 = vsel %vm2067, 1, 0
      %v2070 = vsel %vm2068, 1, 0
      %v2071 = vcvt.s32.f32 %v2069
      %v2072 = vcvt.s32.f32 %v2070
      %v2073 = vsel %vm1547, %v2071, 0.0
      %2074 = vadd.xlane.f32.xlu0 %v2073
      %v2075 = vpop.xlane.xlu0 %2074
      %v2076 = vsel %vm1551, %v2072, 0.0
      %2077 = vadd.xlane.f32.xlu0 %v2076
      %v2078 = vpop.xlane.xlu0 %2077
      %v2079 = vadd.f32 %v2073, %v2076
      %v2080 = vrot.slane %v2079, 4
      %v2081 = vadd.f32 %v2079, %v2080
      %v2082 = vrot.slane %v2081, 2
      %v2083 = vadd.f32 %v2081, %v2082
      %v2084 = vrot.slane %v2083, 1
      %v2085 = vadd.f32 %v2083, %v2084
      %v2086 = vsub.f32 12.0, %v2085
      %vm2087 = vcmp.eq.f32.partialorder %v2086, %v1206
      %vm2088 = vcmp.eq.f32.partialorder %v2086, %v1207
      %v2089 = vsel %vm2087, 1, 0
      %v2090 = vsel %vm2088, 1, 0
      %v2091 = vcvt.s32.f32 %v2089
      %v2092 = vcvt.s32.f32 %v2090
      %vm2093 = vcmp.eq.f32.partialorder %v2075, %v1208
      %vm2094 = vcmp.eq.f32.partialorder %v2078, %v1208
      %v2095 = vsel %vm2093, 1, 0
      %v2096 = vsel %vm2094, 1, 0
      %v2097 = vcvt.s32.f32 %v2095
      %v2098 = vcvt.s32.f32 %v2096
      %v2099 = vmul.f32 %v1916, %v2043
      %v2100 = vmul.f32 %v1917, %v2048
      %v2102 = vsel %vm1547, %v2091, 0
      %v2105 = vsel %vm1547, %v2092, 0
      %v2108 = vsel %vm934, %v2100, 0
      %2110 = vmatprep.subr.mxu0 0.0
      %2111 = vmatpush1.msra.mxu0 %v2099
      %2112 = vmatprep.subr.mxu0 0.0
      %2113 = vmatpush1.msra.mxu0 %v2108
      %2114 = vmatprep.subr.mxu0 0.0
      %2115 = vmatpush1.msra.mxu0 0.0
      %2116 = vmatprep.subr.mxu0 0.0
      %2117 = vmatpush1.msra.mxu0 0.0
      %2118 = vmatprep.subr.mxu0 0.0
      %2119 = vmatpush1.msra.mxu0 0.0
      %2120 = vmatprep.subr.mxu0 0.0
      %2121 = vmatpush1.msra.mxu0 0.0
      %2122 = vmatprep.subr.mxu0 0.0
      %2123 = vmatpush1.msra.mxu0 0.0
      %2124 = vmatprep.subr.mxu0 0.0
      %2125 = vmatpush1.msra.mxu0 0.0
      %2126 = vmatprep.subr.mxu0 0.0
      %2127 = vmatpush1.msra.mxu0 0.0
      %2128 = vmatprep.subr.mxu0 0.0
      %2129 = vmatpush1.msra.mxu0 0.0
      %2130 = vmatprep.subr.mxu0 0.0
      %2131 = vmatpush1.msra.mxu0 0.0
      %2132 = vmatprep.subr.mxu0 0.0
      %2133 = vmatpush1.msra.mxu0 0.0
      %2134 = vmatprep.subr.mxu0 0.0
      %2135 = vmatpush1.msra.mxu0 0.0
      %2136 = vmatprep.subr.mxu0 0.0
      %2137 = vmatpush1.msra.mxu0 0.0
      %2138 = vmatprep.subr.mxu0 0.0
      %2139 = vmatpush1.msra.mxu0 0.0
      %2140 = vmatprep.subr.mxu0 0.0
      %2141 = vmatpush1.msra.mxu0 0.0
      %2142 = vmatprep.subr.mxu0 0.0
      %2143 = vmatpush1.msra.mxu0 0.0
      %2144 = vmatprep.subr.mxu0 0.0
      %2145 = vmatpush1.msra.mxu0 0.0
      %2146 = vmatprep.subr.mxu0 0.0
      %2147 = vmatpush1.msra.mxu0 0.0
      %2148 = vmatprep.subr.mxu0 0.0
      %2149 = vmatpush1.msra.mxu0 0.0
      %2150 = vmatprep.subr.mxu0 0.0
      %2151 = vmatpush1.msra.mxu0 0.0
      %2152 = vmatprep.subr.mxu0 0.0
      %2153 = vmatpush1.msra.mxu0 0.0
      %2154 = vmatprep.subr.mxu0 0.0
      %2155 = vmatpush1.msra.mxu0 0.0
      %2156 = vmatprep.subr.mxu0 0.0
      %2157 = vmatpush1.msra.mxu0 0.0
      %2158 = vmatprep.subr.mxu0 0.0
      %2159 = vmatpush1.msra.mxu0 0.0
      %2160 = vmatprep.subr.mxu0 0.0
      %2161 = vmatpush1.msra.mxu0 0.0
      %2162 = vmatprep.subr.mxu0 0.0
      %2163 = vmatpush1.msra.mxu0 0.0
      %2164 = vmatprep.subr.mxu0 0.0
      %2165 = vmatpush1.msra.mxu0 0.0
      %2166 = vmatprep.subr.mxu0 0.0
      %2167 = vmatpush1.msra.mxu0 0.0
      %2168 = vmatprep.subr.mxu0 0.0
      %2169 = vmatpush1.msra.mxu0 0.0
      %2170 = vmatprep.subr.mxu0 0.0
      %2171 = vmatpush1.msra.mxu0 0.0
      %2172 = vmatprep.subr.mxu0 0.0
      %2173 = vmatpush1.msra.mxu0 0.0
      %2174 = vmatprep.mubr.f32.mxu0 0.0
      %2175 = vmatmul.mubr.f32.gmra.mrb[0].mxu0 %v2102
      %v2176 = vpop.f32.mrb[0].mxu0
      %v2177 = vadd.f32 0.0, %v2176
      %v2178 = vpop.f32.mrb[0].mxu0
      %2179 = vmatprep.mubr.f32.mxu0 0.0
      %2180 = vmatmul.mubr.f32.gmra.mrb[0].mxu0 %v2105
      %v2181 = vpop.f32.mrb[0].mxu0
      %v2182 = vadd.f32 0.0, %v2181
      %v2183 = vpop.f32.mrb[0].mxu0
      %2184 = vdwg.mxu0
      %v2186 = vsel %vm934, %v1546, 0
      %2188 = vmatprep.subr.mxu0 0.0
      %2189 = vmatpush1.msra.mxu0 %v1545
      %2190 = vmatprep.subr.mxu0 0.0
      %2191 = vmatpush1.msra.mxu0 %v2186
      %2192 = vmatprep.subr.mxu0 0.0
      %2193 = vmatpush1.msra.mxu0 0.0
      %2194 = vmatprep.subr.mxu0 0.0
      %2195 = vmatpush1.msra.mxu0 0.0
      %2196 = vmatprep.subr.mxu0 0.0
      %2197 = vmatpush1.msra.mxu0 0.0
      %2198 = vmatprep.subr.mxu0 0.0
      %2199 = vmatpush1.msra.mxu0 0.0
      %2200 = vmatprep.subr.mxu0 0.0
      %2201 = vmatpush1.msra.mxu0 0.0
      %2202 = vmatprep.subr.mxu0 0.0
      %2203 = vmatpush1.msra.mxu0 0.0
      %2204 = vmatprep.subr.mxu0 0.0
      %2205 = vmatpush1.msra.mxu0 0.0
      %2206 = vmatprep.subr.mxu0 0.0
      %2207 = vmatpush1.msra.mxu0 0.0
      %2208 = vmatprep.subr.mxu0 0.0
      %2209 = vmatpush1.msra.mxu0 0.0
      %2210 = vmatprep.subr.mxu0 0.0
      %2211 = vmatpush1.msra.mxu0 0.0
      %2212 = vmatprep.subr.mxu0 0.0
      %2213 = vmatpush1.msra.mxu0 0.0
      %2214 = vmatprep.subr.mxu0 0.0
      %2215 = vmatpush1.msra.mxu0 0.0
      %2216 = vmatprep.subr.mxu0 0.0
      %2217 = vmatpush1.msra.mxu0 0.0
      %2218 = vmatprep.subr.mxu0 0.0
      %2219 = vmatpush1.msra.mxu0 0.0
      %2220 = vmatprep.subr.mxu0 0.0
      %2221 = vmatpush1.msra.mxu0 0.0
      %2222 = vmatprep.subr.mxu0 0.0
      %2223 = vmatpush1.msra.mxu0 0.0
      %2224 = vmatprep.subr.mxu0 0.0
      %2225 = vmatpush1.msra.mxu0 0.0
      %2226 = vmatprep.subr.mxu0 0.0
      %2227 = vmatpush1.msra.mxu0 0.0
      %2228 = vmatprep.subr.mxu0 0.0
      %2229 = vmatpush1.msra.mxu0 0.0
      %2230 = vmatprep.subr.mxu0 0.0
      %2231 = vmatpush1.msra.mxu0 0.0
      %2232 = vmatprep.subr.mxu0 0.0
      %2233 = vmatpush1.msra.mxu0 0.0
      %2234 = vmatprep.subr.mxu0 0.0
      %2235 = vmatpush1.msra.mxu0 0.0
      %2236 = vmatprep.subr.mxu0 0.0
      %2237 = vmatpush1.msra.mxu0 0.0
      %2238 = vmatprep.subr.mxu0 0.0
      %2239 = vmatpush1.msra.mxu0 0.0
      %2240 = vmatprep.subr.mxu0 0.0
      %2241 = vmatpush1.msra.mxu0 0.0
      %2242 = vmatprep.subr.mxu0 0.0
      %2243 = vmatpush1.msra.mxu0 0.0
      %2244 = vmatprep.subr.mxu0 0.0
      %2245 = vmatpush1.msra.mxu0 0.0
      %2246 = vmatprep.subr.mxu0 0.0
      %2247 = vmatpush1.msra.mxu0 0.0
      %2248 = vmatprep.subr.mxu0 0.0
      %2249 = vmatpush1.msra.mxu0 0.0
      %2250 = vmatprep.subr.mxu0 0.0
      %2251 = vmatpush1.msra.mxu0 0.0
      %2252 = vmatprep.mubr.f32.mxu0 0.0
      %2253 = vmatmul.mubr.f32.gmra.mrb[0].mxu0 %v2102
      %v2254 = vpop.f32.mrb[0].mxu0
      %v2255 = vadd.f32 0.0, %v2254
      %v2256 = vpop.f32.mrb[0].mxu0
      %2257 = vmatprep.mubr.f32.mxu0 0.0
      %2258 = vmatmul.mubr.f32.gmra.mrb[0].mxu0 %v2105
      %v2259 = vpop.f32.mrb[0].mxu0
      %v2260 = vadd.f32 0.0, %v2259
      %v2261 = vpop.f32.mrb[0].mxu0
      %2262 = vdwg.mxu0
      %v2264 = vsel %vm1547, %v1545, 0
      %v2266 = vsel %vm1547, %v1546, 0
      %v2269 = vsel %vm934, %v2098, 0
      %2271 = vmatprep.subr.mxu0 0.0
      %2272 = vmatpush1.msra.mxu0 %v2097
      %2273 = vmatprep.subr.mxu0 0.0
      %2274 = vmatpush1.msra.mxu0 %v2269
      %2275 = vmatprep.subr.mxu0 0.0
      %2276 = vmatpush1.msra.mxu0 0.0
      %2277 = vmatprep.subr.mxu0 0.0
      %2278 = vmatpush1.msra.mxu0 0.0
      %2279 = vmatprep.subr.mxu0 0.0
      %2280 = vmatpush1.msra.mxu0 0.0
      %2281 = vmatprep.subr.mxu0 0.0
      %2282 = vmatpush1.msra.mxu0 0.0
      %2283 = vmatprep.subr.mxu0 0.0
      %2284 = vmatpush1.msra.mxu0 0.0
      %2285 = vmatprep.subr.mxu0 0.0
      %2286 = vmatpush1.msra.mxu0 0.0
      %2287 = vmatprep.subr.mxu0 0.0
      %2288 = vmatpush1.msra.mxu0 0.0
      %2289 = vmatprep.subr.mxu0 0.0
      %2290 = vmatpush1.msra.mxu0 0.0
      %2291 = vmatprep.subr.mxu0 0.0
      %2292 = vmatpush1.msra.mxu0 0.0
      %2293 = vmatprep.subr.mxu0 0.0
      %2294 = vmatpush1.msra.mxu0 0.0
      %2295 = vmatprep.subr.mxu0 0.0
      %2296 = vmatpush1.msra.mxu0 0.0
      %2297 = vmatprep.subr.mxu0 0.0
      %2298 = vmatpush1.msra.mxu0 0.0
      %2299 = vmatprep.subr.mxu0 0.0
      %2300 = vmatpush1.msra.mxu0 0.0
      %2301 = vmatprep.subr.mxu0 0.0
      %2302 = vmatpush1.msra.mxu0 0.0
      %2303 = vmatprep.subr.mxu0 0.0
      %2304 = vmatpush1.msra.mxu0 0.0
      %2305 = vmatprep.subr.mxu0 0.0
      %2306 = vmatpush1.msra.mxu0 0.0
      %2307 = vmatprep.subr.mxu0 0.0
      %2308 = vmatpush1.msra.mxu0 0.0
      %2309 = vmatprep.subr.mxu0 0.0
      %2310 = vmatpush1.msra.mxu0 0.0
      %2311 = vmatprep.subr.mxu0 0.0
      %2312 = vmatpush1.msra.mxu0 0.0
      %2313 = vmatprep.subr.mxu0 0.0
      %2314 = vmatpush1.msra.mxu0 0.0
      %2315 = vmatprep.subr.mxu0 0.0
      %2316 = vmatpush1.msra.mxu0 0.0
      %2317 = vmatprep.subr.mxu0 0.0
      %2318 = vmatpush1.msra.mxu0 0.0
      %2319 = vmatprep.subr.mxu0 0.0
      %2320 = vmatpush1.msra.mxu0 0.0
      %2321 = vmatprep.subr.mxu0 0.0
      %2322 = vmatpush1.msra.mxu0 0.0
      %2323 = vmatprep.subr.mxu0 0.0
      %2324 = vmatpush1.msra.mxu0 0.0
      %2325 = vmatprep.subr.mxu0 0.0
      %2326 = vmatpush1.msra.mxu0 0.0
      %2327 = vmatprep.subr.mxu0 0.0
      %2328 = vmatpush1.msra.mxu0 0.0
      %2329 = vmatprep.subr.mxu0 0.0
      %2330 = vmatpush1.msra.mxu0 0.0
      %2331 = vmatprep.subr.mxu0 0.0
      %2332 = vmatpush1.msra.mxu0 0.0
      %2333 = vmatprep.subr.mxu0 0.0
      %2334 = vmatpush1.msra.mxu0 0.0
      %2335 = vmatprep.mubr.f32.mxu0 0.0
      %2336 = vmatmul.mubr.f32.gmra.mrb[0].mxu0 %v2264
      %v2337 = vpop.f32.mrb[0].mxu0
      %v2338 = vadd.f32 0.0, %v2337
      %v2339 = vpop.f32.mrb[0].mxu0
      %2340 = vmatprep.mubr.f32.mxu0 0.0
      %2341 = vmatmul.mubr.f32.gmra.mrb[0].mxu0 %v2266
      %v2342 = vpop.f32.mrb[0].mxu0
      %v2343 = vadd.f32 0.0, %v2342
      %v2344 = vpop.f32.mrb[0].mxu0
      %2345 = vdwg.mxu0
      %v2347 = vsel %vm1547, %v2255, 0
      %v2350 = vsel %vm1547, %v2260, 0
      %v2353 = vsel %vm934, %v2343, 0
      %2355 = vmatprep.subr.mxu0 0.0
      %2356 = vmatpush1.msra.mxu0 %v2338
      %2357 = vmatprep.subr.mxu0 0.0
      %2358 = vmatpush1.msra.mxu0 %v2353
      %2359 = vmatprep.subr.mxu0 0.0
      %2360 = vmatpush1.msra.mxu0 0.0
      %2361 = vmatprep.subr.mxu0 0.0
      %2362 = vmatpush1.msra.mxu0 0.0
      %2363 = vmatprep.subr.mxu0 0.0
      %2364 = vmatpush1.msra.mxu0 0.0
      %2365 = vmatprep.subr.mxu0 0.0
      %2366 = vmatpush1.msra.mxu0 0.0
      %2367 = vmatprep.subr.mxu0 0.0
      %2368 = vmatpush1.msra.mxu0 0.0
      %2369 = vmatprep.subr.mxu0 0.0
      %2370 = vmatpush1.msra.mxu0 0.0
      %2371 = vmatprep.subr.mxu0 0.0
      %2372 = vmatpush1.msra.mxu0 0.0
      %2373 = vmatprep.subr.mxu0 0.0
      %2374 = vmatpush1.msra.mxu0 0.0
      %2375 = vmatprep.subr.mxu0 0.0
      %2376 = vmatpush1.msra.mxu0 0.0
      %2377 = vmatprep.subr.mxu0 0.0
      %2378 = vmatpush1.msra.mxu0 0.0
      %2379 = vmatprep.subr.mxu0 0.0
      %2380 = vmatpush1.msra.mxu0 0.0
      %2381 = vmatprep.subr.mxu0 0.0
      %2382 = vmatpush1.msra.mxu0 0.0
      %2383 = vmatprep.subr.mxu0 0.0
      %2384 = vmatpush1.msra.mxu0 0.0
      %2385 = vmatprep.subr.mxu0 0.0
      %2386 = vmatpush1.msra.mxu0 0.0
      %2387 = vmatprep.subr.mxu0 0.0
      %2388 = vmatpush1.msra.mxu0 0.0
      %2389 = vmatprep.subr.mxu0 0.0
      %2390 = vmatpush1.msra.mxu0 0.0
      %2391 = vmatprep.subr.mxu0 0.0
      %2392 = vmatpush1.msra.mxu0 0.0
      %2393 = vmatprep.subr.mxu0 0.0
      %2394 = vmatpush1.msra.mxu0 0.0
      %2395 = vmatprep.subr.mxu0 0.0
      %2396 = vmatpush1.msra.mxu0 0.0
      %2397 = vmatprep.subr.mxu0 0.0
      %2398 = vmatpush1.msra.mxu0 0.0
      %2399 = vmatprep.subr.mxu0 0.0
      %2400 = vmatpush1.msra.mxu0 0.0
      %2401 = vmatprep.subr.mxu0 0.0
      %2402 = vmatpush1.msra.mxu0 0.0
      %2403 = vmatprep.subr.mxu0 0.0
      %2404 = vmatpush1.msra.mxu0 0.0
      %2405 = vmatprep.subr.mxu0 0.0
      %2406 = vmatpush1.msra.mxu0 0.0
      %2407 = vmatprep.subr.mxu0 0.0
      %2408 = vmatpush1.msra.mxu0 0.0
      %2409 = vmatprep.subr.mxu0 0.0
      %2410 = vmatpush1.msra.mxu0 0.0
      %2411 = vmatprep.subr.mxu0 0.0
      %2412 = vmatpush1.msra.mxu0 0.0
      %2413 = vmatprep.subr.mxu0 0.0
      %2414 = vmatpush1.msra.mxu0 0.0
      %2415 = vmatprep.subr.mxu0 0.0
      %2416 = vmatpush1.msra.mxu0 0.0
      %2417 = vmatprep.subr.mxu0 0.0
      %2418 = vmatpush1.msra.mxu0 0.0
      %2419 = vmatprep.mubr.f32.mxu0 0.0
      %2420 = vmatmul.mubr.f32.gmra.mrb[0].mxu0 %v2347
      %v2421 = vpop.f32.mrb[0].mxu0
      %v2422 = vadd.f32 0.0, %v2421
      %v2423 = vpop.f32.mrb[0].mxu0
      %2424 = vmatprep.mubr.f32.mxu0 0.0
      %2425 = vmatmul.mubr.f32.gmra.mrb[0].mxu0 %v2350
      %v2426 = vpop.f32.mrb[0].mxu0
      %v2427 = vadd.f32 0.0, %v2426
      %v2428 = vpop.f32.mrb[0].mxu0
      %2429 = vdwg.mxu0
      %vm2430 = vcmp.gt.f32.partialorder %v2422, 0.5
      %vm2431 = vcmp.gt.f32.partialorder %v2427, 0.5
      %v2432 = vsel %vm2430, 1, 0
      %v2433 = vsel %vm2431, 1, 0
      %v2434 = vcvt.s32.f32 %v2432
      %v2435 = vcvt.s32.f32 %v2433
      %vm2436 = vcmask 89088
      %v2437 = vsel %vm2436, %v2434, 0.0
      %2438 = vadd.xlane.f32.xlu0 %v2437
      %v2439 = vpop.xlane.xlu0 %2438
      %vm2440 = vcmask 83968
      %v2441 = vsel %vm2440, %v2435, 0.0
      %2442 = vadd.xlane.f32.xlu0 %v2441
      %v2443 = vpop.xlane.xlu0 %2442
      %v2444 = vmax.f32 %v2439, 1.0
      %v2445 = vmax.f32 %v2443, 1.0
      %v2446 = vrsqrt.pop %v2444
      %v2447 = vrsqrt.pop %v2445
      %v2448 = vadd.f32 %v2437, %v2441
      %v2449 = vrot.slane %v2448, 4
      %v2450 = vadd.f32 %v2448, %v2449
      %v2451 = vrot.slane %v2450, 2
      %v2452 = vadd.f32 %v2450, %v2451
      %v2453 = vrot.slane %v2452, 1
      %v2454 = vadd.f32 %v2452, %v2453
      %v2455 = vmax.f32 %v2454, 1.0
      %v2456 = vrsqrt.pop %v2455
      %v2457 = vmul.f32 %v2446, %v2434
      %v2458 = vmul.f32 %v2447, %v2435
      %v2459 = vmul.f32 %v2457, %v2456
      %v2460 = vmul.f32 %v2458, %v2456
      %v2462 = vsel %vm2436, %v2459, 0
      %v2465 = vsel %vm2436, %v2460, 0
      %vm2467 = vcmask 1042432
      %v2468 = vsel %vm2467, %v2460, 0
      %2470 = vmatprep.subr.mxu0 0.0
      %2471 = vmatpush1.msra.mxu0 %v2459
      %2472 = vmatprep.subr.mxu0 0.0
      %2473 = vmatpush1.msra.mxu0 %v2468
      %2474 = vmatprep.subr.mxu0 0.0
      %2475 = vmatpush1.msra.mxu0 0.0
      %2476 = vmatprep.subr.mxu0 0.0
      %2477 = vmatpush1.msra.mxu0 0.0
      %2478 = vmatprep.subr.mxu0 0.0
      %2479 = vmatpush1.msra.mxu0 0.0
      %2480 = vmatprep.subr.mxu0 0.0
      %2481 = vmatpush1.msra.mxu0 0.0
      %2482 = vmatprep.subr.mxu0 0.0
      %2483 = vmatpush1.msra.mxu0 0.0
      %2484 = vmatprep.subr.mxu0 0.0
      %2485 = vmatpush1.msra.mxu0 0.0
      %2486 = vmatprep.subr.mxu0 0.0
      %2487 = vmatpush1.msra.mxu0 0.0
      %2488 = vmatprep.subr.mxu0 0.0
      %2489 = vmatpush1.msra.mxu0 0.0
      %2490 = vmatprep.subr.mxu0 0.0
      %2491 = vmatpush1.msra.mxu0 0.0
      %2492 = vmatprep.subr.mxu0 0.0
      %2493 = vmatpush1.msra.mxu0 0.0
      %2494 = vmatprep.subr.mxu0 0.0
      %2495 = vmatpush1.msra.mxu0 0.0
      %2496 = vmatprep.subr.mxu0 0.0
      %2497 = vmatpush1.msra.mxu0 0.0
      %2498 = vmatprep.subr.mxu0 0.0
      %2499 = vmatpush1.msra.mxu0 0.0
      %2500 = vmatprep.subr.mxu0 0.0
      %2501 = vmatpush1.msra.mxu0 0.0
      %2502 = vmatprep.subr.mxu0 0.0
      %2503 = vmatpush1.msra.mxu0 0.0
      %2504 = vmatprep.subr.mxu0 0.0
      %2505 = vmatpush1.msra.mxu0 0.0
      %2506 = vmatprep.subr.mxu0 0.0
      %2507 = vmatpush1.msra.mxu0 0.0
      %2508 = vmatprep.subr.mxu0 0.0
      %2509 = vmatpush1.msra.mxu0 0.0
      %2510 = vmatprep.subr.mxu0 0.0
      %2511 = vmatpush1.msra.mxu0 0.0
      %2512 = vmatprep.subr.mxu0 0.0
      %2513 = vmatpush1.msra.mxu0 0.0
      %2514 = vmatprep.subr.mxu0 0.0
      %2515 = vmatpush1.msra.mxu0 0.0
      %2516 = vmatprep.subr.mxu0 0.0
      %2517 = vmatpush1.msra.mxu0 0.0
      %2518 = vmatprep.subr.mxu0 0.0
      %2519 = vmatpush1.msra.mxu0 0.0
      %2520 = vmatprep.subr.mxu0 0.0
      %2521 = vmatpush1.msra.mxu0 0.0
      %2522 = vmatprep.subr.mxu0 0.0
      %2523 = vmatpush1.msra.mxu0 0.0
      %2524 = vmatprep.subr.mxu0 0.0
      %2525 = vmatpush1.msra.mxu0 0.0
      %2526 = vmatprep.subr.mxu0 0.0
      %2527 = vmatpush1.msra.mxu0 0.0
      %2528 = vmatprep.subr.mxu0 0.0
      %2529 = vmatpush1.msra.mxu0 0.0
      %2530 = vmatprep.subr.mxu0 0.0
      %2531 = vmatpush1.msra.mxu0 0.0
      %2532 = vmatprep.subr.mxu0 0.0
      %2533 = vmatpush1.msra.mxu0 0.0
      %2534 = vmatprep.mubr.f32.mxu0 0.0
      %2535 = vmatmul.mubr.f32.gmra.mrb[0].mxu0 %v2462
      %v2536 = vpop.f32.mrb[0].mxu0
      %v2537 = vadd.f32 0.0, %v2536
      %v2538 = vpop.f32.mrb[0].mxu0
      %2539 = vmatprep.mubr.f32.mxu0 0.0
      %2540 = vmatmul.mubr.f32.gmra.mrb[0].mxu0 %v2465
      %v2541 = vpop.f32.mrb[0].mxu0
      %v2542 = vadd.f32 0.0, %v2541
      %v2543 = vpop.f32.mrb[0].mxu0
      %2544 = vdwg.mxu0
      %v2546 = vsel %vm2436, %v2537, 0
      %v2549 = vsel %vm2436, %v2542, 0
      %2551 = vmatprep.subr.mxu0 0.0
      %2552 = vmatpush1.msra.mxu0 %v2459
      %2553 = vmatprep.subr.mxu0 0.0
      %2554 = vmatpush1.msra.mxu0 %v2468
      %2555 = vmatprep.subr.mxu0 0.0
      %2556 = vmatpush1.msra.mxu0 0.0
      %2557 = vmatprep.subr.mxu0 0.0
      %2558 = vmatpush1.msra.mxu0 0.0
      %2559 = vmatprep.subr.mxu0 0.0
      %2560 = vmatpush1.msra.mxu0 0.0
      %2561 = vmatprep.subr.mxu0 0.0
      %2562 = vmatpush1.msra.mxu0 0.0
      %2563 = vmatprep.subr.mxu0 0.0
      %2564 = vmatpush1.msra.mxu0 0.0
      %2565 = vmatprep.subr.mxu0 0.0
      %2566 = vmatpush1.msra.mxu0 0.0
      %2567 = vmatprep.subr.mxu0 0.0
      %2568 = vmatpush1.msra.mxu0 0.0
      %2569 = vmatprep.subr.mxu0 0.0
      %2570 = vmatpush1.msra.mxu0 0.0
      %2571 = vmatprep.subr.mxu0 0.0
      %2572 = vmatpush1.msra.mxu0 0.0
      %2573 = vmatprep.subr.mxu0 0.0
      %2574 = vmatpush1.msra.mxu0 0.0
      %2575 = vmatprep.subr.mxu0 0.0
      %2576 = vmatpush1.msra.mxu0 0.0
      %2577 = vmatprep.subr.mxu0 0.0
      %2578 = vmatpush1.msra.mxu0 0.0
      %2579 = vmatprep.subr.mxu0 0.0
      %2580 = vmatpush1.msra.mxu0 0.0
      %2581 = vmatprep.subr.mxu0 0.0
      %2582 = vmatpush1.msra.mxu0 0.0
      %2583 = vmatprep.subr.mxu0 0.0
      %2584 = vmatpush1.msra.mxu0 0.0
      %2585 = vmatprep.subr.mxu0 0.0
      %2586 = vmatpush1.msra.mxu0 0.0
      %2587 = vmatprep.subr.mxu0 0.0
      %2588 = vmatpush1.msra.mxu0 0.0
      %2589 = vmatprep.subr.mxu0 0.0
      %2590 = vmatpush1.msra.mxu0 0.0
      %2591 = vmatprep.subr.mxu0 0.0
      %2592 = vmatpush1.msra.mxu0 0.0
      %2593 = vmatprep.subr.mxu0 0.0
      %2594 = vmatpush1.msra.mxu0 0.0
      %2595 = vmatprep.subr.mxu0 0.0
      %2596 = vmatpush1.msra.mxu0 0.0
      %2597 = vmatprep.subr.mxu0 0.0
      %2598 = vmatpush1.msra.mxu0 0.0
      %2599 = vmatprep.subr.mxu0 0.0
      %2600 = vmatpush1.msra.mxu0 0.0
      %2601 = vmatprep.subr.mxu0 0.0
      %2602 = vmatpush1.msra.mxu0 0.0
      %2603 = vmatprep.subr.mxu0 0.0
      %2604 = vmatpush1.msra.mxu0 0.0
      %2605 = vmatprep.subr.mxu0 0.0
      %2606 = vmatpush1.msra.mxu0 0.0
      %2607 = vmatprep.subr.mxu0 0.0
      %2608 = vmatpush1.msra.mxu0 0.0
      %2609 = vmatprep.subr.mxu0 0.0
      %2610 = vmatpush1.msra.mxu0 0.0
      %2611 = vmatprep.subr.mxu0 0.0
      %2612 = vmatpush1.msra.mxu0 0.0
      %2613 = vmatprep.subr.mxu0 0.0
      %2614 = vmatpush1.msra.mxu0 0.0
      %2615 = vmatprep.mubr.f32.mxu0 0.0
      %2616 = vmatmul.mubr.f32.gmra.mrb[0].mxu0 %v2546
      %v2617 = vpop.f32.mrb[0].mxu0
      %v2618 = vadd.f32 0.0, %v2617
      %v2619 = vpop.f32.mrb[0].mxu0
      %2620 = vmatprep.mubr.f32.mxu0 0.0
      %2621 = vmatmul.mubr.f32.gmra.mrb[0].mxu0 %v2549
      %v2622 = vpop.f32.mrb[0].mxu0
      %v2623 = vadd.f32 0.0, %v2622
      %v2624 = vpop.f32.mrb[0].mxu0
      %2625 = vdwg.mxu0
      %v2627 = vsel %vm2436, %v2618, 0
      %v2630 = vsel %vm2436, %v2623, 0
      %v2633 = vsel %vm2467, %v2182, 0
      %2635 = vmatprep.subr.mxu0 0.0
      %2636 = vmatpush1.msra.mxu0 %v2177
      %2637 = vmatprep.subr.mxu0 0.0
      %2638 = vmatpush1.msra.mxu0 %v2633
      %2639 = vmatprep.subr.mxu0 0.0
      %2640 = vmatpush1.msra.mxu0 0.0
      %2641 = vmatprep.subr.mxu0 0.0
      %2642 = vmatpush1.msra.mxu0 0.0
      %2643 = vmatprep.subr.mxu0 0.0
      %2644 = vmatpush1.msra.mxu0 0.0
      %2645 = vmatprep.subr.mxu0 0.0
      %2646 = vmatpush1.msra.mxu0 0.0
      %2647 = vmatprep.subr.mxu0 0.0
      %2648 = vmatpush1.msra.mxu0 0.0
      %2649 = vmatprep.subr.mxu0 0.0
      %2650 = vmatpush1.msra.mxu0 0.0
      %2651 = vmatprep.subr.mxu0 0.0
      %2652 = vmatpush1.msra.mxu0 0.0
      %2653 = vmatprep.subr.mxu0 0.0
      %2654 = vmatpush1.msra.mxu0 0.0
      %2655 = vmatprep.subr.mxu0 0.0
      %2656 = vmatpush1.msra.mxu0 0.0
      %2657 = vmatprep.subr.mxu0 0.0
      %2658 = vmatpush1.msra.mxu0 0.0
      %2659 = vmatprep.subr.mxu0 0.0
      %2660 = vmatpush1.msra.mxu0 0.0
      %2661 = vmatprep.subr.mxu0 0.0
      %2662 = vmatpush1.msra.mxu0 0.0
      %2663 = vmatprep.subr.mxu0 0.0
      %2664 = vmatpush1.msra.mxu0 0.0
      %2665 = vmatprep.subr.mxu0 0.0
      %2666 = vmatpush1.msra.mxu0 0.0
      %2667 = vmatprep.subr.mxu0 0.0
      %2668 = vmatpush1.msra.mxu0 0.0
      %2669 = vmatprep.subr.mxu0 0.0
      %2670 = vmatpush1.msra.mxu0 0.0
      %2671 = vmatprep.subr.mxu0 0.0
      %2672 = vmatpush1.msra.mxu0 0.0
      %2673 = vmatprep.subr.mxu0 0.0
      %2674 = vmatpush1.msra.mxu0 0.0
      %2675 = vmatprep.subr.mxu0 0.0
      %2676 = vmatpush1.msra.mxu0 0.0
      %2677 = vmatprep.subr.mxu0 0.0
      %2678 = vmatpush1.msra.mxu0 0.0
      %2679 = vmatprep.subr.mxu0 0.0
      %2680 = vmatpush1.msra.mxu0 0.0
      %2681 = vmatprep.subr.mxu0 0.0
      %2682 = vmatpush1.msra.mxu0 0.0
      %2683 = vmatprep.subr.mxu0 0.0
      %2684 = vmatpush1.msra.mxu0 0.0
      %2685 = vmatprep.subr.mxu0 0.0
      %2686 = vmatpush1.msra.mxu0 0.0
      %2687 = vmatprep.subr.mxu0 0.0
      %2688 = vmatpush1.msra.mxu0 0.0
      %2689 = vmatprep.subr.mxu0 0.0
      %2690 = vmatpush1.msra.mxu0 0.0
      %2691 = vmatprep.subr.mxu0 0.0
      %2692 = vmatpush1.msra.mxu0 0.0
      %2693 = vmatprep.subr.mxu0 0.0
      %2694 = vmatpush1.msra.mxu0 0.0
      %2695 = vmatprep.subr.mxu0 0.0
      %2696 = vmatpush1.msra.mxu0 0.0
      %2697 = vmatprep.subr.mxu0 0.0
      %2698 = vmatpush1.msra.mxu0 0.0
      %2699 = vmatprep.mubr.f32.mxu0 0.0
      %2700 = vmatmul.mubr.f32.gmra.mrb[0].mxu0 %v2627
      %v2701 = vpop.f32.mrb[0].mxu0
      %v2702 = vadd.f32 0.0, %v2701
      %v2703 = vpop.f32.mrb[0].mxu0
      %2704 = vmatprep.mubr.f32.mxu0 0.0
      %2705 = vmatmul.mubr.f32.gmra.mrb[0].mxu0 %v2630
      %v2706 = vpop.f32.mrb[0].mxu0
      %v2707 = vadd.f32 0.0, %v2706
      %v2708 = vpop.f32.mrb[0].mxu0
      %2709 = vdwg.mxu0
      %v2710 = vld [vmem:[%s6] sm:$0xff]
      %v2711 = vld [vmem:[%s6 + $0x8] sm:$0xff]
      %v2712 = vld [vmem:[%s6 + $0x10] sm:$0xff]
      %v2713 = vld [vmem:[%s6 + $0x18] sm:$0xff]
      %v2714 = vld [vmem:[%s6 + $0x20] sm:$0xff]
      %v2715 = vld [vmem:[%s6 + $0x28] sm:$0xff]
      %v2716 = vld [vmem:[%s7] sm:$0x1]
      %v2718 = vlaneseq
      %v2719 = vshrl.u32 %v2718, 7
      %v2720 = vsub.s32 0, %v2719
      %v2721 = vrot.slane %v2716, %v2720
      %v2724 = vsel %vm1953, %v2702, 0
      %v2727 = vsel %vm1953, %v2707, 0
      %2729 = vmatprep.subr.mxu0 0.0
      %2730 = vmatpush1.msra.mxu0 %v2710
      %2731 = vmatprep.subr.mxu0 0.0
      %2732 = vmatpush1.msra.mxu0 %v2711
      %2733 = vmatprep.subr.mxu0 0.0
      %2734 = vmatpush1.msra.mxu0 %v2712
      %2735 = vmatprep.subr.mxu0 0.0
      %2736 = vmatpush1.msra.mxu0 %v2713
      %2737 = vmatprep.subr.mxu0 0.0
      %2738 = vmatpush1.msra.mxu0 %v2714
      %2739 = vmatprep.subr.mxu0 0.0
      %2740 = vmatpush1.msra.mxu0 %v2715
      %2741 = vmatprep.subr.mxu0 0.0
      %2742 = vmatpush1.msra.mxu0 0.0
      %2743 = vmatprep.subr.mxu0 0.0
      %2744 = vmatpush1.msra.mxu0 0.0
      %2745 = vmatprep.subr.mxu0 0.0
      %2746 = vmatpush1.msra.mxu0 0.0
      %2747 = vmatprep.subr.mxu0 0.0
      %2748 = vmatpush1.msra.mxu0 0.0
      %2749 = vmatprep.subr.mxu0 0.0
      %2750 = vmatpush1.msra.mxu0 0.0
      %2751 = vmatprep.subr.mxu0 0.0
      %2752 = vmatpush1.msra.mxu0 0.0
      %2753 = vmatprep.subr.mxu0 0.0
      %2754 = vmatpush1.msra.mxu0 0.0
      %2755 = vmatprep.subr.mxu0 0.0
      %2756 = vmatpush1.msra.mxu0 0.0
      %2757 = vmatprep.subr.mxu0 0.0
      %2758 = vmatpush1.msra.mxu0 0.0
      %2759 = vmatprep.subr.mxu0 0.0
      %2760 = vmatpush1.msra.mxu0 0.0
      %2761 = vmatprep.subr.mxu0 0.0
      %2762 = vmatpush1.msra.mxu0 0.0
      %2763 = vmatprep.subr.mxu0 0.0
      %2764 = vmatpush1.msra.mxu0 0.0
      %2765 = vmatprep.subr.mxu0 0.0
      %2766 = vmatpush1.msra.mxu0 0.0
      %2767 = vmatprep.subr.mxu0 0.0
      %2768 = vmatpush1.msra.mxu0 0.0
      %2769 = vmatprep.subr.mxu0 0.0
      %2770 = vmatpush1.msra.mxu0 0.0
      %2771 = vmatprep.subr.mxu0 0.0
      %2772 = vmatpush1.msra.mxu0 0.0
      %2773 = vmatprep.subr.mxu0 0.0
      %2774 = vmatpush1.msra.mxu0 0.0
      %2775 = vmatprep.subr.mxu0 0.0
      %2776 = vmatpush1.msra.mxu0 0.0
      %2777 = vmatprep.subr.mxu0 0.0
      %2778 = vmatpush1.msra.mxu0 0.0
      %2779 = vmatprep.subr.mxu0 0.0
      %2780 = vmatpush1.msra.mxu0 0.0
      %2781 = vmatprep.subr.mxu0 0.0
      %2782 = vmatpush1.msra.mxu0 0.0
      %2783 = vmatprep.subr.mxu0 0.0
      %2784 = vmatpush1.msra.mxu0 0.0
      %2785 = vmatprep.subr.mxu0 0.0
      %2786 = vmatpush1.msra.mxu0 0.0
      %2787 = vmatprep.subr.mxu0 0.0
      %2788 = vmatpush1.msra.mxu0 0.0
      %2789 = vmatprep.subr.mxu0 0.0
      %2790 = vmatpush1.msra.mxu0 0.0
      %2791 = vmatprep.subr.mxu0 0.0
      %2792 = vmatpush1.msra.mxu0 0.0
      %2793 = vmatprep.mubr.f32.mxu0 0.0
      %2794 = vmatmul.mubr.f32.gmra.mrb[0].mxu0 %v2724
      %v2795 = vpop.f32.mrb[0].mxu0
      %v2796 = vadd.f32 %v2721, %v2795
      %v2797 = vpop.f32.mrb[0].mxu0
      %2798 = vmatprep.mubr.f32.mxu0 0.0
      %2799 = vmatmul.mubr.f32.gmra.mrb[0].mxu0 %v2727
      %v2800 = vpop.f32.mrb[0].mxu0
      %v2801 = vadd.f32 %v2721, %v2800
      %v2802 = vpop.f32.mrb[0].mxu0
      %2803 = vdwg.mxu0
      %v2804 = vmax.f32 %v2796, 0.0
      %v2805 = vmax.f32 %v2801, 0.0
      %v2806 = vld [vmem:[%s10] sm:$0xff]
      %v2807 = vld [vmem:[%s10 + $0x8] sm:$0xff]
      %v2808 = vld [vmem:[%s10 + $0x10] sm:$0xff]
      %v2809 = vld [vmem:[%s10 + $0x18] sm:$0xff]
      %v2810 = vmul.f32 %v2806, %v2806
      %v2811 = vmul.f32 %v2807, %v2807
      %v2812 = vmul.f32 %v2808, %v2808
      %v2813 = vmul.f32 %v2809, %v2809
      %v2814 = vsel %vm1031, %v2810, 0.0
      %v2815 = vsel %vm1031, %v2811, 0.0
      %v2816 = vadd.f32 %v2814, %v2815
      %v2817 = vsel %vm1031, %v2812, 0.0
      %v2818 = vadd.f32 %v2816, %v2817
      %v2819 = vsel %vm1031, %v2813, 0.0
      %v2820 = vadd.f32 %v2818, %v2819
      %2821 = vadd.xlane.f32.xlu0 %v2820
      %v2822 = vpop.xlane.xlu0 %2821
      %v2823 = vrot.slane %v2822, 4
      %v2824 = vadd.f32 %v2822, %v2823
      %v2825 = vrot.slane %v2824, 2
      %v2826 = vadd.f32 %v2824, %v2825
      %v2827 = vrot.slane %v2826, 1
      %v2828 = vadd.f32 %v2826, %v2827
      %s2829 = vtos %v2828
      %v2830 = vstv %s2829
      %v2831 = vrsqrt.pop %v2830
      %s2832 = vtos %v2831
      %vm2833 = vcmask 261120
      %v2835 = vsel %vm2833, %v2804, 0
      %v2838 = vsel %vm2833, %v2805, 0
      %2840 = vmatprep.subr.mxu0 0.0
      %2841 = vmatpush1.msra.mxu0 %v2806
      %2842 = vmatprep.subr.mxu0 0.0
      %2843 = vmatpush1.msra.mxu0 %v2807
      %2844 = vmatprep.subr.mxu0 0.0
      %2845 = vmatpush1.msra.mxu0 %v2808
      %2846 = vmatprep.subr.mxu0 0.0
      %2847 = vmatpush1.msra.mxu0 %v2809
      %2848 = vmatprep.subr.mxu0 0.0
      %2849 = vmatpush1.msra.mxu0 0.0
      %2850 = vmatprep.subr.mxu0 0.0
      %2851 = vmatpush1.msra.mxu0 0.0
      %2852 = vmatprep.subr.mxu0 0.0
      %2853 = vmatpush1.msra.mxu0 0.0
      %2854 = vmatprep.subr.mxu0 0.0
      %2855 = vmatpush1.msra.mxu0 0.0
      %2856 = vmatprep.subr.mxu0 0.0
      %2857 = vmatpush1.msra.mxu0 0.0
      %2858 = vmatprep.subr.mxu0 0.0
      %2859 = vmatpush1.msra.mxu0 0.0
      %2860 = vmatprep.subr.mxu0 0.0
      %2861 = vmatpush1.msra.mxu0 0.0
      %2862 = vmatprep.subr.mxu0 0.0
      %2863 = vmatpush1.msra.mxu0 0.0
      %2864 = vmatprep.subr.mxu0 0.0
      %2865 = vmatpush1.msra.mxu0 0.0
      %2866 = vmatprep.subr.mxu0 0.0
      %2867 = vmatpush1.msra.mxu0 0.0
      %2868 = vmatprep.subr.mxu0 0.0
      %2869 = vmatpush1.msra.mxu0 0.0
      %2870 = vmatprep.subr.mxu0 0.0
      %2871 = vmatpush1.msra.mxu0 0.0
      %2872 = vmatprep.subr.mxu0 0.0
      %2873 = vmatpush1.msra.mxu0 0.0
      %2874 = vmatprep.subr.mxu0 0.0
      %2875 = vmatpush1.msra.mxu0 0.0
      %2876 = vmatprep.subr.mxu0 0.0
      %2877 = vmatpush1.msra.mxu0 0.0
      %2878 = vmatprep.subr.mxu0 0.0
      %2879 = vmatpush1.msra.mxu0 0.0
      %2880 = vmatprep.subr.mxu0 0.0
      %2881 = vmatpush1.msra.mxu0 0.0
      %2882 = vmatprep.subr.mxu0 0.0
      %2883 = vmatpush1.msra.mxu0 0.0
      %2884 = vmatprep.subr.mxu0 0.0
      %2885 = vmatpush1.msra.mxu0 0.0
      %2886 = vmatprep.subr.mxu0 0.0
      %2887 = vmatpush1.msra.mxu0 0.0
      %2888 = vmatprep.subr.mxu0 0.0
      %2889 = vmatpush1.msra.mxu0 0.0
      %2890 = vmatprep.subr.mxu0 0.0
      %2891 = vmatpush1.msra.mxu0 0.0
      %2892 = vmatprep.subr.mxu0 0.0
      %2893 = vmatpush1.msra.mxu0 0.0
      %2894 = vmatprep.subr.mxu0 0.0
      %2895 = vmatpush1.msra.mxu0 0.0
      %2896 = vmatprep.subr.mxu0 0.0
      %2897 = vmatpush1.msra.mxu0 0.0
      %2898 = vmatprep.subr.mxu0 0.0
      %2899 = vmatpush1.msra.mxu0 0.0
      %2900 = vmatprep.subr.mxu0 0.0
      %2901 = vmatpush1.msra.mxu0 0.0
      %2902 = vmatprep.subr.mxu0 0.0
      %2903 = vmatpush1.msra.mxu0 0.0
      %2904 = vmatprep.mubr.f32.mxu0 0.0
      %2905 = vmatmul.mubr.f32.gmra.mrb[0].mxu0 %v2835
      %v2906 = vpop.f32.mrb[0].mxu0
      %v2907 = vadd.f32 0.0, %v2906
      %v2908 = vpop.f32.mrb[0].mxu0
      %2909 = vmatprep.mubr.f32.mxu0 0.0
      %2910 = vmatmul.mubr.f32.gmra.mrb[0].mxu0 %v2838
      %v2911 = vpop.f32.mrb[0].mxu0
      %v2912 = vadd.f32 0.0, %v2911
      %v2913 = vpop.f32.mrb[0].mxu0
      %2914 = vdwg.mxu0
      %v2915 = vstv %s2832
      %v2916 = vmul.f32 %v2907, %v2915
      %v2917 = vmul.f32 %v2912, %v2915
      %v2918 = vtanh.pop %v2916
      %v2919 = vtanh.pop %v2917
      %2921 = vset.pattern.permute.xlu0 0
      %2922 = vperm.xlu0 %2921, %v2918
      %v2923 = vpop.permute.xlu0 %2922
      %2926 = vset.pattern.permute.xlu0 0
      %2927 = vperm.xlu0 %2926, %v2919
      %v2928 = vpop.permute.xlu0 %2927
      %v2930 = vmul.f32 %v1155, %v2923
      %v2931 = vmul.f32 %v1156, %v2928
      %v2932 = vsel %vm2436, %v2930, 0.0
      %v2933 = vsel %vm2440, %v2931, 0.0
      %v2934 = vadd.f32 %v2932, %v2933
      %v2935 = vrot.slane %v2934, 4
      %v2936 = vadd.f32 %v2934, %v2935
      %v2937 = vrot.slane %v2936, 2
      %v2938 = vadd.f32 %v2936, %v2937
      %v2939 = vrot.slane %v2938, 1
      %v2940 = vadd.f32 %v2938, %v2939
      %vm2941 = vcmp.gt.f32.partialorder %v2940, %v2923
      %vm2942 = vcmp.gt.f32.partialorder %v2940, %v2928
      %vm2943 = vcmp.eq.f32.partialorder %v2940, %v2923
      %vm2944 = vcmp.eq.f32.partialorder %v2940, %v2928
      %vm2945 = vmand %vm2943, %vm1182
      %vm2946 = vmand %vm2944, %vm1183
      %vm2947 = vmor %vm2941, %vm2945
      %vm2948 = vmor %vm2942, %vm2946
      %v2949 = vsel %vm2947, 1, 0
      %v2950 = vsel %vm2948, 1, 0
      %v2951 = vcvt.s32.f32 %v2949
      %v2952 = vcvt.s32.f32 %v2950
      %v2953 = vsel %vm2436, %v2951, 0.0
      %2954 = vadd.xlane.f32.xlu0 %v2953
      %v2955 = vpop.xlane.xlu0 %2954
      %v2956 = vsel %vm2440, %v2952, 0.0
      %2957 = vadd.xlane.f32.xlu0 %v2956
      %v2958 = vpop.xlane.xlu0 %2957
      %v2959 = vadd.f32 %v2953, %v2956
      %v2960 = vrot.slane %v2959, 4
      %v2961 = vadd.f32 %v2959, %v2960
      %v2962 = vrot.slane %v2961, 2
      %v2963 = vadd.f32 %v2961, %v2962
      %v2964 = vrot.slane %v2963, 1
      %v2965 = vadd.f32 %v2963, %v2964
      %v2966 = vsub.f32 10.0, %v2965
      %vm2967 = vcmp.eq.f32.partialorder %v2966, %v1206
      %vm2968 = vcmp.eq.f32.partialorder %v2966, %v1207
      %v2969 = vsel %vm2967, 1, 0
      %v2970 = vsel %vm2968, 1, 0
      %v2971 = vcvt.s32.f32 %v2969
      %v2972 = vcvt.s32.f32 %v2970
      %vm2973 = vcmp.eq.f32.partialorder %v2955, %v1208
      %vm2974 = vcmp.eq.f32.partialorder %v2958, %v1208
      %v2975 = vsel %vm2973, 1, 0
      %v2976 = vsel %vm2974, 1, 0
      %v2977 = vcvt.s32.f32 %v2975
      %v2978 = vcvt.s32.f32 %v2976
      %v2979 = vmul.f32 %v2804, %v2923
      %v2980 = vmul.f32 %v2805, %v2928
      %v2982 = vsel %vm2436, %v2971, 0
      %v2985 = vsel %vm2436, %v2972, 0
      %v2988 = vsel %vm2467, %v2980, 0
      %2990 = vmatprep.subr.mxu0 0.0
      %2991 = vmatpush1.msra.mxu0 %v2979
      %2992 = vmatprep.subr.mxu0 0.0
      %2993 = vmatpush1.msra.mxu0 %v2988
      %2994 = vmatprep.subr.mxu0 0.0
      %2995 = vmatpush1.msra.mxu0 0.0
      %2996 = vmatprep.subr.mxu0 0.0
      %2997 = vmatpush1.msra.mxu0 0.0
      %2998 = vmatprep.subr.mxu0 0.0
      %2999 = vmatpush1.msra.mxu0 0.0
      %3000 = vmatprep.subr.mxu0 0.0
      %3001 = vmatpush1.msra.mxu0 0.0
      %3002 = vmatprep.subr.mxu0 0.0
      %3003 = vmatpush1.msra.mxu0 0.0
      %3004 = vmatprep.subr.mxu0 0.0
      %3005 = vmatpush1.msra.mxu0 0.0
      %3006 = vmatprep.subr.mxu0 0.0
      %3007 = vmatpush1.msra.mxu0 0.0
      %3008 = vmatprep.subr.mxu0 0.0
      %3009 = vmatpush1.msra.mxu0 0.0
      %3010 = vmatprep.subr.mxu0 0.0
      %3011 = vmatpush1.msra.mxu0 0.0
      %3012 = vmatprep.subr.mxu0 0.0
      %3013 = vmatpush1.msra.mxu0 0.0
      %3014 = vmatprep.subr.mxu0 0.0
      %3015 = vmatpush1.msra.mxu0 0.0
      %3016 = vmatprep.subr.mxu0 0.0
      %3017 = vmatpush1.msra.mxu0 0.0
      %3018 = vmatprep.subr.mxu0 0.0
      %3019 = vmatpush1.msra.mxu0 0.0
      %3020 = vmatprep.subr.mxu0 0.0
      %3021 = vmatpush1.msra.mxu0 0.0
      %3022 = vmatprep.subr.mxu0 0.0
      %3023 = vmatpush1.msra.mxu0 0.0
      %3024 = vmatprep.subr.mxu0 0.0
      %3025 = vmatpush1.msra.mxu0 0.0
      %3026 = vmatprep.subr.mxu0 0.0
      %3027 = vmatpush1.msra.mxu0 0.0
      %3028 = vmatprep.subr.mxu0 0.0
      %3029 = vmatpush1.msra.mxu0 0.0
      %3030 = vmatprep.subr.mxu0 0.0
      %3031 = vmatpush1.msra.mxu0 0.0
      %3032 = vmatprep.subr.mxu0 0.0
      %3033 = vmatpush1.msra.mxu0 0.0
      %3034 = vmatprep.subr.mxu0 0.0
      %3035 = vmatpush1.msra.mxu0 0.0
      %3036 = vmatprep.subr.mxu0 0.0
      %3037 = vmatpush1.msra.mxu0 0.0
      %3038 = vmatprep.subr.mxu0 0.0
      %3039 = vmatpush1.msra.mxu0 0.0
      %3040 = vmatprep.subr.mxu0 0.0
      %3041 = vmatpush1.msra.mxu0 0.0
      %3042 = vmatprep.subr.mxu0 0.0
      %3043 = vmatpush1.msra.mxu0 0.0
      %3044 = vmatprep.subr.mxu0 0.0
      %3045 = vmatpush1.msra.mxu0 0.0
      %3046 = vmatprep.subr.mxu0 0.0
      %3047 = vmatpush1.msra.mxu0 0.0
      %3048 = vmatprep.subr.mxu0 0.0
      %3049 = vmatpush1.msra.mxu0 0.0
      %3050 = vmatprep.subr.mxu0 0.0
      %3051 = vmatpush1.msra.mxu0 0.0
      %3052 = vmatprep.subr.mxu0 0.0
      %3053 = vmatpush1.msra.mxu0 0.0
      %3054 = vmatprep.mubr.f32.mxu0 0.0
      %3055 = vmatmul.mubr.f32.gmra.mrb[0].mxu0 %v2982
      %v3056 = vpop.f32.mrb[0].mxu0
      %v3057 = vadd.f32 0.0, %v3056
      %v3058 = vpop.f32.mrb[0].mxu0
      %3059 = vmatprep.mubr.f32.mxu0 0.0
      %3060 = vmatmul.mubr.f32.gmra.mrb[0].mxu0 %v2985
      %v3061 = vpop.f32.mrb[0].mxu0
      %v3062 = vadd.f32 0.0, %v3061
      %v3063 = vpop.f32.mrb[0].mxu0
      %3064 = vdwg.mxu0
      %v3066 = vsel %vm2467, %v2435, 0
      %3068 = vmatprep.subr.mxu0 0.0
      %3069 = vmatpush1.msra.mxu0 %v2434
      %3070 = vmatprep.subr.mxu0 0.0
      %3071 = vmatpush1.msra.mxu0 %v3066
      %3072 = vmatprep.subr.mxu0 0.0
      %3073 = vmatpush1.msra.mxu0 0.0
      %3074 = vmatprep.subr.mxu0 0.0
      %3075 = vmatpush1.msra.mxu0 0.0
      %3076 = vmatprep.subr.mxu0 0.0
      %3077 = vmatpush1.msra.mxu0 0.0
      %3078 = vmatprep.subr.mxu0 0.0
      %3079 = vmatpush1.msra.mxu0 0.0
      %3080 = vmatprep.subr.mxu0 0.0
      %3081 = vmatpush1.msra.mxu0 0.0
      %3082 = vmatprep.subr.mxu0 0.0
      %3083 = vmatpush1.msra.mxu0 0.0
      %3084 = vmatprep.subr.mxu0 0.0
      %3085 = vmatpush1.msra.mxu0 0.0
      %3086 = vmatprep.subr.mxu0 0.0
      %3087 = vmatpush1.msra.mxu0 0.0
      %3088 = vmatprep.subr.mxu0 0.0
      %3089 = vmatpush1.msra.mxu0 0.0
      %3090 = vmatprep.subr.mxu0 0.0
      %3091 = vmatpush1.msra.mxu0 0.0
      %3092 = vmatprep.subr.mxu0 0.0
      %3093 = vmatpush1.msra.mxu0 0.0
      %3094 = vmatprep.subr.mxu0 0.0
      %3095 = vmatpush1.msra.mxu0 0.0
      %3096 = vmatprep.subr.mxu0 0.0
      %3097 = vmatpush1.msra.mxu0 0.0
      %3098 = vmatprep.subr.mxu0 0.0
      %3099 = vmatpush1.msra.mxu0 0.0
      %3100 = vmatprep.subr.mxu0 0.0
      %3101 = vmatpush1.msra.mxu0 0.0
      %3102 = vmatprep.subr.mxu0 0.0
      %3103 = vmatpush1.msra.mxu0 0.0
      %3104 = vmatprep.subr.mxu0 0.0
      %3105 = vmatpush1.msra.mxu0 0.0
      %3106 = vmatprep.subr.mxu0 0.0
      %3107 = vmatpush1.msra.mxu0 0.0
      %3108 = vmatprep.subr.mxu0 0.0
      %3109 = vmatpush1.msra.mxu0 0.0
      %3110 = vmatprep.subr.mxu0 0.0
      %3111 = vmatpush1.msra.mxu0 0.0
      %3112 = vmatprep.subr.mxu0 0.0
      %3113 = vmatpush1.msra.mxu0 0.0
      %3114 = vmatprep.subr.mxu0 0.0
      %3115 = vmatpush1.msra.mxu0 0.0
      %3116 = vmatprep.subr.mxu0 0.0
      %3117 = vmatpush1.msra.mxu0 0.0
      %3118 = vmatprep.subr.mxu0 0.0
      %3119 = vmatpush1.msra.mxu0 0.0
      %3120 = vmatprep.subr.mxu0 0.0
      %3121 = vmatpush1.msra.mxu0 0.0
      %3122 = vmatprep.subr.mxu0 0.0
      %3123 = vmatpush1.msra.mxu0 0.0
      %3124 = vmatprep.subr.mxu0 0.0
      %3125 = vmatpush1.msra.mxu0 0.0
      %3126 = vmatprep.subr.mxu0 0.0
      %3127 = vmatpush1.msra.mxu0 0.0
      %3128 = vmatprep.subr.mxu0 0.0
      %3129 = vmatpush1.msra.mxu0 0.0
      %3130 = vmatprep.subr.mxu0 0.0
      %3131 = vmatpush1.msra.mxu0 0.0
      %3132 = vmatprep.mubr.f32.mxu0 0.0
      %3133 = vmatmul.mubr.f32.gmra.mrb[0].mxu0 %v2982
      %v3134 = vpop.f32.mrb[0].mxu0
      %v3135 = vadd.f32 0.0, %v3134
      %v3136 = vpop.f32.mrb[0].mxu0
      %3137 = vmatprep.mubr.f32.mxu0 0.0
      %3138 = vmatmul.mubr.f32.gmra.mrb[0].mxu0 %v2985
      %v3139 = vpop.f32.mrb[0].mxu0
      %v3140 = vadd.f32 0.0, %v3139
      %v3141 = vpop.f32.mrb[0].mxu0
      %3142 = vdwg.mxu0
      %v3144 = vsel %vm2436, %v2434, 0
      %v3146 = vsel %vm2436, %v2435, 0
      %v3149 = vsel %vm2467, %v2978, 0
      %3151 = vmatprep.subr.mxu0 0.0
      %3152 = vmatpush1.msra.mxu0 %v2977
      %3153 = vmatprep.subr.mxu0 0.0
      %3154 = vmatpush1.msra.mxu0 %v3149
      %3155 = vmatprep.subr.mxu0 0.0
      %3156 = vmatpush1.msra.mxu0 0.0
      %3157 = vmatprep.subr.mxu0 0.0
      %3158 = vmatpush1.msra.mxu0 0.0
      %3159 = vmatprep.subr.mxu0 0.0
      %3160 = vmatpush1.msra.mxu0 0.0
      %3161 = vmatprep.subr.mxu0 0.0
      %3162 = vmatpush1.msra.mxu0 0.0
      %3163 = vmatprep.subr.mxu0 0.0
      %3164 = vmatpush1.msra.mxu0 0.0
      %3165 = vmatprep.subr.mxu0 0.0
      %3166 = vmatpush1.msra.mxu0 0.0
      %3167 = vmatprep.subr.mxu0 0.0
      %3168 = vmatpush1.msra.mxu0 0.0
      %3169 = vmatprep.subr.mxu0 0.0
      %3170 = vmatpush1.msra.mxu0 0.0
      %3171 = vmatprep.subr.mxu0 0.0
      %3172 = vmatpush1.msra.mxu0 0.0
      %3173 = vmatprep.subr.mxu0 0.0
      %3174 = vmatpush1.msra.mxu0 0.0
      %3175 = vmatprep.subr.mxu0 0.0
      %3176 = vmatpush1.msra.mxu0 0.0
      %3177 = vmatprep.subr.mxu0 0.0
      %3178 = vmatpush1.msra.mxu0 0.0
      %3179 = vmatprep.subr.mxu0 0.0
      %3180 = vmatpush1.msra.mxu0 0.0
      %3181 = vmatprep.subr.mxu0 0.0
      %3182 = vmatpush1.msra.mxu0 0.0
      %3183 = vmatprep.subr.mxu0 0.0
      %3184 = vmatpush1.msra.mxu0 0.0
      %3185 = vmatprep.subr.mxu0 0.0
      %3186 = vmatpush1.msra.mxu0 0.0
      %3187 = vmatprep.subr.mxu0 0.0
      %3188 = vmatpush1.msra.mxu0 0.0
      %3189 = vmatprep.subr.mxu0 0.0
      %3190 = vmatpush1.msra.mxu0 0.0
      %3191 = vmatprep.subr.mxu0 0.0
      %3192 = vmatpush1.msra.mxu0 0.0
      %3193 = vmatprep.subr.mxu0 0.0
      %3194 = vmatpush1.msra.mxu0 0.0
      %3195 = vmatprep.subr.mxu0 0.0
      %3196 = vmatpush1.msra.mxu0 0.0
      %3197 = vmatprep.subr.mxu0 0.0
      %3198 = vmatpush1.msra.mxu0 0.0
      %3199 = vmatprep.subr.mxu0 0.0
      %3200 = vmatpush1.msra.mxu0 0.0
      %3201 = vmatprep.subr.mxu0 0.0
      %3202 = vmatpush1.msra.mxu0 0.0
      %3203 = vmatprep.subr.mxu0 0.0
      %3204 = vmatpush1.msra.mxu0 0.0
      %3205 = vmatprep.subr.mxu0 0.0
      %3206 = vmatpush1.msra.mxu0 0.0
      %3207 = vmatprep.subr.mxu0 0.0
      %3208 = vmatpush1.msra.mxu0 0.0
      %3209 = vmatprep.subr.mxu0 0.0
      %3210 = vmatpush1.msra.mxu0 0.0
      %3211 = vmatprep.subr.mxu0 0.0
      %3212 = vmatpush1.msra.mxu0 0.0
      %3213 = vmatprep.subr.mxu0 0.0
      %3214 = vmatpush1.msra.mxu0 0.0
      %3215 = vmatprep.mubr.f32.mxu0 0.0
      %3216 = vmatmul.mubr.f32.gmra.mrb[0].mxu0 %v3144
      %v3217 = vpop.f32.mrb[0].mxu0
      %v3218 = vadd.f32 0.0, %v3217
      %v3219 = vpop.f32.mrb[0].mxu0
      %3220 = vmatprep.mubr.f32.mxu0 0.0
      %3221 = vmatmul.mubr.f32.gmra.mrb[0].mxu0 %v3146
      %v3222 = vpop.f32.mrb[0].mxu0
      %v3223 = vadd.f32 0.0, %v3222
      %v3224 = vpop.f32.mrb[0].mxu0
      %3225 = vdwg.mxu0
      %v3227 = vsel %vm2436, %v3135, 0
      %v3230 = vsel %vm2436, %v3140, 0
      %v3233 = vsel %vm2467, %v3223, 0
      %3235 = vmatprep.subr.mxu0 0.0
      %3236 = vmatpush1.msra.mxu0 %v3218
      %3237 = vmatprep.subr.mxu0 0.0
      %3238 = vmatpush1.msra.mxu0 %v3233
      %3239 = vmatprep.subr.mxu0 0.0
      %3240 = vmatpush1.msra.mxu0 0.0
      %3241 = vmatprep.subr.mxu0 0.0
      %3242 = vmatpush1.msra.mxu0 0.0
      %3243 = vmatprep.subr.mxu0 0.0
      %3244 = vmatpush1.msra.mxu0 0.0
      %3245 = vmatprep.subr.mxu0 0.0
      %3246 = vmatpush1.msra.mxu0 0.0
      %3247 = vmatprep.subr.mxu0 0.0
      %3248 = vmatpush1.msra.mxu0 0.0
      %3249 = vmatprep.subr.mxu0 0.0
      %3250 = vmatpush1.msra.mxu0 0.0
      %3251 = vmatprep.subr.mxu0 0.0
      %3252 = vmatpush1.msra.mxu0 0.0
      %3253 = vmatprep.subr.mxu0 0.0
      %3254 = vmatpush1.msra.mxu0 0.0
      %3255 = vmatprep.subr.mxu0 0.0
      %3256 = vmatpush1.msra.mxu0 0.0
      %3257 = vmatprep.subr.mxu0 0.0
      %3258 = vmatpush1.msra.mxu0 0.0
      %3259 = vmatprep.subr.mxu0 0.0
      %3260 = vmatpush1.msra.mxu0 0.0
      %3261 = vmatprep.subr.mxu0 0.0
      %3262 = vmatpush1.msra.mxu0 0.0
      %3263 = vmatprep.subr.mxu0 0.0
      %3264 = vmatpush1.msra.mxu0 0.0
      %3265 = vmatprep.subr.mxu0 0.0
      %3266 = vmatpush1.msra.mxu0 0.0
      %3267 = vmatprep.subr.mxu0 0.0
      %3268 = vmatpush1.msra.mxu0 0.0
      %3269 = vmatprep.subr.mxu0 0.0
      %3270 = vmatpush1.msra.mxu0 0.0
      %3271 = vmatprep.subr.mxu0 0.0
      %3272 = vmatpush1.msra.mxu0 0.0
      %3273 = vmatprep.subr.mxu0 0.0
      %3274 = vmatpush1.msra.mxu0 0.0
      %3275 = vmatprep.subr.mxu0 0.0
      %3276 = vmatpush1.msra.mxu0 0.0
      %3277 = vmatprep.subr.mxu0 0.0
      %3278 = vmatpush1.msra.mxu0 0.0
      %3279 = vmatprep.subr.mxu0 0.0
      %3280 = vmatpush1.msra.mxu0 0.0
      %3281 = vmatprep.subr.mxu0 0.0
      %3282 = vmatpush1.msra.mxu0 0.0
      %3283 = vmatprep.subr.mxu0 0.0
      %3284 = vmatpush1.msra.mxu0 0.0
      %3285 = vmatprep.subr.mxu0 0.0
      %3286 = vmatpush1.msra.mxu0 0.0
      %3287 = vmatprep.subr.mxu0 0.0
      %3288 = vmatpush1.msra.mxu0 0.0
      %3289 = vmatprep.subr.mxu0 0.0
      %3290 = vmatpush1.msra.mxu0 0.0
      %3291 = vmatprep.subr.mxu0 0.0
      %3292 = vmatpush1.msra.mxu0 0.0
      %3293 = vmatprep.subr.mxu0 0.0
      %3294 = vmatpush1.msra.mxu0 0.0
      %3295 = vmatprep.subr.mxu0 0.0
      %3296 = vmatpush1.msra.mxu0 0.0
      %3297 = vmatprep.subr.mxu0 0.0
      %3298 = vmatpush1.msra.mxu0 0.0
      %3299 = vmatprep.mubr.f32.mxu0 0.0
      %3300 = vmatmul.mubr.f32.gmra.mrb[0].mxu0 %v3227
      %v3301 = vpop.f32.mrb[0].mxu0
      %v3302 = vadd.f32 0.0, %v3301
      %v3303 = vpop.f32.mrb[0].mxu0
      %3304 = vmatprep.mubr.f32.mxu0 0.0
      %3305 = vmatmul.mubr.f32.gmra.mrb[0].mxu0 %v3230
      %v3306 = vpop.f32.mrb[0].mxu0
      %v3307 = vadd.f32 0.0, %v3306
      %v3308 = vpop.f32.mrb[0].mxu0
      %3309 = vdwg.mxu0
      %vm3310 = vcmp.gt.f32.partialorder %v3302, 0.5
      %vm3311 = vcmp.gt.f32.partialorder %v3307, 0.5
      %v3312 = vsel %vm3310, 1, 0
      %v3313 = vsel %vm3311, 1, 0
      %v3314 = vcvt.s32.f32 %v3312
      %v3315 = vcvt.s32.f32 %v3313
      %3316 = vst.msk [vmem:[%s642] sm:$0xff] %vm2833, %v3057
      %vm3317 = vcmask 253952
      %3318 = vst.msk [vmem:[%s642 + $0x8] sm:$0x1] %vm3317, %v3062
      %vm3319 = vcmask 72704
      %3320 = vst.msk [vmem:[%s647] sm:$0xff] %vm3319, %v3314
      %vm3321 = vcmask 65536
      %3322 = vst.msk [vmem:[%s647 + $0x8] sm:$0x1] %vm3321, %v3315
      %v3324 = vsel %vm3319, %v2977, 0
      %v3326 = vsel %vm3319, %v2978, 0
      %vm3328 = vcmask 1040384
      %v3330 = vsel %vm3328, %v3062, 0
      %3332 = vmatprep.subr.mxu0 0.0
      %3333 = vmatpush1.msra.mxu0 %v3057
      %3334 = vmatprep.subr.mxu0 0.0
      %3335 = vmatpush1.msra.mxu0 %v3330
      %3336 = vmatprep.subr.mxu0 0.0
      %3337 = vmatpush1.msra.mxu0 0.0
      %3338 = vmatprep.subr.mxu0 0.0
      %3339 = vmatpush1.msra.mxu0 0.0
      %3340 = vmatprep.subr.mxu0 0.0
      %3341 = vmatpush1.msra.mxu0 0.0
      %3342 = vmatprep.subr.mxu0 0.0
      %3343 = vmatpush1.msra.mxu0 0.0
      %3344 = vmatprep.subr.mxu0 0.0
      %3345 = vmatpush1.msra.mxu0 0.0
      %3346 = vmatprep.subr.mxu0 0.0
      %3347 = vmatpush1.msra.mxu0 0.0
      %3348 = vmatprep.subr.mxu0 0.0
      %3349 = vmatpush1.msra.mxu0 0.0
      %3350 = vmatprep.subr.mxu0 0.0
      %3351 = vmatpush1.msra.mxu0 0.0
      %3352 = vmatprep.subr.mxu0 0.0
      %3353 = vmatpush1.msra.mxu0 0.0
      %3354 = vmatprep.subr.mxu0 0.0
      %3355 = vmatpush1.msra.mxu0 0.0
      %3356 = vmatprep.subr.mxu0 0.0
      %3357 = vmatpush1.msra.mxu0 0.0
      %3358 = vmatprep.subr.mxu0 0.0
      %3359 = vmatpush1.msra.mxu0 0.0
      %3360 = vmatprep.subr.mxu0 0.0
      %3361 = vmatpush1.msra.mxu0 0.0
      %3362 = vmatprep.subr.mxu0 0.0
      %3363 = vmatpush1.msra.mxu0 0.0
      %3364 = vmatprep.subr.mxu0 0.0
      %3365 = vmatpush1.msra.mxu0 0.0
      %3366 = vmatprep.subr.mxu0 0.0
      %3367 = vmatpush1.msra.mxu0 0.0
      %3368 = vmatprep.subr.mxu0 0.0
      %3369 = vmatpush1.msra.mxu0 0.0
      %3370 = vmatprep.subr.mxu0 0.0
      %3371 = vmatpush1.msra.mxu0 0.0
      %3372 = vmatprep.subr.mxu0 0.0
      %3373 = vmatpush1.msra.mxu0 0.0
      %3374 = vmatprep.subr.mxu0 0.0
      %3375 = vmatpush1.msra.mxu0 0.0
      %3376 = vmatprep.subr.mxu0 0.0
      %3377 = vmatpush1.msra.mxu0 0.0
      %3378 = vmatprep.subr.mxu0 0.0
      %3379 = vmatpush1.msra.mxu0 0.0
      %3380 = vmatprep.subr.mxu0 0.0
      %3381 = vmatpush1.msra.mxu0 0.0
      %3382 = vmatprep.subr.mxu0 0.0
      %3383 = vmatpush1.msra.mxu0 0.0
      %3384 = vmatprep.subr.mxu0 0.0
      %3385 = vmatpush1.msra.mxu0 0.0
      %3386 = vmatprep.subr.mxu0 0.0
      %3387 = vmatpush1.msra.mxu0 0.0
      %3388 = vmatprep.subr.mxu0 0.0
      %3389 = vmatpush1.msra.mxu0 0.0
      %3390 = vmatprep.subr.mxu0 0.0
      %3391 = vmatpush1.msra.mxu0 0.0
      %3392 = vmatprep.subr.mxu0 0.0
      %3393 = vmatpush1.msra.mxu0 0.0
      %3394 = vmatprep.subr.mxu0 0.0
      %3395 = vmatpush1.msra.mxu0 0.0
      %3396 = vmatprep.mubr.f32.mxu0 0.0
      %3397 = vmatmul.mubr.f32.gmra.mrb[0].mxu0 %v3324
      %v3398 = vpop.f32.mrb[0].mxu0
      %v3399 = vadd.f32 0.0, %v3398
      %v3400 = vpop.f32.mrb[0].mxu0
      %3401 = vmatprep.mubr.f32.mxu0 0.0
      %3402 = vmatmul.mubr.f32.gmra.mrb[0].mxu0 %v3326
      %v3403 = vpop.f32.mrb[0].mxu0
      %v3404 = vadd.f32 0.0, %v3403
      %v3405 = vpop.f32.mrb[0].mxu0
      %3406 = vdwg.mxu0
      %v3408 = vsel %vm2467, %v3404, 0
      %3410 = vmatprep.subr.mxu0 0.0
      %3411 = vmatpush1.msra.mxu0 %v3399
      %3412 = vmatprep.subr.mxu0 0.0
      %3413 = vmatpush1.msra.mxu0 %v3408
      %3414 = vmatprep.subr.mxu0 0.0
      %3415 = vmatpush1.msra.mxu0 0.0
      %3416 = vmatprep.subr.mxu0 0.0
      %3417 = vmatpush1.msra.mxu0 0.0
      %3418 = vmatprep.subr.mxu0 0.0
      %3419 = vmatpush1.msra.mxu0 0.0
      %3420 = vmatprep.subr.mxu0 0.0
      %3421 = vmatpush1.msra.mxu0 0.0
      %3422 = vmatprep.subr.mxu0 0.0
      %3423 = vmatpush1.msra.mxu0 0.0
      %3424 = vmatprep.subr.mxu0 0.0
      %3425 = vmatpush1.msra.mxu0 0.0
      %3426 = vmatprep.subr.mxu0 0.0
      %3427 = vmatpush1.msra.mxu0 0.0
      %3428 = vmatprep.subr.mxu0 0.0
      %3429 = vmatpush1.msra.mxu0 0.0
      %3430 = vmatprep.subr.mxu0 0.0
      %3431 = vmatpush1.msra.mxu0 0.0
      %3432 = vmatprep.subr.mxu0 0.0
      %3433 = vmatpush1.msra.mxu0 0.0
      %3434 = vmatprep.subr.mxu0 0.0
      %3435 = vmatpush1.msra.mxu0 0.0
      %3436 = vmatprep.subr.mxu0 0.0
      %3437 = vmatpush1.msra.mxu0 0.0
      %3438 = vmatprep.subr.mxu0 0.0
      %3439 = vmatpush1.msra.mxu0 0.0
      %3440 = vmatprep.subr.mxu0 0.0
      %3441 = vmatpush1.msra.mxu0 0.0
      %3442 = vmatprep.subr.mxu0 0.0
      %3443 = vmatpush1.msra.mxu0 0.0
      %3444 = vmatprep.subr.mxu0 0.0
      %3445 = vmatpush1.msra.mxu0 0.0
      %3446 = vmatprep.subr.mxu0 0.0
      %3447 = vmatpush1.msra.mxu0 0.0
      %3448 = vmatprep.subr.mxu0 0.0
      %3449 = vmatpush1.msra.mxu0 0.0
      %3450 = vmatprep.subr.mxu0 0.0
      %3451 = vmatpush1.msra.mxu0 0.0
      %3452 = vmatprep.subr.mxu0 0.0
      %3453 = vmatpush1.msra.mxu0 0.0
      %3454 = vmatprep.subr.mxu0 0.0
      %3455 = vmatpush1.msra.mxu0 0.0
      %3456 = vmatprep.subr.mxu0 0.0
      %3457 = vmatpush1.msra.mxu0 0.0
      %3458 = vmatprep.subr.mxu0 0.0
      %3459 = vmatpush1.msra.mxu0 0.0
      %3460 = vmatprep.subr.mxu0 0.0
      %3461 = vmatpush1.msra.mxu0 0.0
      %3462 = vmatprep.subr.mxu0 0.0
      %3463 = vmatpush1.msra.mxu0 0.0
      %3464 = vmatprep.subr.mxu0 0.0
      %3465 = vmatpush1.msra.mxu0 0.0
      %3466 = vmatprep.subr.mxu0 0.0
      %3467 = vmatpush1.msra.mxu0 0.0
      %3468 = vmatprep.subr.mxu0 0.0
      %3469 = vmatpush1.msra.mxu0 0.0
      %3470 = vmatprep.subr.mxu0 0.0
      %3471 = vmatpush1.msra.mxu0 0.0
      %3472 = vmatprep.subr.mxu0 0.0
      %3473 = vmatpush1.msra.mxu0 0.0
      %3474 = vmatprep.mubr.f32.mxu0 0.0
      %3475 = vmatmul.mubr.f32.gmra.mrb[0].mxu0 %v2627
      %v3476 = vpop.f32.mrb[0].mxu0
      %v3477 = vadd.f32 0.0, %v3476
      %v3478 = vpop.f32.mrb[0].mxu0
      %3479 = vmatprep.mubr.f32.mxu0 0.0
      %3480 = vmatmul.mubr.f32.gmra.mrb[0].mxu0 %v2630
      %v3481 = vpop.f32.mrb[0].mxu0
      %v3482 = vadd.f32 0.0, %v3481
      %v3483 = vpop.f32.mrb[0].mxu0
      %3484 = vdwg.mxu0
      %v3485 = vld [vmem:[%s11] sm:$0xff]
      %v3486 = vld [vmem:[%s11 + $0x8] sm:$0xff]
      %v3487 = vld [vmem:[%s11 + $0x10] sm:$0xff]
      %v3488 = vld [vmem:[%s11 + $0x18] sm:$0xff]
      %v3489 = vld [vmem:[%s12] sm:$0x1]
      %v3491 = vlaneseq
      %v3492 = vshrl.u32 %v3491, 7
      %v3493 = vsub.s32 0, %v3492
      %v3494 = vrot.slane %v3489, %v3493
      %v3497 = vsel %vm2833, %v3477, 0
      %v3500 = vsel %vm2833, %v3482, 0
      %3502 = vmatprep.subr.mxu0 0.0
      %3503 = vmatpush1.msra.mxu0 %v3485
      %3504 = vmatprep.subr.mxu0 0.0
      %3505 = vmatpush1.msra.mxu0 %v3486
      %3506 = vmatprep.subr.mxu0 0.0
      %3507 = vmatpush1.msra.mxu0 %v3487
      %3508 = vmatprep.subr.mxu0 0.0
      %3509 = vmatpush1.msra.mxu0 %v3488
      %3510 = vmatprep.subr.mxu0 0.0
      %3511 = vmatpush1.msra.mxu0 0.0
      %3512 = vmatprep.subr.mxu0 0.0
      %3513 = vmatpush1.msra.mxu0 0.0
      %3514 = vmatprep.subr.mxu0 0.0
      %3515 = vmatpush1.msra.mxu0 0.0
      %3516 = vmatprep.subr.mxu0 0.0
      %3517 = vmatpush1.msra.mxu0 0.0
      %3518 = vmatprep.subr.mxu0 0.0
      %3519 = vmatpush1.msra.mxu0 0.0
      %3520 = vmatprep.subr.mxu0 0.0
      %3521 = vmatpush1.msra.mxu0 0.0
      %3522 = vmatprep.subr.mxu0 0.0
      %3523 = vmatpush1.msra.mxu0 0.0
      %3524 = vmatprep.subr.mxu0 0.0
      %3525 = vmatpush1.msra.mxu0 0.0
      %3526 = vmatprep.subr.mxu0 0.0
      %3527 = vmatpush1.msra.mxu0 0.0
      %3528 = vmatprep.subr.mxu0 0.0
      %3529 = vmatpush1.msra.mxu0 0.0
      %3530 = vmatprep.subr.mxu0 0.0
      %3531 = vmatpush1.msra.mxu0 0.0
      %3532 = vmatprep.subr.mxu0 0.0
      %3533 = vmatpush1.msra.mxu0 0.0
      %3534 = vmatprep.subr.mxu0 0.0
      %3535 = vmatpush1.msra.mxu0 0.0
      %3536 = vmatprep.subr.mxu0 0.0
      %3537 = vmatpush1.msra.mxu0 0.0
      %3538 = vmatprep.subr.mxu0 0.0
      %3539 = vmatpush1.msra.mxu0 0.0
      %3540 = vmatprep.subr.mxu0 0.0
      %3541 = vmatpush1.msra.mxu0 0.0
      %3542 = vmatprep.subr.mxu0 0.0
      %3543 = vmatpush1.msra.mxu0 0.0
      %3544 = vmatprep.subr.mxu0 0.0
      %3545 = vmatpush1.msra.mxu0 0.0
      %3546 = vmatprep.subr.mxu0 0.0
      %3547 = vmatpush1.msra.mxu0 0.0
      %3548 = vmatprep.subr.mxu0 0.0
      %3549 = vmatpush1.msra.mxu0 0.0
      %3550 = vmatprep.subr.mxu0 0.0
      %3551 = vmatpush1.msra.mxu0 0.0
      %3552 = vmatprep.subr.mxu0 0.0
      %3553 = vmatpush1.msra.mxu0 0.0
      %3554 = vmatprep.subr.mxu0 0.0
      %3555 = vmatpush1.msra.mxu0 0.0
      %3556 = vmatprep.subr.mxu0 0.0
      %3557 = vmatpush1.msra.mxu0 0.0
      %3558 = vmatprep.subr.mxu0 0.0
      %3559 = vmatpush1.msra.mxu0 0.0
      %3560 = vmatprep.subr.mxu0 0.0
      %3561 = vmatpush1.msra.mxu0 0.0
      %3562 = vmatprep.subr.mxu0 0.0
      %3563 = vmatpush1.msra.mxu0 0.0
      %3564 = vmatprep.subr.mxu0 0.0
      %3565 = vmatpush1.msra.mxu0 0.0
      %3566 = vmatprep.mubr.f32.mxu0 0.0
      %3567 = vmatmul.mubr.f32.gmra.mrb[0].mxu0 %v3497
      %v3568 = vpop.f32.mrb[0].mxu0
      %v3569 = vadd.f32 %v3494, %v3568
      %v3570 = vpop.f32.mrb[0].mxu0
      %3571 = vmatprep.mubr.f32.mxu0 0.0
      %3572 = vmatmul.mubr.f32.gmra.mrb[0].mxu0 %v3500
      %v3573 = vpop.f32.mrb[0].mxu0
      %v3574 = vadd.f32 %v3494, %v3573
      %v3575 = vpop.f32.mrb[0].mxu0
      %3576 = vdwg.mxu0
      %v3577 = vmax.f32 %v3569, 0.0
      %v3578 = vmax.f32 %v3574, 0.0
      %v3580 = vsel %vm2436, %v2097, 0
      %v3582 = vsel %vm2436, %v2098, 0
      %v3585 = vsel %vm2467, %v3578, 0
      %3587 = vmatprep.subr.mxu0 0.0
      %3588 = vmatpush1.msra.mxu0 %v3577
      %3589 = vmatprep.subr.mxu0 0.0
      %3590 = vmatpush1.msra.mxu0 %v3585
      %3591 = vmatprep.subr.mxu0 0.0
      %3592 = vmatpush1.msra.mxu0 0.0
      %3593 = vmatprep.subr.mxu0 0.0
      %3594 = vmatpush1.msra.mxu0 0.0
      %3595 = vmatprep.subr.mxu0 0.0
      %3596 = vmatpush1.msra.mxu0 0.0
      %3597 = vmatprep.subr.mxu0 0.0
      %3598 = vmatpush1.msra.mxu0 0.0
      %3599 = vmatprep.subr.mxu0 0.0
      %3600 = vmatpush1.msra.mxu0 0.0
      %3601 = vmatprep.subr.mxu0 0.0
      %3602 = vmatpush1.msra.mxu0 0.0
      %3603 = vmatprep.subr.mxu0 0.0
      %3604 = vmatpush1.msra.mxu0 0.0
      %3605 = vmatprep.subr.mxu0 0.0
      %3606 = vmatpush1.msra.mxu0 0.0
      %3607 = vmatprep.subr.mxu0 0.0
      %3608 = vmatpush1.msra.mxu0 0.0
      %3609 = vmatprep.subr.mxu0 0.0
      %3610 = vmatpush1.msra.mxu0 0.0
      %3611 = vmatprep.subr.mxu0 0.0
      %3612 = vmatpush1.msra.mxu0 0.0
      %3613 = vmatprep.subr.mxu0 0.0
      %3614 = vmatpush1.msra.mxu0 0.0
      %3615 = vmatprep.subr.mxu0 0.0
      %3616 = vmatpush1.msra.mxu0 0.0
      %3617 = vmatprep.subr.mxu0 0.0
      %3618 = vmatpush1.msra.mxu0 0.0
      %3619 = vmatprep.subr.mxu0 0.0
      %3620 = vmatpush1.msra.mxu0 0.0
      %3621 = vmatprep.subr.mxu0 0.0
      %3622 = vmatpush1.msra.mxu0 0.0
      %3623 = vmatprep.subr.mxu0 0.0
      %3624 = vmatpush1.msra.mxu0 0.0
      %3625 = vmatprep.subr.mxu0 0.0
      %3626 = vmatpush1.msra.mxu0 0.0
      %3627 = vmatprep.subr.mxu0 0.0
      %3628 = vmatpush1.msra.mxu0 0.0
      %3629 = vmatprep.subr.mxu0 0.0
      %3630 = vmatpush1.msra.mxu0 0.0
      %3631 = vmatprep.subr.mxu0 0.0
      %3632 = vmatpush1.msra.mxu0 0.0
      %3633 = vmatprep.subr.mxu0 0.0
      %3634 = vmatpush1.msra.mxu0 0.0
      %3635 = vmatprep.subr.mxu0 0.0
      %3636 = vmatpush1.msra.mxu0 0.0
      %3637 = vmatprep.subr.mxu0 0.0
      %3638 = vmatpush1.msra.mxu0 0.0
      %3639 = vmatprep.subr.mxu0 0.0
      %3640 = vmatpush1.msra.mxu0 0.0
      %3641 = vmatprep.subr.mxu0 0.0
      %3642 = vmatpush1.msra.mxu0 0.0
      %3643 = vmatprep.subr.mxu0 0.0
      %3644 = vmatpush1.msra.mxu0 0.0
      %3645 = vmatprep.subr.mxu0 0.0
      %3646 = vmatpush1.msra.mxu0 0.0
      %3647 = vmatprep.subr.mxu0 0.0
      %3648 = vmatpush1.msra.mxu0 0.0
      %3649 = vmatprep.subr.mxu0 0.0
      %3650 = vmatpush1.msra.mxu0 0.0
      %3651 = vmatprep.mubr.f32.mxu0 0.0
      %3652 = vmatmul.mubr.f32.gmra.mrb[0].mxu0 %v3580
      %v3653 = vpop.f32.mrb[0].mxu0
      %v3654 = vadd.f32 0.0, %v3653
      %v3655 = vpop.f32.mrb[0].mxu0
      %3656 = vmatprep.mubr.f32.mxu0 0.0
      %3657 = vmatmul.mubr.f32.gmra.mrb[0].mxu0 %v3582
      %v3658 = vpop.f32.mrb[0].mxu0
      %v3659 = vadd.f32 0.0, %v3658
      %v3660 = vpop.f32.mrb[0].mxu0
      %3661 = vdwg.mxu0
      %v3663 = vsel %vm934, %v3659, 0
      %3665 = vmatprep.subr.mxu0 0.0
      %3666 = vmatpush1.msra.mxu0 %v3654
      %3667 = vmatprep.subr.mxu0 0.0
      %3668 = vmatpush1.msra.mxu0 %v3663
      %3669 = vmatprep.subr.mxu0 0.0
      %3670 = vmatpush1.msra.mxu0 0.0
      %3671 = vmatprep.subr.mxu0 0.0
      %3672 = vmatpush1.msra.mxu0 0.0
      %3673 = vmatprep.subr.mxu0 0.0
      %3674 = vmatpush1.msra.mxu0 0.0
      %3675 = vmatprep.subr.mxu0 0.0
      %3676 = vmatpush1.msra.mxu0 0.0
      %3677 = vmatprep.subr.mxu0 0.0
      %3678 = vmatpush1.msra.mxu0 0.0
      %3679 = vmatprep.subr.mxu0 0.0
      %3680 = vmatpush1.msra.mxu0 0.0
      %3681 = vmatprep.subr.mxu0 0.0
      %3682 = vmatpush1.msra.mxu0 0.0
      %3683 = vmatprep.subr.mxu0 0.0
      %3684 = vmatpush1.msra.mxu0 0.0
      %3685 = vmatprep.subr.mxu0 0.0
      %3686 = vmatpush1.msra.mxu0 0.0
      %3687 = vmatprep.subr.mxu0 0.0
      %3688 = vmatpush1.msra.mxu0 0.0
      %3689 = vmatprep.subr.mxu0 0.0
      %3690 = vmatpush1.msra.mxu0 0.0
      %3691 = vmatprep.subr.mxu0 0.0
      %3692 = vmatpush1.msra.mxu0 0.0
      %3693 = vmatprep.subr.mxu0 0.0
      %3694 = vmatpush1.msra.mxu0 0.0
      %3695 = vmatprep.subr.mxu0 0.0
      %3696 = vmatpush1.msra.mxu0 0.0
      %3697 = vmatprep.subr.mxu0 0.0
      %3698 = vmatpush1.msra.mxu0 0.0
      %3699 = vmatprep.subr.mxu0 0.0
      %3700 = vmatpush1.msra.mxu0 0.0
      %3701 = vmatprep.subr.mxu0 0.0
      %3702 = vmatpush1.msra.mxu0 0.0
      %3703 = vmatprep.subr.mxu0 0.0
      %3704 = vmatpush1.msra.mxu0 0.0
      %3705 = vmatprep.subr.mxu0 0.0
      %3706 = vmatpush1.msra.mxu0 0.0
      %3707 = vmatprep.subr.mxu0 0.0
      %3708 = vmatpush1.msra.mxu0 0.0
      %3709 = vmatprep.subr.mxu0 0.0
      %3710 = vmatpush1.msra.mxu0 0.0
      %3711 = vmatprep.subr.mxu0 0.0
      %3712 = vmatpush1.msra.mxu0 0.0
      %3713 = vmatprep.subr.mxu0 0.0
      %3714 = vmatpush1.msra.mxu0 0.0
      %3715 = vmatprep.subr.mxu0 0.0
      %3716 = vmatpush1.msra.mxu0 0.0
      %3717 = vmatprep.subr.mxu0 0.0
      %3718 = vmatpush1.msra.mxu0 0.0
      %3719 = vmatprep.subr.mxu0 0.0
      %3720 = vmatpush1.msra.mxu0 0.0
      %3721 = vmatprep.subr.mxu0 0.0
      %3722 = vmatpush1.msra.mxu0 0.0
      %3723 = vmatprep.subr.mxu0 0.0
      %3724 = vmatpush1.msra.mxu0 0.0
      %3725 = vmatprep.subr.mxu0 0.0
      %3726 = vmatpush1.msra.mxu0 0.0
      %3727 = vmatprep.subr.mxu0 0.0
      %3728 = vmatpush1.msra.mxu0 0.0
      %3729 = vmatprep.mubr.f32.mxu0 0.0
      %3730 = vmatmul.mubr.f32.gmra.mrb[0].mxu0 %v1737
      %v3731 = vpop.f32.mrb[0].mxu0
      %v3732 = vadd.f32 0.0, %v3731
      %v3733 = vpop.f32.mrb[0].mxu0
      %3734 = vmatprep.mubr.f32.mxu0 0.0
      %3735 = vmatmul.mubr.f32.gmra.mrb[0].mxu0 %v1740
      %v3736 = vpop.f32.mrb[0].mxu0
      %v3737 = vadd.f32 0.0, %v3736
      %v3738 = vpop.f32.mrb[0].mxu0
      %3739 = vdwg.mxu0
      %v3740 = vld [vmem:[%s13] sm:$0xff]
      %v3741 = vld [vmem:[%s13 + $0x8] sm:$0xff]
      %v3742 = vld [vmem:[%s13 + $0x10] sm:$0xff]
      %v3743 = vld [vmem:[%s13 + $0x18] sm:$0xff]
      %v3744 = vld [vmem:[%s13 + $0x20] sm:$0xff]
      %v3745 = vld [vmem:[%s13 + $0x28] sm:$0xff]
      %v3746 = vld [vmem:[%s14] sm:$0x1]
      %v3748 = vlaneseq
      %v3749 = vshrl.u32 %v3748, 7
      %v3750 = vsub.s32 0, %v3749
      %v3751 = vrot.slane %v3746, %v3750
      %v3754 = vsel %vm1953, %v3732, 0
      %v3757 = vsel %vm1953, %v3737, 0
      %3759 = vmatprep.subr.mxu0 0.0
      %3760 = vmatpush1.msra.mxu0 %v3740
      %3761 = vmatprep.subr.mxu0 0.0
      %3762 = vmatpush1.msra.mxu0 %v3741
      %3763 = vmatprep.subr.mxu0 0.0
      %3764 = vmatpush1.msra.mxu0 %v3742
      %3765 = vmatprep.subr.mxu0 0.0
      %3766 = vmatpush1.msra.mxu0 %v3743
      %3767 = vmatprep.subr.mxu0 0.0
      %3768 = vmatpush1.msra.mxu0 %v3744
      %3769 = vmatprep.subr.mxu0 0.0
      %3770 = vmatpush1.msra.mxu0 %v3745
      %3771 = vmatprep.subr.mxu0 0.0
      %3772 = vmatpush1.msra.mxu0 0.0
      %3773 = vmatprep.subr.mxu0 0.0
      %3774 = vmatpush1.msra.mxu0 0.0
      %3775 = vmatprep.subr.mxu0 0.0
      %3776 = vmatpush1.msra.mxu0 0.0
      %3777 = vmatprep.subr.mxu0 0.0
      %3778 = vmatpush1.msra.mxu0 0.0
      %3779 = vmatprep.subr.mxu0 0.0
      %3780 = vmatpush1.msra.mxu0 0.0
      %3781 = vmatprep.subr.mxu0 0.0
      %3782 = vmatpush1.msra.mxu0 0.0
      %3783 = vmatprep.subr.mxu0 0.0
      %3784 = vmatpush1.msra.mxu0 0.0
      %3785 = vmatprep.subr.mxu0 0.0
      %3786 = vmatpush1.msra.mxu0 0.0
      %3787 = vmatprep.subr.mxu0 0.0
      %3788 = vmatpush1.msra.mxu0 0.0
      %3789 = vmatprep.subr.mxu0 0.0
      %3790 = vmatpush1.msra.mxu0 0.0
      %3791 = vmatprep.subr.mxu0 0.0
      %3792 = vmatpush1.msra.mxu0 0.0
      %3793 = vmatprep.subr.mxu0 0.0
      %3794 = vmatpush1.msra.mxu0 0.0
      %3795 = vmatprep.subr.mxu0 0.0
      %3796 = vmatpush1.msra.mxu0 0.0
      %3797 = vmatprep.subr.mxu0 0.0
      %3798 = vmatpush1.msra.mxu0 0.0
      %3799 = vmatprep.subr.mxu0 0.0
      %3800 = vmatpush1.msra.mxu0 0.0
      %3801 = vmatprep.subr.mxu0 0.0
      %3802 = vmatpush1.msra.mxu0 0.0
      %3803 = vmatprep.subr.mxu0 0.0
      %3804 = vmatpush1.msra.mxu0 0.0
      %3805 = vmatprep.subr.mxu0 0.0
      %3806 = vmatpush1.msra.mxu0 0.0
      %3807 = vmatprep.subr.mxu0 0.0
      %3808 = vmatpush1.msra.mxu0 0.0
      %3809 = vmatprep.subr.mxu0 0.0
      %3810 = vmatpush1.msra.mxu0 0.0
      %3811 = vmatprep.subr.mxu0 0.0
      %3812 = vmatpush1.msra.mxu0 0.0
      %3813 = vmatprep.subr.mxu0 0.0
      %3814 = vmatpush1.msra.mxu0 0.0
      %3815 = vmatprep.subr.mxu0 0.0
      %3816 = vmatpush1.msra.mxu0 0.0
      %3817 = vmatprep.subr.mxu0 0.0
      %3818 = vmatpush1.msra.mxu0 0.0
      %3819 = vmatprep.subr.mxu0 0.0
      %3820 = vmatpush1.msra.mxu0 0.0
      %3821 = vmatprep.subr.mxu0 0.0
      %3822 = vmatpush1.msra.mxu0 0.0
      %3823 = vmatprep.mubr.f32.mxu0 0.0
      %3824 = vmatmul.mubr.f32.gmra.mrb[0].mxu0 %v3754
      %v3825 = vpop.f32.mrb[0].mxu0
      %v3826 = vadd.f32 %v3751, %v3825
      %v3827 = vpop.f32.mrb[0].mxu0
      %3828 = vmatprep.mubr.f32.mxu0 0.0
      %3829 = vmatmul.mubr.f32.gmra.mrb[0].mxu0 %v3757
      %v3830 = vpop.f32.mrb[0].mxu0
      %v3831 = vadd.f32 %v3751, %v3830
      %v3832 = vpop.f32.mrb[0].mxu0
      %3833 = vdwg.mxu0
      %v3834 = vmax.f32 %v3826, 0.0
      %v3835 = vmax.f32 %v3831, 0.0
      %v3837 = vsel %vm1547, %v1219, 0
      %v3840 = vsel %vm1547, %v1220, 0
      %v3843 = vsel %vm934, %v3835, 0
      %3845 = vmatprep.subr.mxu0 0.0
      %3846 = vmatpush1.msra.mxu0 %v3834
      %3847 = vmatprep.subr.mxu0 0.0
      %3848 = vmatpush1.msra.mxu0 %v3843
      %3849 = vmatprep.subr.mxu0 0.0
      %3850 = vmatpush1.msra.mxu0 0.0
      %3851 = vmatprep.subr.mxu0 0.0
      %3852 = vmatpush1.msra.mxu0 0.0
      %3853 = vmatprep.subr.mxu0 0.0
      %3854 = vmatpush1.msra.mxu0 0.0
      %3855 = vmatprep.subr.mxu0 0.0
      %3856 = vmatpush1.msra.mxu0 0.0
      %3857 = vmatprep.subr.mxu0 0.0
      %3858 = vmatpush1.msra.mxu0 0.0
      %3859 = vmatprep.subr.mxu0 0.0
      %3860 = vmatpush1.msra.mxu0 0.0
      %3861 = vmatprep.subr.mxu0 0.0
      %3862 = vmatpush1.msra.mxu0 0.0
      %3863 = vmatprep.subr.mxu0 0.0
      %3864 = vmatpush1.msra.mxu0 0.0
      %3865 = vmatprep.subr.mxu0 0.0
      %3866 = vmatpush1.msra.mxu0 0.0
      %3867 = vmatprep.subr.mxu0 0.0
      %3868 = vmatpush1.msra.mxu0 0.0
      %3869 = vmatprep.subr.mxu0 0.0
      %3870 = vmatpush1.msra.mxu0 0.0
      %3871 = vmatprep.subr.mxu0 0.0
      %3872 = vmatpush1.msra.mxu0 0.0
      %3873 = vmatprep.subr.mxu0 0.0
      %3874 = vmatpush1.msra.mxu0 0.0
      %3875 = vmatprep.subr.mxu0 0.0
      %3876 = vmatpush1.msra.mxu0 0.0
      %3877 = vmatprep.subr.mxu0 0.0
      %3878 = vmatpush1.msra.mxu0 0.0
      %3879 = vmatprep.subr.mxu0 0.0
      %3880 = vmatpush1.msra.mxu0 0.0
      %3881 = vmatprep.subr.mxu0 0.0
      %3882 = vmatpush1.msra.mxu0 0.0
      %3883 = vmatprep.subr.mxu0 0.0
      %3884 = vmatpush1.msra.mxu0 0.0
      %3885 = vmatprep.subr.mxu0 0.0
      %3886 = vmatpush1.msra.mxu0 0.0
      %3887 = vmatprep.subr.mxu0 0.0
      %3888 = vmatpush1.msra.mxu0 0.0
      %3889 = vmatprep.subr.mxu0 0.0
      %3890 = vmatpush1.msra.mxu0 0.0
      %3891 = vmatprep.subr.mxu0 0.0
      %3892 = vmatpush1.msra.mxu0 0.0
      %3893 = vmatprep.subr.mxu0 0.0
      %3894 = vmatpush1.msra.mxu0 0.0
      %3895 = vmatprep.subr.mxu0 0.0
      %3896 = vmatpush1.msra.mxu0 0.0
      %3897 = vmatprep.subr.mxu0 0.0
      %3898 = vmatpush1.msra.mxu0 0.0
      %3899 = vmatprep.subr.mxu0 0.0
      %3900 = vmatpush1.msra.mxu0 0.0
      %3901 = vmatprep.subr.mxu0 0.0
      %3902 = vmatpush1.msra.mxu0 0.0
      %3903 = vmatprep.subr.mxu0 0.0
      %3904 = vmatpush1.msra.mxu0 0.0
      %3905 = vmatprep.subr.mxu0 0.0
      %3906 = vmatpush1.msra.mxu0 0.0
      %3907 = vmatprep.subr.mxu0 0.0
      %3908 = vmatpush1.msra.mxu0 0.0
      %3909 = vmatprep.mubr.f32.mxu0 0.0
      %3910 = vmatmul.mubr.f32.gmra.mrb[0].mxu0 %v3837
      %v3911 = vpop.f32.mrb[0].mxu0
      %v3912 = vadd.f32 0.0, %v3911
      %v3913 = vpop.f32.mrb[0].mxu0
      %3914 = vmatprep.mubr.f32.mxu0 0.0
      %3915 = vmatmul.mubr.f32.gmra.mrb[0].mxu0 %v3840
      %v3916 = vpop.f32.mrb[0].mxu0
      %v3917 = vadd.f32 0.0, %v3916
      %v3918 = vpop.f32.mrb[0].mxu0
      %3919 = vdwg.mxu0
      %3920 = vmatprep.subr.mxu0 0.0
      %3921 = vmatpush1.msra.mxu0 %v3912
      %3922 = vmatprep.subr.mxu0 0.0
      %3923 = vmatpush1.msra.mxu0 %v3917
      %3924 = vmatprep.subr.mxu0 0.0
      %3925 = vmatpush1.msra.mxu0 0.0
      %3926 = vmatprep.subr.mxu0 0.0
      %3927 = vmatpush1.msra.mxu0 0.0
      %3928 = vmatprep.subr.mxu0 0.0
      %3929 = vmatpush1.msra.mxu0 0.0
      %3930 = vmatprep.subr.mxu0 0.0
      %3931 = vmatpush1.msra.mxu0 0.0
      %3932 = vmatprep.subr.mxu0 0.0
      %3933 = vmatpush1.msra.mxu0 0.0
      %3934 = vmatprep.subr.mxu0 0.0
      %3935 = vmatpush1.msra.mxu0 0.0
      %3936 = vmatprep.subr.mxu0 0.0
      %3937 = vmatpush1.msra.mxu0 0.0
      %3938 = vmatprep.subr.mxu0 0.0
      %3939 = vmatpush1.msra.mxu0 0.0
      %3940 = vmatprep.subr.mxu0 0.0
      %3941 = vmatpush1.msra.mxu0 0.0
      %3942 = vmatprep.subr.mxu0 0.0
      %3943 = vmatpush1.msra.mxu0 0.0
      %3944 = vmatprep.subr.mxu0 0.0
      %3945 = vmatpush1.msra.mxu0 0.0
      %3946 = vmatprep.subr.mxu0 0.0
      %3947 = vmatpush1.msra.mxu0 0.0
      %3948 = vmatprep.subr.mxu0 0.0
      %3949 = vmatpush1.msra.mxu0 0.0
      %3950 = vmatprep.subr.mxu0 0.0
      %3951 = vmatpush1.msra.mxu0 0.0
      %3952 = vmatprep.subr.mxu0 0.0
      %3953 = vmatpush1.msra.mxu0 0.0
      %3954 = vmatprep.subr.mxu0 0.0
      %3955 = vmatpush1.msra.mxu0 0.0
      %3956 = vmatprep.subr.mxu0 0.0
      %3957 = vmatpush1.msra.mxu0 0.0
      %3958 = vmatprep.subr.mxu0 0.0
      %3959 = vmatpush1.msra.mxu0 0.0
      %3960 = vmatprep.subr.mxu0 0.0
      %3961 = vmatpush1.msra.mxu0 0.0
      %3962 = vmatprep.subr.mxu0 0.0
      %3963 = vmatpush1.msra.mxu0 0.0
      %3964 = vmatprep.subr.mxu0 0.0
      %3965 = vmatpush1.msra.mxu0 0.0
      %3966 = vmatprep.subr.mxu0 0.0
      %3967 = vmatpush1.msra.mxu0 0.0
      %3968 = vmatprep.subr.mxu0 0.0
      %3969 = vmatpush1.msra.mxu0 0.0
      %3970 = vmatprep.subr.mxu0 0.0
      %3971 = vmatpush1.msra.mxu0 0.0
      %3972 = vmatprep.subr.mxu0 0.0
      %3973 = vmatpush1.msra.mxu0 0.0
      %3974 = vmatprep.subr.mxu0 0.0
      %3975 = vmatpush1.msra.mxu0 0.0
      %3976 = vmatprep.subr.mxu0 0.0
      %3977 = vmatpush1.msra.mxu0 0.0
      %3978 = vmatprep.subr.mxu0 0.0
      %3979 = vmatpush1.msra.mxu0 0.0
      %3980 = vmatprep.subr.mxu0 0.0
      %3981 = vmatpush1.msra.mxu0 0.0
      %3982 = vmatprep.subr.mxu0 0.0
      %3983 = vmatpush1.msra.mxu0 0.0
      %3984 = vmatprep.mubr.f32.mxu0 0.0
      %3985 = vmatmul.mubr.f32.gmra.mrb[0].mxu0 %v677
      %v3986 = vpop.f32.mrb[0].mxu0
      %v3987 = vadd.f32 0.0, %v3986
      %v3988 = vpop.f32.mrb[0].mxu0
      %3989 = vmatprep.mubr.f32.mxu0 0.0
      %3990 = vmatmul.mubr.f32.gmra.mrb[0].mxu0 %v680
      %v3991 = vpop.f32.mrb[0].mxu0
      %v3992 = vadd.f32 0.0, %v3991
      %v3993 = vpop.f32.mrb[0].mxu0
      %3994 = vdwg.mxu0
      %v3995 = vld [vmem:[%s15] sm:$0xff]
      %v3996 = vld [vmem:[%s15 + $0x8] sm:$0xff]
      %v3997 = vld [vmem:[%s15 + $0x10] sm:$0xff]
      %v3998 = vld [vmem:[%s15 + $0x18] sm:$0xff]
      %v3999 = vld [vmem:[%s15 + $0x20] sm:$0xff]
      %v4000 = vld [vmem:[%s15 + $0x28] sm:$0xff]
      %v4001 = vld [vmem:[%s15 + $0x30] sm:$0xff]
      %v4002 = vld [vmem:[%s15 + $0x38] sm:$0xff]
      %v4003 = vld [vmem:[%s16] sm:$0x1]
      %v4005 = vlaneseq
      %v4006 = vshrl.u32 %v4005, 7
      %v4007 = vsub.s32 0, %v4006
      %v4008 = vrot.slane %v4003, %v4007
      %v4011 = vsel %vm1059, %v3987, 0
      %v4014 = vsel %vm1059, %v3992, 0
      %4016 = vmatprep.subr.mxu0 0.0
      %4017 = vmatpush1.msra.mxu0 %v3995
      %4018 = vmatprep.subr.mxu0 0.0
      %4019 = vmatpush1.msra.mxu0 %v3996
      %4020 = vmatprep.subr.mxu0 0.0
      %4021 = vmatpush1.msra.mxu0 %v3997
      %4022 = vmatprep.subr.mxu0 0.0
      %4023 = vmatpush1.msra.mxu0 %v3998
      %4024 = vmatprep.subr.mxu0 0.0
      %4025 = vmatpush1.msra.mxu0 %v3999
      %4026 = vmatprep.subr.mxu0 0.0
      %4027 = vmatpush1.msra.mxu0 %v4000
      %4028 = vmatprep.subr.mxu0 0.0
      %4029 = vmatpush1.msra.mxu0 %v4001
      %4030 = vmatprep.subr.mxu0 0.0
      %4031 = vmatpush1.msra.mxu0 %v4002
      %4032 = vmatprep.subr.mxu0 0.0
      %4033 = vmatpush1.msra.mxu0 0.0
      %4034 = vmatprep.subr.mxu0 0.0
      %4035 = vmatpush1.msra.mxu0 0.0
      %4036 = vmatprep.subr.mxu0 0.0
      %4037 = vmatpush1.msra.mxu0 0.0
      %4038 = vmatprep.subr.mxu0 0.0
      %4039 = vmatpush1.msra.mxu0 0.0
      %4040 = vmatprep.subr.mxu0 0.0
      %4041 = vmatpush1.msra.mxu0 0.0
      %4042 = vmatprep.subr.mxu0 0.0
      %4043 = vmatpush1.msra.mxu0 0.0
      %4044 = vmatprep.subr.mxu0 0.0
      %4045 = vmatpush1.msra.mxu0 0.0
      %4046 = vmatprep.subr.mxu0 0.0
      %4047 = vmatpush1.msra.mxu0 0.0
      %4048 = vmatprep.subr.mxu0 0.0
      %4049 = vmatpush1.msra.mxu0 0.0
      %4050 = vmatprep.subr.mxu0 0.0
      %4051 = vmatpush1.msra.mxu0 0.0
      %4052 = vmatprep.subr.mxu0 0.0
      %4053 = vmatpush1.msra.mxu0 0.0
      %4054 = vmatprep.subr.mxu0 0.0
      %4055 = vmatpush1.msra.mxu0 0.0
      %4056 = vmatprep.subr.mxu0 0.0
      %4057 = vmatpush1.msra.mxu0 0.0
      %4058 = vmatprep.subr.mxu0 0.0
      %4059 = vmatpush1.msra.mxu0 0.0
      %4060 = vmatprep.subr.mxu0 0.0
      %4061 = vmatpush1.msra.mxu0 0.0
      %4062 = vmatprep.subr.mxu0 0.0
      %4063 = vmatpush1.msra.mxu0 0.0
      %4064 = vmatprep.subr.mxu0 0.0
      %4065 = vmatpush1.msra.mxu0 0.0
      %4066 = vmatprep.subr.mxu0 0.0
      %4067 = vmatpush1.msra.mxu0 0.0
      %4068 = vmatprep.subr.mxu0 0.0
      %4069 = vmatpush1.msra.mxu0 0.0
      %4070 = vmatprep.subr.mxu0 0.0
      %4071 = vmatpush1.msra.mxu0 0.0
      %4072 = vmatprep.subr.mxu0 0.0
      %4073 = vmatpush1.msra.mxu0 0.0
      %4074 = vmatprep.subr.mxu0 0.0
      %4075 = vmatpush1.msra.mxu0 0.0
      %4076 = vmatprep.subr.mxu0 0.0
      %4077 = vmatpush1.msra.mxu0 0.0
      %4078 = vmatprep.subr.mxu0 0.0
      %4079 = vmatpush1.msra.mxu0 0.0
      %4080 = vmatprep.mubr.f32.mxu0 0.0
      %4081 = vmatmul.mubr.f32.gmra.mrb[0].mxu0 %v4011
      %v4082 = vpop.f32.mrb[0].mxu0
      %v4083 = vadd.f32 %v4008, %v4082
      %v4084 = vpop.f32.mrb[0].mxu0
      %4085 = vmatprep.mubr.f32.mxu0 0.0
      %4086 = vmatmul.mubr.f32.gmra.mrb[0].mxu0 %v4014
      %v4087 = vpop.f32.mrb[0].mxu0
      %v4088 = vadd.f32 %v4008, %v4087
      %v4089 = vpop.f32.mrb[0].mxu0
      %4090 = vdwg.mxu0
      %4091 = vst.msk [vmem:[%s637] sm:$0xff] %vm927, %v4083
      %4092 = vst.msk [vmem:[%s637 + $0x8] sm:$0xff] %vm927, %v4088
      %p4093 = scmp.lt.s32.totalorder %s31, 3
      %s4094 = scalar_select %p4093, %s31, 3
      %s4095 = smul.addr %s4094, 2
      %s4096 = smul.addr %s4095, 8
      %s4097 = scalar_lea.vmem %s17, %s4096
      %p4098 = scmp.lt.s32.totalorder %s31, 3
      %s4099 = scalar_select %p4098, %s31, 3
      %s4100 = smul.addr %s4099, 2
      %s4101 = smul.addr %s4100, 8
      %s4102 = scalar_lea.vmem %s18, %s4101
      %p4103 = scmp.lt.s32.totalorder %s31, 3
      %s4104 = scalar_select %p4103, %s31, 3
      %s4105 = smul.addr %s4104, 2
      %s4106 = smul.addr %s4105, 8
      %s4107 = scalar_lea.vmem %s19, %s4106
      // Predicated region
      $region89: #{net_forward.1} parent=87 // pred_check
        %p4108 = pneg %p416
      $region90: #{net_forward.1} parent=87 // pred_check_branch
        %4110 = sbr.rel (%p4108) target = $region92
      $region91: #{net_forward.1} parent=87 // pred_region
        _
      $region92: #{net_forward.1} parent=87 // pred_fallthru
        _
      // Predicated region
      $region93: #{net_forward.1} parent=87 // pred_check
        %p4111 = pneg %p442
      $region94: #{net_forward.1} parent=87 // pred_check_branch
        %4113 = sbr.rel (%p4111) target = $region96
      $region95: #{net_forward.1} parent=87 // pred_region
        _
      $region96: #{net_forward.1} parent=87 // pred_fallthru
        _
      // Predicated region
      $region97: #{net_forward.1} parent=87 // pred_check
        %p4114 = pneg %p468
      $region98: #{net_forward.1} parent=87 // pred_check_branch
        %4116 = sbr.rel (%p4114) target = $region100
      $region99: #{net_forward.1} parent=87 // pred_region
        _
      $region100: #{net_forward.1} parent=87 // pred_fallthru
        _
    $region88: #{net_forward.1} parent=5 // pred_fallthru
      _
    %p4117 = scmp.le.s32.totalorder 2, %s26
    // Predicated region
    $region101: #{net_forward.1} parent=5 // pred_check
      %p4118 = pneg %p4117
    $region102: #{net_forward.1} parent=5 // pred_check_branch
      %4120 = sbr.rel (%p4118) target = $region104
    $region103: #{net_forward.1} parent=5 // pred_region
      %s4121 = ssub.s32 %s26, 2
      // Predicated region
      $region105: #{net_forward.1} parent=103 // pred_check
        %p4122 = pneg %p422
      $region106: #{net_forward.1} parent=103 // pred_check_branch
        %4124 = sbr.rel (%p4122) target = $region108
      $region107: #{net_forward.1} parent=103 // pred_region
        %p4125 = scmp.lt.s32.totalorder %s32, 3
        %s4126 = scalar_select %p4125, %s32, 3
        %s4127 = smul.addr %s4126, 2
        %s4128 = smul.addr %s4127, 8
        %s4129 = scalar_lea.vmem %s17, %s4128
      $region108: #{net_forward.1} parent=103 // pred_fallthru
        _
      // Predicated region
      $region109: #{net_forward.1} parent=103 // pred_check
        %p4130 = pneg %p448
      $region110: #{net_forward.1} parent=103 // pred_check_branch
        %4132 = sbr.rel (%p4130) target = $region112
      $region111: #{net_forward.1} parent=103 // pred_region
        %p4133 = scmp.lt.s32.totalorder %s32, 3
        %s4134 = scalar_select %p4133, %s32, 3
        %s4135 = smul.addr %s4134, 2
        %s4136 = smul.addr %s4135, 8
        %s4137 = scalar_lea.vmem %s18, %s4136
      $region112: #{net_forward.1} parent=103 // pred_fallthru
        _
      // Predicated region
      $region113: #{net_forward.1} parent=103 // pred_check
        %p4138 = pneg %p474
      $region114: #{net_forward.1} parent=103 // pred_check_branch
        %4140 = sbr.rel (%p4138) target = $region116
      $region115: #{net_forward.1} parent=103 // pred_region
        %p4141 = scmp.lt.s32.totalorder %s32, 3
        %s4142 = scalar_select %p4141, %s32, 3
        %s4143 = smul.addr %s4142, 2
        %s4144 = smul.addr %s4143, 8
        %s4145 = scalar_lea.vmem %s19, %s4144
      $region116: #{net_forward.1} parent=103 // pred_fallthru
        _
    $region104: #{net_forward.1} parent=5 // pred_fallthru
      _
  $region6: #{net_forward.1} parent=0 // loop_footer
    %s30 = sadd.s32 1, %s26
  $region7: #{net_forward.1} parent=0 // loop_footer_branch
    %25 = sbr.rel target = $region3
  $region8: #{net_forward.1} parent=0 // loop_exit
    _

</llo_original>
